<compile_context>
chip_gen: v5e
topology: v5e:2x2
jax: 0.10.0
libtpu: 0.0.40
codegen_flags: <defaults>
</compile_context>

<pallas_src>
import math
import functools

import jax
import jax.numpy as jnp
from jax.experimental import pallas as pl
from jax.experimental.pallas import tpu as pltpu


# ----------------------------- helpers ---------------------------------------

def _pick_tile(dim, target, min_unit):
    """Largest divisor of `dim` that is <= target and a multiple of `min_unit`.
    Falls back to the full dim (always a legal block) if no such divisor exists."""
    t = min(target, dim)
    for cand in range(t, min_unit - 1, -1):
        if dim % cand == 0 and cand % min_unit == 0:
            return cand
    return dim


def _compiler_params(block_bytes, scratch_bytes, dims):
    """Explicit VMEM budget: double-buffered blocks + scratch + slack, <= 64 MiB (v7x)."""
    budget = 2 * int(block_bytes) + int(scratch_bytes) + (16 << 20)
    return pltpu.CompilerParams(dimension_semantics=dims,
                                vmem_limit_bytes=min(budget, 64 << 20))


# -------------------- fused MHA (+ residual + LayerNorm) ---------------------

def _mha_ln_kernel(xq_ref, xkv_ref, padb_ref,
                   wq_ref, bq_ref, wkv_ref, bkv_ref,
                   wo_ref, bo_ref, g_ref, beta_ref,
                   o_ref, heads_ref,
                   *, n_heads, d_queries, d_values, scale, eps, causal, tq):
    Hq = n_heads * d_queries

    xq = xq_ref[0]                       # (tq, D)  f32
    xkv = xkv_ref[0]                     # (Lk, D)  f32
    Lk = xkv.shape[0]

    # additive attention bias built in-kernel (padding, + causal for self-attn)
    bias = padb_ref[0]                   # (1, Lk)  f32: 0 valid / -1e9 padded
    if causal:
        q0 = pl.program_id(1) * tq
        row = jax.lax.broadcasted_iota(jnp.int32, (tq, Lk), 0) + q0
        col = jax.lax.broadcasted_iota(jnp.int32, (tq, Lk), 1)
        bias = bias + jnp.where(row >= col, 0.0, -1e9)

    # projections: bf16 MXU operands, f32 accumulation
    q = jnp.dot(xq.astype(jnp.bfloat16), wq_ref[...],
                preferred_element_type=jnp.float32) + bq_ref[...]
    kv = jnp.dot(xkv.astype(jnp.bfloat16), wkv_ref[...],
                 preferred_element_type=jnp.float32) + bkv_ref[...]
    k = kv[:, :Hq]
    v = kv[:, Hq:]

    for h in range(n_heads):             # static unroll over heads
        qh = q[:, h * d_queries:(h + 1) * d_queries].astype(jnp.bfloat16)
        kh = k[:, h * d_queries:(h + 1) * d_queries].astype(jnp.bfloat16)
        vh = v[:, h * d_values:(h + 1) * d_values].astype(jnp.bfloat16)
        # A @ B^T on the MXU without an explicit transpose.
        s = jax.lax.dot_general(qh, kh, (((1,), (1,)), ((), ())),
                                preferred_element_type=jnp.float32)
        s = s * scale + bias
        s = s - jnp.max(s, axis=-1, keepdims=True)
        p = jnp.exp(s)
        p = p / jnp.sum(p, axis=-1, keepdims=True)          # exact f32 softmax
        heads_ref[:, h * d_values:(h + 1) * d_values] = jnp.dot(
            p.astype(jnp.bfloat16), vh, preferred_element_type=jnp.float32)

    attn = jnp.dot(heads_ref[...].astype(jnp.bfloat16), wo_ref[...],
                   preferred_element_type=jnp.float32) + bo_ref[...]

    # residual + LayerNorm fused epilogue (f32)
    y = xq + attn
    mu = jnp.mean(y, axis=-1, keepdims=True)
    var = jnp.mean((y - mu) ** 2, axis=-1, keepdims=True)
    o_ref[0] = (y - mu) * jax.lax.rsqrt(var + eps) * g_ref[...] + beta_ref[...]


def mha_add_norm(xq, xkv, pad_bias, p, g, beta, n_heads, d_queries, d_values,
                 *, causal, eps=1e-5):
    """LayerNorm(xq + MHA(xq, xkv)) — one pallas_call per attention sublayer."""
    B, Lq, D = xq.shape
    Lk = xkv.shape[1]
    Hq = n_heads * d_queries
    Hv = n_heads * d_values
    tq = _pick_tile(Lq, 128, 8)

    kern = functools.partial(
        _mha_ln_kernel, n_heads=n_heads, d_queries=d_queries, d_values=d_values,
        scale=1.0 / math.sqrt(d_queries), eps=eps, causal=causal, tq=tq)
    const = lambda b, qi: (0, 0)

    block_bytes = (tq * D * 4 + Lk * D * 4 + Lk * 4
                   + D * Hq * 2 + Hq * 4 + D * (Hq + Hv) * 2 + (Hq + Hv) * 4
                   + Hv * D * 2 + 3 * D * 4 + tq * D * 4)
    scratch_bytes = tq * Hv * 4

    return pl.pallas_call(
        kern,
        out_shape=jax.ShapeDtypeStruct((B, Lq, D), jnp.float32),
        grid=(B, Lq // tq),
        in_specs=[
            pl.BlockSpec((1, tq, D), lambda b, qi: (b, qi, 0)),   # xq tile
            pl.BlockSpec((1, Lk, D), lambda b, qi: (b, 0, 0)),    # xkv (full Lk)
            pl.BlockSpec((1, 1, Lk), lambda b, qi: (b, 0, 0)),    # padding bias
            pl.BlockSpec((D, Hq), const),                         # wq  (bf16)
            pl.BlockSpec((1, Hq), const),                         # bq
            pl.BlockSpec((D, Hq + Hv), const),                    # wkv (bf16, fused K|V)
            pl.BlockSpec((1, Hq + Hv), const),                    # bkv
            pl.BlockSpec((Hv, D), const),                         # wo  (bf16)
            pl.BlockSpec((1, D), const),                          # bo
            pl.BlockSpec((1, D), const),                          # ln gamma
            pl.BlockSpec((1, D), const),                          # ln beta
        ],
        out_specs=pl.BlockSpec((1, tq, D), lambda b, qi: (b, qi, 0)),
        scratch_shapes=[pltpu.VMEM((tq, Hv), jnp.float32)],       # per-head output slab
        compiler_params=_compiler_params(block_bytes, scratch_bytes,
                                         ("parallel", "parallel")),
    )(xq, xkv, pad_bias,
      p["wq"], p["bq"].reshape(1, Hq), p["wkv"], p["bkv"].reshape(1, Hq + Hv),
      p["wo"], p["bo"].reshape(1, D), g.reshape(1, D), beta.reshape(1, D))


# -------------------- fused FFN (+ residual + LayerNorm) ---------------------

def _ffn_ln_kernel(x_ref, w1_ref, b1_ref, w2_ref, b2_ref, g_ref, beta_ref,
                   o_ref, acc_ref, *, eps):
    kk = pl.program_id(1)

    @pl.when(kk == 0)
    def _():
        acc_ref[...] = jnp.zeros_like(acc_ref)

    x = x_ref[...]                                            # (tm, D) f32
    h = jnp.dot(x.astype(jnp.bfloat16), w1_ref[...],
                preferred_element_type=jnp.float32) + b1_ref[...]
    h = jnp.maximum(h, 0.0)                                   # ReLU, hidden stays in VMEM
    acc_ref[...] += jnp.dot(h.astype(jnp.bfloat16), w2_ref[...],
                            preferred_element_type=jnp.float32)

    @pl.when(kk == pl.num_programs(1) - 1)
    def _():
        y = x + acc_ref[...] + b2_ref[...]
        mu = jnp.mean(y, axis=-1, keepdims=True)
        var = jnp.mean((y - mu) ** 2, axis=-1, keepdims=True)
        o_ref[...] = (y - mu) * jax.lax.rsqrt(var + eps) * g_ref[...] + beta_ref[...]


def ffn_add_norm(x, w1, b1, w2, b2, g, beta, eps=1e-5):
    """LayerNorm(x + W2 relu(W1 x + b1) + b2), tiled over rows and hidden dim."""
    B, L, D = x.shape
    Dh = w1.shape[1]
    M = B * L
    x2 = x.reshape(M, D)

    # keep >= 2 row programs when possible (v7x megacore), else full rows
    tm = _pick_tile(M, min(256, max(8, M // 2)), 8)
    tdh = _pick_tile(Dh, 512, 128)

    kern = functools.partial(_ffn_ln_kernel, eps=eps)
    const = lambda i, k: (0, 0)

    block_bytes = (tm * D * 4 + D * tdh * 2 + tdh * 4 + tdh * D * 2
                   + 3 * D * 4 + tm * D * 4)
    scratch_bytes = tm * D * 4

    out = pl.pallas_call(
        kern,
        out_shape=jax.ShapeDtypeStruct((M, D), jnp.float32),
        grid=(M // tm, Dh // tdh),
        in_specs=[
            pl.BlockSpec((tm, D), lambda i, k: (i, 0)),           # x rows
            pl.BlockSpec((D, tdh), lambda i, k: (0, k)),          # w1 chunk (bf16)
            pl.BlockSpec((1, tdh), lambda i, k: (0, k)),          # b1 chunk
            pl.BlockSpec((tdh, D), lambda i, k: (k, 0)),          # w2 chunk (bf16)
            pl.BlockSpec((1, D), const),                          # b2
            pl.BlockSpec((1, D), const),                          # ln gamma
            pl.BlockSpec((1, D), const),                          # ln beta
        ],
        out_specs=pl.BlockSpec((tm, D), lambda i, k: (i, 0)),
        scratch_shapes=[pltpu.VMEM((tm, D), jnp.float32)],
        compiler_params=_compiler_params(block_bytes, scratch_bytes,
                                         ("parallel", "arbitrary")),
    )(x2, w1, b1.reshape(1, Dh), w2, b2.reshape(1, D),
      g.reshape(1, D), beta.reshape(1, D))
    return out.reshape(B, L, D)


# -------------------- tiled final projection (logits) ------------------------

def _matmul_bias_kernel(x_ref, w_ref, b_ref, o_ref, acc_ref):
    @pl.when(pl.program_id(2) == 0)
    def _():
        acc_ref[...] = jnp.zeros_like(acc_ref)

    acc_ref[...] += jnp.dot(x_ref[...].astype(jnp.bfloat16), w_ref[...],
                            preferred_element_type=jnp.float32)

    @pl.when(pl.program_id(2) == pl.num_programs(2) - 1)
    def _():
        o_ref[...] = (acc_ref[...] + b_ref[...]).astype(o_ref.dtype)


def linear_logits(x2d, w, b, *, tm_target=256, tn_target=512, tk_target=512):
    M, K = x2d.shape
    N = w.shape[1]
    # pad rows to a multiple of 8 and vocab to a multiple of 128 so tiles are always
    # small, lane-dense divisors — never the full vocab (OOM hazard fixed).
    Mp = -(-M // 8) * 8
    Np = -(-N // 128) * 128
    if Mp != M:
        x2d = jnp.pad(x2d, ((0, Mp - M), (0, 0)))
    if Np != N:
        w = jnp.pad(w, ((0, 0), (0, Np - N)))
        b = jnp.pad(b, (0, Np - N))

    tm = _pick_tile(Mp, tm_target, 8)
    tn = _pick_tile(Np, tn_target, 128)
    tk = _pick_tile(K, tk_target, 128)

    block_bytes = tm * tk * 4 + tk * tn * 2 + tn * 4 + tm * tn * 4
    scratch_bytes = tm * tn * 4

    out = pl.pallas_call(
        _matmul_bias_kernel,
        out_shape=jax.ShapeDtypeStruct((Mp, Np), jnp.float32),
        grid=(Mp // tm, Np // tn, K // tk),
        in_specs=[
            pl.BlockSpec((tm, tk), lambda i, j, k: (i, k)),
            pl.BlockSpec((tk, tn), lambda i, j, k: (k, j)),
            pl.BlockSpec((1, tn), lambda i, j, k: (0, j)),
        ],
        out_specs=pl.BlockSpec((tm, tn), lambda i, j, k: (i, j)),
        scratch_shapes=[pltpu.VMEM((tm, tn), jnp.float32)],
        compiler_params=_compiler_params(block_bytes, scratch_bytes,
                                         ("parallel", "parallel", "arbitrary")),
    )(x2d, w, b.reshape(1, Np))
    return out[:M, :N]


# ------------------------------ model glue ------------------------------------

def decoder_block(x, self_pad, memory, cross_pad, p, n_heads, d_queries, d_values):
    x = mha_add_norm(x, x, self_pad, p["self_attn"], p["ln1_g"], p["ln1_b"],
                     n_heads, d_queries, d_values, causal=True)
    x = mha_add_norm(x, memory, cross_pad, p["cross_attn"], p["ln2_g"], p["ln2_b"],
                     n_heads, d_queries, d_values, causal=False)
    x = ffn_add_norm(x, p["w1"], p["b1"], p["w2"], p["b2"], p["ln3_g"], p["ln3_b"])
    return x


def decoder_forward(params, input_sequence, input_padding_mask, memory_sequence,
                    memory_padding_mask, *, d_model, n_heads, d_queries, d_values):
    B, L = input_sequence.shape

    # token embedding * sqrt(d_model) + positional encoding  (gather = glue)
    x = params["token_embedding"][input_sequence] * math.sqrt(d_model)
    x = x + params["positional_encoding"][:, :L, :]

    # tiny per-batch additive padding biases; causal part is built in-kernel
    self_pad = jnp.where(input_padding_mask[:, None, :], 0.0, -1e9).astype(jnp.float32)
    cross_pad = jnp.where(memory_padding_mask[:, None, :], 0.0, -1e9).astype(jnp.float32)

    for blk in params["blocks"]:
        x = decoder_block(x, self_pad, memory_sequence, cross_pad, blk,
                          n_heads, d_queries, d_values)

    logits = linear_logits(x.reshape(B * L, d_model),
                           params["w_final"], params["b_final"])
    return logits.reshape(B, L, -1)


# ------------------------------ param init ------------------------------------

def sinusoidal_positional_encoding(max_len, d_model):
    pos = jnp.arange(max_len, dtype=jnp.float32)[:, None]
    i = jnp.arange(d_model, dtype=jnp.float32)[None, :]
    angle = pos / jnp.power(10000.0, (2.0 * jnp.floor(i / 2.0)) / d_model)
    pe = jnp.where(jnp.mod(jnp.arange(d_model), 2) == 0, jnp.sin(angle), jnp.cos(angle))
    return pe[None, :, :]  # (1, max_len, d_model)


def init_params(key, vocab_size, num_layers, d_model, n_heads, d_hidden,
                d_queries, d_values, max_len):
    def nrm(k, shape, scale=0.02, dtype=jnp.float32):
        return (scale * jax.random.normal(k, shape, dtype=jnp.float32)).astype(dtype)

    bf = jnp.bfloat16  # MXU operand dtype (f32 accumulation inside the kernels)

    def attn_params(k):
        ks = jax.random.split(k, 4)
        Hq = n_heads * d_queries
        Hv = n_heads * d_values
        wk = nrm(ks[1], (d_model, Hq), dtype=bf)
        wv = nrm(ks[2], (d_model, Hv), dtype=bf)
        return {
            "wq": nrm(ks[0], (d_model, Hq), dtype=bf),
            "bq": jnp.zeros((Hq,), jnp.float32),
            # K|V projection fused into a single (D, Hq+Hv) matmul operand
            "wkv": jnp.concatenate([wk, wv], axis=1),
            "bkv": jnp.zeros((Hq + Hv,), jnp.float32),
            "wo": nrm(ks[3], (Hv, d_model), dtype=bf),
            "bo": jnp.zeros((d_model,), jnp.float32),
        }

    keys = jax.random.split(key, 2 + num_layers)
    blocks = []
    for li in range(num_layers):
        ks = jax.random.split(keys[2 + li], 4)
        blocks.append({
            "self_attn": attn_params(ks[0]),
            "cross_attn": attn_params(ks[1]),
            "w1": nrm(ks[2], (d_model, d_hidden), dtype=bf),
            "b1": jnp.zeros((d_hidden,), jnp.float32),
            "w2": nrm(ks[3], (d_hidden, d_model), dtype=bf),
            "b2": jnp.zeros((d_model,), jnp.float32),
            "ln1_g": jnp.ones((d_model,), jnp.float32),
            "ln1_b": jnp.zeros((d_model,), jnp.float32),
            "ln2_g": jnp.ones((d_model,), jnp.float32),
            "ln2_b": jnp.zeros((d_model,), jnp.float32),
            "ln3_g": jnp.ones((d_model,), jnp.float32),
            "ln3_b": jnp.zeros((d_model,), jnp.float32),
        })
    return {
        "token_embedding": nrm(keys[0], (vocab_size, d_model), scale=1.0),
        "positional_encoding": sinusoidal_positional_encoding(max_len, d_model),
        "blocks": blocks,
        "w_final": nrm(keys[1], (d_model, vocab_size), dtype=bf),
        "b_final": jnp.zeros((vocab_size,), jnp.float32),
    }


# --------------------------------- main ----------------------------------------

if __name__ == "__main__":
    vocab_size = 50
    num_layers = 2
    d_model = 32
    n_heads = 4
    d_hidden = 64
    d_queries = 8
    d_values = 8
    dropout_prob = 0.1  # unused (eval mode)

    B, L, Lm = 2, 8, 8
    max_len = 16

    root = jax.random.PRNGKey(0)
    k_par, k_tok, k_mask, k_mem, k_mmask = jax.random.split(root, 5)

    params = init_params(k_par, vocab_size, num_layers, d_model, n_heads,
                         d_hidden, d_queries, d_values, max_len)

    input_sequence = jax.random.randint(k_tok, (B, L), 0, vocab_size, dtype=jnp.int32)
    # True = valid token, last couple of positions padded
    input_padding_mask = jnp.arange(L)[None, :] < jnp.array([[L], [L - 2]])
    memory_sequence = jax.random.normal(k_mem, (B, Lm, d_model), dtype=jnp.float32)
    memory_padding_mask = jnp.arange(Lm)[None, :] < jnp.array([[Lm - 1], [Lm]])

    fwd = functools.partial(decoder_forward, d_model=d_model, n_heads=n_heads,
                            d_queries=d_queries, d_values=d_values)
    out = jax.jit(fwd)(params, input_sequence, input_padding_mask,
                       memory_sequence, memory_padding_mask)
    out = jax.block_until_ready(out)
    assert out.shape == (B, L, vocab_size), out.shape
    assert jnp.all(jnp.isfinite(out))
    print("KERNEL_OK")
</pallas_src>

<mosaic_0001>
module attributes {stable_mosaic.version = 11 : i64} {
  func.func @_mha_ln_kernel(%arg0: i32, %arg1: i32, %arg2: memref<1x8x32xf32, #tpu.memory_space<vmem>>, %arg3: memref<1x8x32xf32, #tpu.memory_space<vmem>>, %arg4: memref<1x1x8xf32, #tpu.memory_space<vmem>>, %arg5: memref<32x32xbf16, #tpu.memory_space<vmem>>, %arg6: memref<1x32xf32, #tpu.memory_space<vmem>>, %arg7: memref<32x64xbf16, #tpu.memory_space<vmem>>, %arg8: memref<1x64xf32, #tpu.memory_space<vmem>>, %arg9: memref<32x32xbf16, #tpu.memory_space<vmem>>, %arg10: memref<1x32xf32, #tpu.memory_space<vmem>>, %arg11: memref<1x32xf32, #tpu.memory_space<vmem>>, %arg12: memref<1x32xf32, #tpu.memory_space<vmem>>, %arg13: memref<1x8x32xf32, #tpu.memory_space<vmem>>, %arg14: memref<8x32xf32, #tpu.memory_space<vmem>>) attributes {dimension_semantics = [#tpu.dimension_semantics<parallel>, #tpu.dimension_semantics<parallel>], iteration_bounds = array<i64: 2, 1>, scalar_prefetch = 0 : i64, scratch_operands = 1 : i64, tpu.core_type = #tpu.core_type<tc>, window_params = [{transform_indices = @transform_0, window_bounds = array<i64: 1, 8, 32>}, {transform_indices = @transform_1, window_bounds = array<i64: 1, 8, 32>}, {transform_indices = @transform_2, window_bounds = array<i64: 1, 1, 8>}, {pipeline_mode = #tpu.pipeline_mode<synchronous>, transform_indices = @transform_3, window_bounds = array<i64: 32, 32>}, {pipeline_mode = #tpu.pipeline_mode<synchronous>, transform_indices = @transform_4, window_bounds = array<i64: 1, 32>}, {pipeline_mode = #tpu.pipeline_mode<synchronous>, transform_indices = @transform_5, window_bounds = array<i64: 32, 64>}, {pipeline_mode = #tpu.pipeline_mode<synchronous>, transform_indices = @transform_6, window_bounds = array<i64: 1, 64>}, {pipeline_mode = #tpu.pipeline_mode<synchronous>, transform_indices = @transform_7, window_bounds = array<i64: 32, 32>}, {pipeline_mode = #tpu.pipeline_mode<synchronous>, transform_indices = @transform_8, window_bounds = array<i64: 1, 32>}, {pipeline_mode = #tpu.pipeline_mode<synchronous>, transform_indices = @transform_9, window_bounds = array<i64: 1, 32>}, {pipeline_mode = #tpu.pipeline_mode<synchronous>, transform_indices = @transform_10, window_bounds = array<i64: 1, 32>}, {transform_indices = @transform_11, window_bounds = array<i64: 1, 8, 32>}]} {
    %c0 = arith.constant 0 : index
    %c0_0 = arith.constant 0 : index
    %c0_1 = arith.constant 0 : index
    %0 = vector.load %arg2[%c0, %c0_0, %c0_1] : memref<1x8x32xf32, #tpu.memory_space<vmem>>, vector<1x8x32xf32>
    %1 = vector.shape_cast %0 : vector<1x8x32xf32> to vector<8x32xf32>
    %c0_2 = arith.constant 0 : index
    %c0_3 = arith.constant 0 : index
    %c0_4 = arith.constant 0 : index
    %2 = vector.load %arg3[%c0_2, %c0_3, %c0_4] : memref<1x8x32xf32, #tpu.memory_space<vmem>>, vector<1x8x32xf32>
    %3 = vector.shape_cast %2 : vector<1x8x32xf32> to vector<8x32xf32>
    %c0_5 = arith.constant 0 : index
    %c0_6 = arith.constant 0 : index
    %c0_7 = arith.constant 0 : index
    %4 = vector.load %arg4[%c0_5, %c0_6, %c0_7] : memref<1x1x8xf32, #tpu.memory_space<vmem>>, vector<1x1x8xf32>
    %5 = vector.shape_cast %4 : vector<1x1x8xf32> to vector<1x8xf32>
    %c8_i32 = arith.constant 8 : i32
    %6 = arith.muli %arg1, %c8_i32 : i32
    %7 = tpu.iota {dimensions = array<i32: 0>} : vector<8x8xi32>
    %8 = vector.broadcast %6 : i32 to vector<8x8xi32>
    %9 = arith.addi %7, %8 : vector<8x8xi32>
    %10 = tpu.iota {dimensions = array<i32: 1>} : vector<8x8xi32>
    %11 = arith.cmpi sge, %9, %10 : vector<8x8xi32>
    %cst = arith.constant 0.000000e+00 : f32
    %cst_8 = arith.constant -1.000000e+09 : f32
    %12 = vector.broadcast %cst : f32 to vector<8x8xf32>
    %13 = vector.broadcast %cst_8 : f32 to vector<8x8xf32>
    %14 = arith.select %11, %12, %13 : vector<8x8xi1>, vector<8x8xf32>
    %15 = vector.broadcast %5 : vector<1x8xf32> to vector<8x8xf32>
    %16 = arith.addf %15, %14 : vector<8x8xf32>
    %17 = arith.truncf %1 : vector<8x32xf32> to vector<8x32xbf16>
    %c0_9 = arith.constant 0 : index
    %c0_10 = arith.constant 0 : index
    %18 = vector.load %arg5[%c0_9, %c0_10] : memref<32x32xbf16, #tpu.memory_space<vmem>>, vector<32x32xbf16>
    %cst_11 = arith.constant dense<0.000000e+00> : vector<8x32xf32>
    %19 = tpu.matmul %17, %18, %cst_11 {dimension_numbers = #tpu.dot_dimension_numbers<[1], [0], [0], [1], [0, 0, 1, 1], [], []>} : vector<8x32xbf16>, vector<32x32xbf16>, vector<8x32xf32> -> vector<8x32xf32>
    %c0_12 = arith.constant 0 : index
    %c0_13 = arith.constant 0 : index
    %20 = vector.load %arg6[%c0_12, %c0_13] : memref<1x32xf32, #tpu.memory_space<vmem>>, vector<1x32xf32>
    %21 = vector.broadcast %20 : vector<1x32xf32> to vector<8x32xf32>
    %22 = arith.addf %19, %21 : vector<8x32xf32>
    %23 = arith.truncf %3 : vector<8x32xf32> to vector<8x32xbf16>
    %c0_14 = arith.constant 0 : index
    %c0_15 = arith.constant 0 : index
    %24 = vector.load %arg7[%c0_14, %c0_15] : memref<32x64xbf16, #tpu.memory_space<vmem>>, vector<32x64xbf16>
    %cst_16 = arith.constant dense<0.000000e+00> : vector<8x64xf32>
    %25 = tpu.matmul %23, %24, %cst_16 {dimension_numbers = #tpu.dot_dimension_numbers<[1], [0], [0], [1], [0, 0, 1, 1], [], []>} : vector<8x32xbf16>, vector<32x64xbf16>, vector<8x64xf32> -> vector<8x64xf32>
    %c0_17 = arith.constant 0 : index
    %c0_18 = arith.constant 0 : index
    %26 = vector.load %arg8[%c0_17, %c0_18] : memref<1x64xf32, #tpu.memory_space<vmem>>, vector<1x64xf32>
    %27 = vector.broadcast %26 : vector<1x64xf32> to vector<8x64xf32>
    %28 = arith.addf %25, %27 : vector<8x64xf32>
    %29 = vector.extract_strided_slice %28 {offsets = [0, 0], sizes = [8, 32], strides = [1, 1]} : vector<8x64xf32> to vector<8x32xf32>
    %30 = vector.extract_strided_slice %28 {offsets = [0, 32], sizes = [8, 32], strides = [1, 1]} : vector<8x64xf32> to vector<8x32xf32>
    %31 = vector.extract_strided_slice %22 {offsets = [0, 0], sizes = [8, 8], strides = [1, 1]} : vector<8x32xf32> to vector<8x8xf32>
    %32 = arith.truncf %31 : vector<8x8xf32> to vector<8x8xbf16>
    %33 = vector.extract_strided_slice %29 {offsets = [0, 0], sizes = [8, 8], strides = [1, 1]} : vector<8x32xf32> to vector<8x8xf32>
    %34 = arith.truncf %33 : vector<8x8xf32> to vector<8x8xbf16>
    %35 = vector.extract_strided_slice %30 {offsets = [0, 0], sizes = [8, 8], strides = [1, 1]} : vector<8x32xf32> to vector<8x8xf32>
    %36 = arith.truncf %35 : vector<8x8xf32> to vector<8x8xbf16>
    %cst_19 = arith.constant dense<0.000000e+00> : vector<8x8xf32>
    %37 = tpu.matmul %32, %34, %cst_19 {dimension_numbers = #tpu.dot_dimension_numbers<[1], [1], [0], [0], [0, 0, 1, 0], [], []>} : vector<8x8xbf16>, vector<8x8xbf16>, vector<8x8xf32> -> vector<8x8xf32>
    %cst_20 = arith.constant 0.353553385 : f32
    %38 = vector.broadcast %cst_20 : f32 to vector<8x8xf32>
    %39 = arith.mulf %37, %38 : vector<8x8xf32>
    %40 = arith.addf %39, %16 : vector<8x8xf32>
    %cst_21 = arith.constant dense<0xFF800000> : vector<8xf32>
    %41 = vector.multi_reduction <maximumf>, %40, %cst_21 [1] : vector<8x8xf32> to vector<8xf32>
    %42 = vector.shape_cast %41 : vector<8xf32> to vector<8x1xf32>
    %43 = vector.broadcast %42 : vector<8x1xf32> to vector<8x8xf32>
    %44 = arith.subf %40, %43 : vector<8x8xf32>
    %45 = math.exp %44 : vector<8x8xf32>
    %cst_22 = arith.constant dense<0.000000e+00> : vector<8xf32>
    %46 = vector.multi_reduction <add>, %45, %cst_22 [1] : vector<8x8xf32> to vector<8xf32>
    %47 = vector.shape_cast %46 : vector<8xf32> to vector<8x1xf32>
    %48 = vector.broadcast %47 : vector<8x1xf32> to vector<8x8xf32>
    %49 = arith.divf %45, %48 : vector<8x8xf32>
    %50 = arith.truncf %49 : vector<8x8xf32> to vector<8x8xbf16>
    %cst_23 = arith.constant dense<0.000000e+00> : vector<8x8xf32>
    %51 = tpu.matmul %50, %36, %cst_23 {dimension_numbers = #tpu.dot_dimension_numbers<[1], [0], [0], [1], [0, 0, 1, 1], [], []>} : vector<8x8xbf16>, vector<8x8xbf16>, vector<8x8xf32> -> vector<8x8xf32>
    %c0_24 = arith.constant 0 : index
    %c0_25 = arith.constant 0 : index
    %52 = vector.load %arg14[%c0_24, %c0_25] : memref<8x32xf32, #tpu.memory_space<vmem>>, vector<8x8xf32>
    tpu.vector_store %arg14[%c0_24, %c0_25], %51 {strides = array<i32>} : memref<8x32xf32, #tpu.memory_space<vmem>>, vector<8x8xf32>,
    %53 = vector.extract_strided_slice %22 {offsets = [0, 8], sizes = [8, 8], strides = [1, 1]} : vector<8x32xf32> to vector<8x8xf32>
    %54 = arith.truncf %53 : vector<8x8xf32> to vector<8x8xbf16>
    %55 = vector.extract_strided_slice %29 {offsets = [0, 8], sizes = [8, 8], strides = [1, 1]} : vector<8x32xf32> to vector<8x8xf32>
    %56 = arith.truncf %55 : vector<8x8xf32> to vector<8x8xbf16>
    %57 = vector.extract_strided_slice %30 {offsets = [0, 8], sizes = [8, 8], strides = [1, 1]} : vector<8x32xf32> to vector<8x8xf32>
    %58 = arith.truncf %57 : vector<8x8xf32> to vector<8x8xbf16>
    %cst_26 = arith.constant dense<0.000000e+00> : vector<8x8xf32>
    %59 = tpu.matmul %54, %56, %cst_26 {dimension_numbers = #tpu.dot_dimension_numbers<[1], [1], [0], [0], [0, 0, 1, 0], [], []>} : vector<8x8xbf16>, vector<8x8xbf16>, vector<8x8xf32> -> vector<8x8xf32>
    %cst_27 = arith.constant 0.353553385 : f32
    %60 = vector.broadcast %cst_27 : f32 to vector<8x8xf32>
    %61 = arith.mulf %59, %60 : vector<8x8xf32>
    %62 = arith.addf %61, %16 : vector<8x8xf32>
    %cst_28 = arith.constant dense<0xFF800000> : vector<8xf32>
    %63 = vector.multi_reduction <maximumf>, %62, %cst_28 [1] : vector<8x8xf32> to vector<8xf32>
    %64 = vector.shape_cast %63 : vector<8xf32> to vector<8x1xf32>
    %65 = vector.broadcast %64 : vector<8x1xf32> to vector<8x8xf32>
    %66 = arith.subf %62, %65 : vector<8x8xf32>
    %67 = math.exp %66 : vector<8x8xf32>
    %cst_29 = arith.constant dense<0.000000e+00> : vector<8xf32>
    %68 = vector.multi_reduction <add>, %67, %cst_29 [1] : vector<8x8xf32> to vector<8xf32>
    %69 = vector.shape_cast %68 : vector<8xf32> to vector<8x1xf32>
    %70 = vector.broadcast %69 : vector<8x1xf32> to vector<8x8xf32>
    %71 = arith.divf %67, %70 : vector<8x8xf32>
    %72 = arith.truncf %71 : vector<8x8xf32> to vector<8x8xbf16>
    %cst_30 = arith.constant dense<0.000000e+00> : vector<8x8xf32>
    %73 = tpu.matmul %72, %58, %cst_30 {dimension_numbers = #tpu.dot_dimension_numbers<[1], [0], [0], [1], [0, 0, 1, 1], [], []>} : vector<8x8xbf16>, vector<8x8xbf16>, vector<8x8xf32> -> vector<8x8xf32>
    %c0_31 = arith.constant 0 : index
    %c8 = arith.constant 8 : index
    %74 = vector.load %arg14[%c0_31, %c8] : memref<8x32xf32, #tpu.memory_space<vmem>>, vector<8x8xf32>
    tpu.vector_store %arg14[%c0_31, %c8], %73 {strides = array<i32>} : memref<8x32xf32, #tpu.memory_space<vmem>>, vector<8x8xf32>,
    %75 = vector.extract_strided_slice %22 {offsets = [0, 16], sizes = [8, 8], strides = [1, 1]} : vector<8x32xf32> to vector<8x8xf32>
    %76 = arith.truncf %75 : vector<8x8xf32> to vector<8x8xbf16>
    %77 = vector.extract_strided_slice %29 {offsets = [0, 16], sizes = [8, 8], strides = [1, 1]} : vector<8x32xf32> to vector<8x8xf32>
    %78 = arith.truncf %77 : vector<8x8xf32> to vector<8x8xbf16>
    %79 = vector.extract_strided_slice %30 {offsets = [0, 16], sizes = [8, 8], strides = [1, 1]} : vector<8x32xf32> to vector<8x8xf32>
    %80 = arith.truncf %79 : vector<8x8xf32> to vector<8x8xbf16>
    %cst_32 = arith.constant dense<0.000000e+00> : vector<8x8xf32>
    %81 = tpu.matmul %76, %78, %cst_32 {dimension_numbers = #tpu.dot_dimension_numbers<[1], [1], [0], [0], [0, 0, 1, 0], [], []>} : vector<8x8xbf16>, vector<8x8xbf16>, vector<8x8xf32> -> vector<8x8xf32>
    %cst_33 = arith.constant 0.353553385 : f32
    %82 = vector.broadcast %cst_33 : f32 to vector<8x8xf32>
    %83 = arith.mulf %81, %82 : vector<8x8xf32>
    %84 = arith.addf %83, %16 : vector<8x8xf32>
    %cst_34 = arith.constant dense<0xFF800000> : vector<8xf32>
    %85 = vector.multi_reduction <maximumf>, %84, %cst_34 [1] : vector<8x8xf32> to vector<8xf32>
    %86 = vector.shape_cast %85 : vector<8xf32> to vector<8x1xf32>
    %87 = vector.broadcast %86 : vector<8x1xf32> to vector<8x8xf32>
    %88 = arith.subf %84, %87 : vector<8x8xf32>
    %89 = math.exp %88 : vector<8x8xf32>
    %cst_35 = arith.constant dense<0.000000e+00> : vector<8xf32>
    %90 = vector.multi_reduction <add>, %89, %cst_35 [1] : vector<8x8xf32> to vector<8xf32>
    %91 = vector.shape_cast %90 : vector<8xf32> to vector<8x1xf32>
    %92 = vector.broadcast %91 : vector<8x1xf32> to vector<8x8xf32>
    %93 = arith.divf %89, %92 : vector<8x8xf32>
    %94 = arith.truncf %93 : vector<8x8xf32> to vector<8x8xbf16>
    %cst_36 = arith.constant dense<0.000000e+00> : vector<8x8xf32>
    %95 = tpu.matmul %94, %80, %cst_36 {dimension_numbers = #tpu.dot_dimension_numbers<[1], [0], [0], [1], [0, 0, 1, 1], [], []>} : vector<8x8xbf16>, vector<8x8xbf16>, vector<8x8xf32> -> vector<8x8xf32>
    %c0_37 = arith.constant 0 : index
    %c16 = arith.constant 16 : index
    %96 = vector.load %arg14[%c0_37, %c16] : memref<8x32xf32, #tpu.memory_space<vmem>>, vector<8x8xf32>
    tpu.vector_store %arg14[%c0_37, %c16], %95 {strides = array<i32>} : memref<8x32xf32, #tpu.memory_space<vmem>>, vector<8x8xf32>,
    %97 = vector.extract_strided_slice %22 {offsets = [0, 24], sizes = [8, 8], strides = [1, 1]} : vector<8x32xf32> to vector<8x8xf32>
    %98 = arith.truncf %97 : vector<8x8xf32> to vector<8x8xbf16>
    %99 = vector.extract_strided_slice %29 {offsets = [0, 24], sizes = [8, 8], strides = [1, 1]} : vector<8x32xf32> to vector<8x8xf32>
    %100 = arith.truncf %99 : vector<8x8xf32> to vector<8x8xbf16>
    %101 = vector.extract_strided_slice %30 {offsets = [0, 24], sizes = [8, 8], strides = [1, 1]} : vector<8x32xf32> to vector<8x8xf32>
    %102 = arith.truncf %101 : vector<8x8xf32> to vector<8x8xbf16>
    %cst_38 = arith.constant dense<0.000000e+00> : vector<8x8xf32>
    %103 = tpu.matmul %98, %100, %cst_38 {dimension_numbers = #tpu.dot_dimension_numbers<[1], [1], [0], [0], [0, 0, 1, 0], [], []>} : vector<8x8xbf16>, vector<8x8xbf16>, vector<8x8xf32> -> vector<8x8xf32>
    %cst_39 = arith.constant 0.353553385 : f32
    %104 = vector.broadcast %cst_39 : f32 to vector<8x8xf32>
    %105 = arith.mulf %103, %104 : vector<8x8xf32>
    %106 = arith.addf %105, %16 : vector<8x8xf32>
    %cst_40 = arith.constant dense<0xFF800000> : vector<8xf32>
    %107 = vector.multi_reduction <maximumf>, %106, %cst_40 [1] : vector<8x8xf32> to vector<8xf32>
    %108 = vector.shape_cast %107 : vector<8xf32> to vector<8x1xf32>
    %109 = vector.broadcast %108 : vector<8x1xf32> to vector<8x8xf32>
    %110 = arith.subf %106, %109 : vector<8x8xf32>
    %111 = math.exp %110 : vector<8x8xf32>
    %cst_41 = arith.constant dense<0.000000e+00> : vector<8xf32>
    %112 = vector.multi_reduction <add>, %111, %cst_41 [1] : vector<8x8xf32> to vector<8xf32>
    %113 = vector.shape_cast %112 : vector<8xf32> to vector<8x1xf32>
    %114 = vector.broadcast %113 : vector<8x1xf32> to vector<8x8xf32>
    %115 = arith.divf %111, %114 : vector<8x8xf32>
    %116 = arith.truncf %115 : vector<8x8xf32> to vector<8x8xbf16>
    %cst_42 = arith.constant dense<0.000000e+00> : vector<8x8xf32>
    %117 = tpu.matmul %116, %102, %cst_42 {dimension_numbers = #tpu.dot_dimension_numbers<[1], [0], [0], [1], [0, 0, 1, 1], [], []>} : vector<8x8xbf16>, vector<8x8xbf16>, vector<8x8xf32> -> vector<8x8xf32>
    %c0_43 = arith.constant 0 : index
    %c24 = arith.constant 24 : index
    %118 = vector.load %arg14[%c0_43, %c24] : memref<8x32xf32, #tpu.memory_space<vmem>>, vector<8x8xf32>
    tpu.vector_store %arg14[%c0_43, %c24], %117 {strides = array<i32>} : memref<8x32xf32, #tpu.memory_space<vmem>>, vector<8x8xf32>,
    %c0_44 = arith.constant 0 : index
    %c0_45 = arith.constant 0 : index
    %119 = vector.load %arg14[%c0_44, %c0_45] : memref<8x32xf32, #tpu.memory_space<vmem>>, vector<8x32xf32>
    %120 = arith.truncf %119 : vector<8x32xf32> to vector<8x32xbf16>
    %c0_46 = arith.constant 0 : index
    %c0_47 = arith.constant 0 : index
    %121 = vector.load %arg9[%c0_46, %c0_47] : memref<32x32xbf16, #tpu.memory_space<vmem>>, vector<32x32xbf16>
    %cst_48 = arith.constant dense<0.000000e+00> : vector<8x32xf32>
    %122 = tpu.matmul %120, %121, %cst_48 {dimension_numbers = #tpu.dot_dimension_numbers<[1], [0], [0], [1], [0, 0, 1, 1], [], []>} : vector<8x32xbf16>, vector<32x32xbf16>, vector<8x32xf32> -> vector<8x32xf32>
    %c0_49 = arith.constant 0 : index
    %c0_50 = arith.constant 0 : index
    %123 = vector.load %arg10[%c0_49, %c0_50] : memref<1x32xf32, #tpu.memory_space<vmem>>, vector<1x32xf32>
    %124 = vector.broadcast %123 : vector<1x32xf32> to vector<8x32xf32>
    %125 = arith.addf %122, %124 : vector<8x32xf32>
    %126 = arith.addf %1, %125 : vector<8x32xf32>
    %cst_51 = arith.constant dense<0.000000e+00> : vector<8xf32>
    %127 = vector.multi_reduction <add>, %126, %cst_51 [1] : vector<8x32xf32> to vector<8xf32>
    %128 = vector.shape_cast %127 : vector<8xf32> to vector<8x1xf32>
    %cst_52 = arith.constant 3.200000e+01 : f32
    %129 = vector.broadcast %cst_52 : f32 to vector<8x1xf32>
    %130 = arith.divf %128, %129 : vector<8x1xf32>
    %131 = vector.broadcast %130 : vector<8x1xf32> to vector<8x32xf32>
    %132 = arith.subf %126, %131 : vector<8x32xf32>
    %133 = arith.mulf %132, %132 : vector<8x32xf32>
    %cst_53 = arith.constant dense<0.000000e+00> : vector<8xf32>
    %134 = vector.multi_reduction <add>, %133, %cst_53 [1] : vector<8x32xf32> to vector<8xf32>
    %135 = vector.shape_cast %134 : vector<8xf32> to vector<8x1xf32>
    %cst_54 = arith.constant 3.200000e+01 : f32
    %136 = vector.broadcast %cst_54 : f32 to vector<8x1xf32>
    %137 = arith.divf %135, %136 : vector<8x1xf32>
    %138 = vector.broadcast %130 : vector<8x1xf32> to vector<8x32xf32>
    %139 = arith.subf %126, %138 : vector<8x32xf32>
    %cst_55 = arith.constant 9.99999974E-6 : f32
    %140 = vector.broadcast %cst_55 : f32 to vector<8x1xf32>
    %141 = arith.addf %137, %140 : vector<8x1xf32>
    %142 = math.rsqrt %141 : vector<8x1xf32>
    %143 = vector.broadcast %142 : vector<8x1xf32> to vector<8x32xf32>
    %144 = arith.mulf %139, %143 : vector<8x32xf32>
    %c0_56 = arith.constant 0 : index
    %c0_57 = arith.constant 0 : index
    %145 = vector.load %arg11[%c0_56, %c0_57] : memref<1x32xf32, #tpu.memory_space<vmem>>, vector<1x32xf32>
    %146 = vector.broadcast %145 : vector<1x32xf32> to vector<8x32xf32>
    %147 = arith.mulf %144, %146 : vector<8x32xf32>
    %c0_58 = arith.constant 0 : index
    %c0_59 = arith.constant 0 : index
    %148 = vector.load %arg12[%c0_58, %c0_59] : memref<1x32xf32, #tpu.memory_space<vmem>>, vector<1x32xf32>
    %149 = vector.broadcast %148 : vector<1x32xf32> to vector<8x32xf32>
    %150 = arith.addf %147, %149 : vector<8x32xf32>
    %c0_60 = arith.constant 0 : index
    %c0_61 = arith.constant 0 : index
    %c0_62 = arith.constant 0 : index
    %151 = vector.load %arg13[%c0_60, %c0_61, %c0_62] : memref<1x8x32xf32, #tpu.memory_space<vmem>>, vector<1x8x32xf32>
    %152 = vector.shape_cast %151 : vector<1x8x32xf32> to vector<8x32xf32>
    %153 = vector.shape_cast %150 : vector<8x32xf32> to vector<1x8x32xf32>
    tpu.vector_store %arg13[%c0_60, %c0_61, %c0_62], %153 {strides = array<i32>} : memref<1x8x32xf32, #tpu.memory_space<vmem>>, vector<1x8x32xf32>,
    return
  }
  func.func @transform_0(%arg0: i32, %arg1: i32) -> (i32, i32, i32) {
    %c0_i32 = arith.constant 0 : i32
    %c0_i32_0 = arith.constant 0 : i32
    return %arg0, %arg1, %c0_i32 : i32, i32, i32
  }
  func.func @transform_1(%arg0: i32, %arg1: i32) -> (i32, i32, i32) {
    %c0_i32 = arith.constant 0 : i32
    %c0_i32_0 = arith.constant 0 : i32
    %c0_i32_1 = arith.constant 0 : i32
    return %arg0, %c0_i32, %c0_i32_0 : i32, i32, i32
  }
  func.func @transform_2(%arg0: i32, %arg1: i32) -> (i32, i32, i32) {
    %c0_i32 = arith.constant 0 : i32
    %c0_i32_0 = arith.constant 0 : i32
    %c0_i32_1 = arith.constant 0 : i32
    return %arg0, %c0_i32, %c0_i32_0 : i32, i32, i32
  }
  func.func @transform_3(%arg0: i32, %arg1: i32) -> (i32, i32) {
    %c0_i32 = arith.constant 0 : i32
    %c0_i32_0 = arith.constant 0 : i32
    %c0_i32_1 = arith.constant 0 : i32
    return %c0_i32, %c0_i32_0 : i32, i32
  }
  func.func @transform_4(%arg0: i32, %arg1: i32) -> (i32, i32) {
    %c0_i32 = arith.constant 0 : i32
    %c0_i32_0 = arith.constant 0 : i32
    %c0_i32_1 = arith.constant 0 : i32
    return %c0_i32, %c0_i32_0 : i32, i32
  }
  func.func @transform_5(%arg0: i32, %arg1: i32) -> (i32, i32) {
    %c0_i32 = arith.constant 0 : i32
    %c0_i32_0 = arith.constant 0 : i32
    %c0_i32_1 = arith.constant 0 : i32
    return %c0_i32, %c0_i32_0 : i32, i32
  }
  func.func @transform_6(%arg0: i32, %arg1: i32) -> (i32, i32) {
    %c0_i32 = arith.constant 0 : i32
    %c0_i32_0 = arith.constant 0 : i32
    %c0_i32_1 = arith.constant 0 : i32
    return %c0_i32, %c0_i32_0 : i32, i32
  }
  func.func @transform_7(%arg0: i32, %arg1: i32) -> (i32, i32) {
    %c0_i32 = arith.constant 0 : i32
    %c0_i32_0 = arith.constant 0 : i32
    %c0_i32_1 = arith.constant 0 : i32
    return %c0_i32, %c0_i32_0 : i32, i32
  }
  func.func @transform_8(%arg0: i32, %arg1: i32) -> (i32, i32) {
    %c0_i32 = arith.constant 0 : i32
    %c0_i32_0 = arith.constant 0 : i32
    %c0_i32_1 = arith.constant 0 : i32
    return %c0_i32, %c0_i32_0 : i32, i32
  }
  func.func @transform_9(%arg0: i32, %arg1: i32) -> (i32, i32) {
    %c0_i32 = arith.constant 0 : i32
    %c0_i32_0 = arith.constant 0 : i32
    %c0_i32_1 = arith.constant 0 : i32
    return %c0_i32, %c0_i32_0 : i32, i32
  }
  func.func @transform_10(%arg0: i32, %arg1: i32) -> (i32, i32) {
    %c0_i32 = arith.constant 0 : i32
    %c0_i32_0 = arith.constant 0 : i32
    %c0_i32_1 = arith.constant 0 : i32
    return %c0_i32, %c0_i32_0 : i32, i32
  }
  func.func @transform_11(%arg0: i32, %arg1: i32) -> (i32, i32, i32) {
    %c0_i32 = arith.constant 0 : i32
    %c0_i32_0 = arith.constant 0 : i32
    return %arg0, %arg1, %c0_i32 : i32, i32, i32
  }
}

module attributes {stable_mosaic.version = 11 : i64} {
  func.func @_mha_ln_kernel(%arg0: i32, %arg1: i32, %arg2: memref<1x8x32xf32, #tpu.memory_space<vmem>>, %arg3: memref<1x8x32xf32, #tpu.memory_space<vmem>>, %arg4: memref<1x1x8xf32, #tpu.memory_space<vmem>>, %arg5: memref<32x32xbf16, #tpu.memory_space<vmem>>, %arg6: memref<1x32xf32, #tpu.memory_space<vmem>>, %arg7: memref<32x64xbf16, #tpu.memory_space<vmem>>, %arg8: memref<1x64xf32, #tpu.memory_space<vmem>>, %arg9: memref<32x32xbf16, #tpu.memory_space<vmem>>, %arg10: memref<1x32xf32, #tpu.memory_space<vmem>>, %arg11: memref<1x32xf32, #tpu.memory_space<vmem>>, %arg12: memref<1x32xf32, #tpu.memory_space<vmem>>, %arg13: memref<1x8x32xf32, #tpu.memory_space<vmem>>, %arg14: memref<8x32xf32, #tpu.memory_space<vmem>>) attributes {dimension_semantics = [#tpu.dimension_semantics<parallel>, #tpu.dimension_semantics<parallel>], iteration_bounds = array<i64: 2, 1>, scalar_prefetch = 0 : i64, scratch_operands = 1 : i64, tpu.core_type = #tpu.core_type<tc>, window_params = [{transform_indices = @transform_0, window_bounds = array<i64: 1, 8, 32>}, {transform_indices = @transform_1, window_bounds = array<i64: 1, 8, 32>}, {transform_indices = @transform_2, window_bounds = array<i64: 1, 1, 8>}, {pipeline_mode = #tpu.pipeline_mode<synchronous>, transform_indices = @transform_3, window_bounds = array<i64: 32, 32>}, {pipeline_mode = #tpu.pipeline_mode<synchronous>, transform_indices = @transform_4, window_bounds = array<i64: 1, 32>}, {pipeline_mode = #tpu.pipeline_mode<synchronous>, transform_indices = @transform_5, window_bounds = array<i64: 32, 64>}, {pipeline_mode = #tpu.pipeline_mode<synchronous>, transform_indices = @transform_6, window_bounds = array<i64: 1, 64>}, {pipeline_mode = #tpu.pipeline_mode<synchronous>, transform_indices = @transform_7, window_bounds = array<i64: 32, 32>}, {pipeline_mode = #tpu.pipeline_mode<synchronous>, transform_indices = @transform_8, window_bounds = array<i64: 1, 32>}, {pipeline_mode = #tpu.pipeline_mode<synchronous>, transform_indices = @transform_9, window_bounds = array<i64: 1, 32>}, {pipeline_mode = #tpu.pipeline_mode<synchronous>, transform_indices = @transform_10, window_bounds = array<i64: 1, 32>}, {transform_indices = @transform_11, window_bounds = array<i64: 1, 8, 32>}]} {
    %c0 = arith.constant 0 : index
    %c0_0 = arith.constant 0 : index
    %c0_1 = arith.constant 0 : index
    %0 = vector.load %arg2[%c0, %c0_0, %c0_1] : memref<1x8x32xf32, #tpu.memory_space<vmem>>, vector<1x8x32xf32>
    %1 = vector.shape_cast %0 : vector<1x8x32xf32> to vector<8x32xf32>
    %c0_2 = arith.constant 0 : index
    %c0_3 = arith.constant 0 : index
    %c0_4 = arith.constant 0 : index
    %2 = vector.load %arg3[%c0_2, %c0_3, %c0_4] : memref<1x8x32xf32, #tpu.memory_space<vmem>>, vector<1x8x32xf32>
    %3 = vector.shape_cast %2 : vector<1x8x32xf32> to vector<8x32xf32>
    %c0_5 = arith.constant 0 : index
    %c0_6 = arith.constant 0 : index
    %c0_7 = arith.constant 0 : index
    %4 = vector.load %arg4[%c0_5, %c0_6, %c0_7] : memref<1x1x8xf32, #tpu.memory_space<vmem>>, vector<1x1x8xf32>
    %5 = vector.shape_cast %4 : vector<1x1x8xf32> to vector<1x8xf32>
    %6 = arith.truncf %1 : vector<8x32xf32> to vector<8x32xbf16>
    %c0_8 = arith.constant 0 : index
    %c0_9 = arith.constant 0 : index
    %7 = vector.load %arg5[%c0_8, %c0_9] : memref<32x32xbf16, #tpu.memory_space<vmem>>, vector<32x32xbf16>
    %cst = arith.constant dense<0.000000e+00> : vector<8x32xf32>
    %8 = tpu.matmul %6, %7, %cst {dimension_numbers = #tpu.dot_dimension_numbers<[1], [0], [0], [1], [0, 0, 1, 1], [], []>} : vector<8x32xbf16>, vector<32x32xbf16>, vector<8x32xf32> -> vector<8x32xf32>
    %c0_10 = arith.constant 0 : index
    %c0_11 = arith.constant 0 : index
    %9 = vector.load %arg6[%c0_10, %c0_11] : memref<1x32xf32, #tpu.memory_space<vmem>>, vector<1x32xf32>
    %10 = vector.broadcast %9 : vector<1x32xf32> to vector<8x32xf32>
    %11 = arith.addf %8, %10 : vector<8x32xf32>
    %12 = arith.truncf %3 : vector<8x32xf32> to vector<8x32xbf16>
    %c0_12 = arith.constant 0 : index
    %c0_13 = arith.constant 0 : index
    %13 = vector.load %arg7[%c0_12, %c0_13] : memref<32x64xbf16, #tpu.memory_space<vmem>>, vector<32x64xbf16>
    %cst_14 = arith.constant dense<0.000000e+00> : vector<8x64xf32>
    %14 = tpu.matmul %12, %13, %cst_14 {dimension_numbers = #tpu.dot_dimension_numbers<[1], [0], [0], [1], [0, 0, 1, 1], [], []>} : vector<8x32xbf16>, vector<32x64xbf16>, vector<8x64xf32> -> vector<8x64xf32>
    %c0_15 = arith.constant 0 : index
    %c0_16 = arith.constant 0 : index
    %15 = vector.load %arg8[%c0_15, %c0_16] : memref<1x64xf32, #tpu.memory_space<vmem>>, vector<1x64xf32>
    %16 = vector.broadcast %15 : vector<1x64xf32> to vector<8x64xf32>
    %17 = arith.addf %14, %16 : vector<8x64xf32>
    %18 = vector.extract_strided_slice %17 {offsets = [0, 0], sizes = [8, 32], strides = [1, 1]} : vector<8x64xf32> to vector<8x32xf32>
    %19 = vector.extract_strided_slice %17 {offsets = [0, 32], sizes = [8, 32], strides = [1, 1]} : vector<8x64xf32> to vector<8x32xf32>
    %20 = vector.extract_strided_slice %11 {offsets = [0, 0], sizes = [8, 8], strides = [1, 1]} : vector<8x32xf32> to vector<8x8xf32>
    %21 = arith.truncf %20 : vector<8x8xf32> to vector<8x8xbf16>
    %22 = vector.extract_strided_slice %18 {offsets = [0, 0], sizes = [8, 8], strides = [1, 1]} : vector<8x32xf32> to vector<8x8xf32>
    %23 = arith.truncf %22 : vector<8x8xf32> to vector<8x8xbf16>
    %24 = vector.extract_strided_slice %19 {offsets = [0, 0], sizes = [8, 8], strides = [1, 1]} : vector<8x32xf32> to vector<8x8xf32>
    %25 = arith.truncf %24 : vector<8x8xf32> to vector<8x8xbf16>
    %cst_17 = arith.constant dense<0.000000e+00> : vector<8x8xf32>
    %26 = tpu.matmul %21, %23, %cst_17 {dimension_numbers = #tpu.dot_dimension_numbers<[1], [1], [0], [0], [0, 0, 1, 0], [], []>} : vector<8x8xbf16>, vector<8x8xbf16>, vector<8x8xf32> -> vector<8x8xf32>
    %cst_18 = arith.constant 0.353553385 : f32
    %27 = vector.broadcast %cst_18 : f32 to vector<8x8xf32>
    %28 = arith.mulf %26, %27 : vector<8x8xf32>
    %29 = vector.broadcast %5 : vector<1x8xf32> to vector<8x8xf32>
    %30 = arith.addf %28, %29 : vector<8x8xf32>
    %cst_19 = arith.constant dense<0xFF800000> : vector<8xf32>
    %31 = vector.multi_reduction <maximumf>, %30, %cst_19 [1] : vector<8x8xf32> to vector<8xf32>
    %32 = vector.shape_cast %31 : vector<8xf32> to vector<8x1xf32>
    %33 = vector.broadcast %32 : vector<8x1xf32> to vector<8x8xf32>
    %34 = arith.subf %30, %33 : vector<8x8xf32>
    %35 = math.exp %34 : vector<8x8xf32>
    %cst_20 = arith.constant dense<0.000000e+00> : vector<8xf32>
    %36 = vector.multi_reduction <add>, %35, %cst_20 [1] : vector<8x8xf32> to vector<8xf32>
    %37 = vector.shape_cast %36 : vector<8xf32> to vector<8x1xf32>
    %38 = vector.broadcast %37 : vector<8x1xf32> to vector<8x8xf32>
    %39 = arith.divf %35, %38 : vector<8x8xf32>
    %40 = arith.truncf %39 : vector<8x8xf32> to vector<8x8xbf16>
    %cst_21 = arith.constant dense<0.000000e+00> : vector<8x8xf32>
    %41 = tpu.matmul %40, %25, %cst_21 {dimension_numbers = #tpu.dot_dimension_numbers<[1], [0], [0], [1], [0, 0, 1, 1], [], []>} : vector<8x8xbf16>, vector<8x8xbf16>, vector<8x8xf32> -> vector<8x8xf32>
    %c0_22 = arith.constant 0 : index
    %c0_23 = arith.constant 0 : index
    %42 = vector.load %arg14[%c0_22, %c0_23] : memref<8x32xf32, #tpu.memory_space<vmem>>, vector<8x8xf32>
    tpu.vector_store %arg14[%c0_22, %c0_23], %41 {strides = array<i32>} : memref<8x32xf32, #tpu.memory_space<vmem>>, vector<8x8xf32>,
    %43 = vector.extract_strided_slice %11 {offsets = [0, 8], sizes = [8, 8], strides = [1, 1]} : vector<8x32xf32> to vector<8x8xf32>
    %44 = arith.truncf %43 : vector<8x8xf32> to vector<8x8xbf16>
    %45 = vector.extract_strided_slice %18 {offsets = [0, 8], sizes = [8, 8], strides = [1, 1]} : vector<8x32xf32> to vector<8x8xf32>
    %46 = arith.truncf %45 : vector<8x8xf32> to vector<8x8xbf16>
    %47 = vector.extract_strided_slice %19 {offsets = [0, 8], sizes = [8, 8], strides = [1, 1]} : vector<8x32xf32> to vector<8x8xf32>
    %48 = arith.truncf %47 : vector<8x8xf32> to vector<8x8xbf16>
    %cst_24 = arith.constant dense<0.000000e+00> : vector<8x8xf32>
    %49 = tpu.matmul %44, %46, %cst_24 {dimension_numbers = #tpu.dot_dimension_numbers<[1], [1], [0], [0], [0, 0, 1, 0], [], []>} : vector<8x8xbf16>, vector<8x8xbf16>, vector<8x8xf32> -> vector<8x8xf32>
    %cst_25 = arith.constant 0.353553385 : f32
    %50 = vector.broadcast %cst_25 : f32 to vector<8x8xf32>
    %51 = arith.mulf %49, %50 : vector<8x8xf32>
    %52 = vector.broadcast %5 : vector<1x8xf32> to vector<8x8xf32>
    %53 = arith.addf %51, %52 : vector<8x8xf32>
    %cst_26 = arith.constant dense<0xFF800000> : vector<8xf32>
    %54 = vector.multi_reduction <maximumf>, %53, %cst_26 [1] : vector<8x8xf32> to vector<8xf32>
    %55 = vector.shape_cast %54 : vector<8xf32> to vector<8x1xf32>
    %56 = vector.broadcast %55 : vector<8x1xf32> to vector<8x8xf32>
    %57 = arith.subf %53, %56 : vector<8x8xf32>
    %58 = math.exp %57 : vector<8x8xf32>
    %cst_27 = arith.constant dense<0.000000e+00> : vector<8xf32>
    %59 = vector.multi_reduction <add>, %58, %cst_27 [1] : vector<8x8xf32> to vector<8xf32>
    %60 = vector.shape_cast %59 : vector<8xf32> to vector<8x1xf32>
    %61 = vector.broadcast %60 : vector<8x1xf32> to vector<8x8xf32>
    %62 = arith.divf %58, %61 : vector<8x8xf32>
    %63 = arith.truncf %62 : vector<8x8xf32> to vector<8x8xbf16>
    %cst_28 = arith.constant dense<0.000000e+00> : vector<8x8xf32>
    %64 = tpu.matmul %63, %48, %cst_28 {dimension_numbers = #tpu.dot_dimension_numbers<[1], [0], [0], [1], [0, 0, 1, 1], [], []>} : vector<8x8xbf16>, vector<8x8xbf16>, vector<8x8xf32> -> vector<8x8xf32>
    %c0_29 = arith.constant 0 : index
    %c8 = arith.constant 8 : index
    %65 = vector.load %arg14[%c0_29, %c8] : memref<8x32xf32, #tpu.memory_space<vmem>>, vector<8x8xf32>
    tpu.vector_store %arg14[%c0_29, %c8], %64 {strides = array<i32>} : memref<8x32xf32, #tpu.memory_space<vmem>>, vector<8x8xf32>,
    %66 = vector.extract_strided_slice %11 {offsets = [0, 16], sizes = [8, 8], strides = [1, 1]} : vector<8x32xf32> to vector<8x8xf32>
    %67 = arith.truncf %66 : vector<8x8xf32> to vector<8x8xbf16>
    %68 = vector.extract_strided_slice %18 {offsets = [0, 16], sizes = [8, 8], strides = [1, 1]} : vector<8x32xf32> to vector<8x8xf32>
    %69 = arith.truncf %68 : vector<8x8xf32> to vector<8x8xbf16>
    %70 = vector.extract_strided_slice %19 {offsets = [0, 16], sizes = [8, 8], strides = [1, 1]} : vector<8x32xf32> to vector<8x8xf32>
    %71 = arith.truncf %70 : vector<8x8xf32> to vector<8x8xbf16>
    %cst_30 = arith.constant dense<0.000000e+00> : vector<8x8xf32>
    %72 = tpu.matmul %67, %69, %cst_30 {dimension_numbers = #tpu.dot_dimension_numbers<[1], [1], [0], [0], [0, 0, 1, 0], [], []>} : vector<8x8xbf16>, vector<8x8xbf16>, vector<8x8xf32> -> vector<8x8xf32>
    %cst_31 = arith.constant 0.353553385 : f32
    %73 = vector.broadcast %cst_31 : f32 to vector<8x8xf32>
    %74 = arith.mulf %72, %73 : vector<8x8xf32>
    %75 = vector.broadcast %5 : vector<1x8xf32> to vector<8x8xf32>
    %76 = arith.addf %74, %75 : vector<8x8xf32>
    %cst_32 = arith.constant dense<0xFF800000> : vector<8xf32>
    %77 = vector.multi_reduction <maximumf>, %76, %cst_32 [1] : vector<8x8xf32> to vector<8xf32>
    %78 = vector.shape_cast %77 : vector<8xf32> to vector<8x1xf32>
    %79 = vector.broadcast %78 : vector<8x1xf32> to vector<8x8xf32>
    %80 = arith.subf %76, %79 : vector<8x8xf32>
    %81 = math.exp %80 : vector<8x8xf32>
    %cst_33 = arith.constant dense<0.000000e+00> : vector<8xf32>
    %82 = vector.multi_reduction <add>, %81, %cst_33 [1] : vector<8x8xf32> to vector<8xf32>
    %83 = vector.shape_cast %82 : vector<8xf32> to vector<8x1xf32>
    %84 = vector.broadcast %83 : vector<8x1xf32> to vector<8x8xf32>
    %85 = arith.divf %81, %84 : vector<8x8xf32>
    %86 = arith.truncf %85 : vector<8x8xf32> to vector<8x8xbf16>
    %cst_34 = arith.constant dense<0.000000e+00> : vector<8x8xf32>
    %87 = tpu.matmul %86, %71, %cst_34 {dimension_numbers = #tpu.dot_dimension_numbers<[1], [0], [0], [1], [0, 0, 1, 1], [], []>} : vector<8x8xbf16>, vector<8x8xbf16>, vector<8x8xf32> -> vector<8x8xf32>
    %c0_35 = arith.constant 0 : index
    %c16 = arith.constant 16 : index
    %88 = vector.load %arg14[%c0_35, %c16] : memref<8x32xf32, #tpu.memory_space<vmem>>, vector<8x8xf32>
    tpu.vector_store %arg14[%c0_35, %c16], %87 {strides = array<i32>} : memref<8x32xf32, #tpu.memory_space<vmem>>, vector<8x8xf32>,
    %89 = vector.extract_strided_slice %11 {offsets = [0, 24], sizes = [8, 8], strides = [1, 1]} : vector<8x32xf32> to vector<8x8xf32>
    %90 = arith.truncf %89 : vector<8x8xf32> to vector<8x8xbf16>
    %91 = vector.extract_strided_slice %18 {offsets = [0, 24], sizes = [8, 8], strides = [1, 1]} : vector<8x32xf32> to vector<8x8xf32>
    %92 = arith.truncf %91 : vector<8x8xf32> to vector<8x8xbf16>
    %93 = vector.extract_strided_slice %19 {offsets = [0, 24], sizes = [8, 8], strides = [1, 1]} : vector<8x32xf32> to vector<8x8xf32>
    %94 = arith.truncf %93 : vector<8x8xf32> to vector<8x8xbf16>
    %cst_36 = arith.constant dense<0.000000e+00> : vector<8x8xf32>
    %95 = tpu.matmul %90, %92, %cst_36 {dimension_numbers = #tpu.dot_dimension_numbers<[1], [1], [0], [0], [0, 0, 1, 0], [], []>} : vector<8x8xbf16>, vector<8x8xbf16>, vector<8x8xf32> -> vector<8x8xf32>
    %cst_37 = arith.constant 0.353553385 : f32
    %96 = vector.broadcast %cst_37 : f32 to vector<8x8xf32>
    %97 = arith.mulf %95, %96 : vector<8x8xf32>
    %98 = vector.broadcast %5 : vector<1x8xf32> to vector<8x8xf32>
    %99 = arith.addf %97, %98 : vector<8x8xf32>
    %cst_38 = arith.constant dense<0xFF800000> : vector<8xf32>
    %100 = vector.multi_reduction <maximumf>, %99, %cst_38 [1] : vector<8x8xf32> to vector<8xf32>
    %101 = vector.shape_cast %100 : vector<8xf32> to vector<8x1xf32>
    %102 = vector.broadcast %101 : vector<8x1xf32> to vector<8x8xf32>
    %103 = arith.subf %99, %102 : vector<8x8xf32>
    %104 = math.exp %103 : vector<8x8xf32>
    %cst_39 = arith.constant dense<0.000000e+00> : vector<8xf32>
    %105 = vector.multi_reduction <add>, %104, %cst_39 [1] : vector<8x8xf32> to vector<8xf32>
    %106 = vector.shape_cast %105 : vector<8xf32> to vector<8x1xf32>
    %107 = vector.broadcast %106 : vector<8x1xf32> to vector<8x8xf32>
    %108 = arith.divf %104, %107 : vector<8x8xf32>
    %109 = arith.truncf %108 : vector<8x8xf32> to vector<8x8xbf16>
    %cst_40 = arith.constant dense<0.000000e+00> : vector<8x8xf32>
    %110 = tpu.matmul %109, %94, %cst_40 {dimension_numbers = #tpu.dot_dimension_numbers<[1], [0], [0], [1], [0, 0, 1, 1], [], []>} : vector<8x8xbf16>, vector<8x8xbf16>, vector<8x8xf32> -> vector<8x8xf32>
    %c0_41 = arith.constant 0 : index
    %c24 = arith.constant 24 : index
    %111 = vector.load %arg14[%c0_41, %c24] : memref<8x32xf32, #tpu.memory_space<vmem>>, vector<8x8xf32>
    tpu.vector_store %arg14[%c0_41, %c24], %110 {strides = array<i32>} : memref<8x32xf32, #tpu.memory_space<vmem>>, vector<8x8xf32>,
    %c0_42 = arith.constant 0 : index
    %c0_43 = arith.constant 0 : index
    %112 = vector.load %arg14[%c0_42, %c0_43] : memref<8x32xf32, #tpu.memory_space<vmem>>, vector<8x32xf32>
    %113 = arith.truncf %112 : vector<8x32xf32> to vector<8x32xbf16>
    %c0_44 = arith.constant 0 : index
    %c0_45 = arith.constant 0 : index
    %114 = vector.load %arg9[%c0_44, %c0_45] : memref<32x32xbf16, #tpu.memory_space<vmem>>, vector<32x32xbf16>
    %cst_46 = arith.constant dense<0.000000e+00> : vector<8x32xf32>
    %115 = tpu.matmul %113, %114, %cst_46 {dimension_numbers = #tpu.dot_dimension_numbers<[1], [0], [0], [1], [0, 0, 1, 1], [], []>} : vector<8x32xbf16>, vector<32x32xbf16>, vector<8x32xf32> -> vector<8x32xf32>
    %c0_47 = arith.constant 0 : index
    %c0_48 = arith.constant 0 : index
    %116 = vector.load %arg10[%c0_47, %c0_48] : memref<1x32xf32, #tpu.memory_space<vmem>>, vector<1x32xf32>
    %117 = vector.broadcast %116 : vector<1x32xf32> to vector<8x32xf32>
    %118 = arith.addf %115, %117 : vector<8x32xf32>
    %119 = arith.addf %1, %118 : vector<8x32xf32>
    %cst_49 = arith.constant dense<0.000000e+00> : vector<8xf32>
    %120 = vector.multi_reduction <add>, %119, %cst_49 [1] : vector<8x32xf32> to vector<8xf32>
    %121 = vector.shape_cast %120 : vector<8xf32> to vector<8x1xf32>
    %cst_50 = arith.constant 3.200000e+01 : f32
    %122 = vector.broadcast %cst_50 : f32 to vector<8x1xf32>
    %123 = arith.divf %121, %122 : vector<8x1xf32>
    %124 = vector.broadcast %123 : vector<8x1xf32> to vector<8x32xf32>
    %125 = arith.subf %119, %124 : vector<8x32xf32>
    %126 = arith.mulf %125, %125 : vector<8x32xf32>
    %cst_51 = arith.constant dense<0.000000e+00> : vector<8xf32>
    %127 = vector.multi_reduction <add>, %126, %cst_51 [1] : vector<8x32xf32> to vector<8xf32>
    %128 = vector.shape_cast %127 : vector<8xf32> to vector<8x1xf32>
    %cst_52 = arith.constant 3.200000e+01 : f32
    %129 = vector.broadcast %cst_52 : f32 to vector<8x1xf32>
    %130 = arith.divf %128, %129 : vector<8x1xf32>
    %131 = vector.broadcast %123 : vector<8x1xf32> to vector<8x32xf32>
    %132 = arith.subf %119, %131 : vector<8x32xf32>
    %cst_53 = arith.constant 9.99999974E-6 : f32
    %133 = vector.broadcast %cst_53 : f32 to vector<8x1xf32>
    %134 = arith.addf %130, %133 : vector<8x1xf32>
    %135 = math.rsqrt %134 : vector<8x1xf32>
    %136 = vector.broadcast %135 : vector<8x1xf32> to vector<8x32xf32>
    %137 = arith.mulf %132, %136 : vector<8x32xf32>
    %c0_54 = arith.constant 0 : index
    %c0_55 = arith.constant 0 : index
    %138 = vector.load %arg11[%c0_54, %c0_55] : memref<1x32xf32, #tpu.memory_space<vmem>>, vector<1x32xf32>
    %139 = vector.broadcast %138 : vector<1x32xf32> to vector<8x32xf32>
    %140 = arith.mulf %137, %139 : vector<8x32xf32>
    %c0_56 = arith.constant 0 : index
    %c0_57 = arith.constant 0 : index
    %141 = vector.load %arg12[%c0_56, %c0_57] : memref<1x32xf32, #tpu.memory_space<vmem>>, vector<1x32xf32>
    %142 = vector.broadcast %141 : vector<1x32xf32> to vector<8x32xf32>
    %143 = arith.addf %140, %142 : vector<8x32xf32>
    %c0_58 = arith.constant 0 : index
    %c0_59 = arith.constant 0 : index
    %c0_60 = arith.constant 0 : index
    %144 = vector.load %arg13[%c0_58, %c0_59, %c0_60] : memref<1x8x32xf32, #tpu.memory_space<vmem>>, vector<1x8x32xf32>
    %145 = vector.shape_cast %144 : vector<1x8x32xf32> to vector<8x32xf32>
    %146 = vector.shape_cast %143 : vector<8x32xf32> to vector<1x8x32xf32>
    tpu.vector_store %arg13[%c0_58, %c0_59, %c0_60], %146 {strides = array<i32>} : memref<1x8x32xf32, #tpu.memory_space<vmem>>, vector<1x8x32xf32>,
    return
  }
  func.func @transform_0(%arg0: i32, %arg1: i32) -> (i32, i32, i32) {
    %c0_i32 = arith.constant 0 : i32
    %c0_i32_0 = arith.constant 0 : i32
    return %arg0, %arg1, %c0_i32 : i32, i32, i32
  }
  func.func @transform_1(%arg0: i32, %arg1: i32) -> (i32, i32, i32) {
    %c0_i32 = arith.constant 0 : i32
    %c0_i32_0 = arith.constant 0 : i32
    %c0_i32_1 = arith.constant 0 : i32
    return %arg0, %c0_i32, %c0_i32_0 : i32, i32, i32
  }
  func.func @transform_2(%arg0: i32, %arg1: i32) -> (i32, i32, i32) {
    %c0_i32 = arith.constant 0 : i32
    %c0_i32_0 = arith.constant 0 : i32
    %c0_i32_1 = arith.constant 0 : i32
    return %arg0, %c0_i32, %c0_i32_0 : i32, i32, i32
  }
  func.func @transform_3(%arg0: i32, %arg1: i32) -> (i32, i32) {
    %c0_i32 = arith.constant 0 : i32
    %c0_i32_0 = arith.constant 0 : i32
    %c0_i32_1 = arith.constant 0 : i32
    return %c0_i32, %c0_i32_0 : i32, i32
  }
  func.func @transform_4(%arg0: i32, %arg1: i32) -> (i32, i32) {
    %c0_i32 = arith.constant 0 : i32
    %c0_i32_0 = arith.constant 0 : i32
    %c0_i32_1 = arith.constant 0 : i32
    return %c0_i32, %c0_i32_0 : i32, i32
  }
  func.func @transform_5(%arg0: i32, %arg1: i32) -> (i32, i32) {
    %c0_i32 = arith.constant 0 : i32
    %c0_i32_0 = arith.constant 0 : i32
    %c0_i32_1 = arith.constant 0 : i32
    return %c0_i32, %c0_i32_0 : i32, i32
  }
  func.func @transform_6(%arg0: i32, %arg1: i32) -> (i32, i32) {
    %c0_i32 = arith.constant 0 : i32
    %c0_i32_0 = arith.constant 0 : i32
    %c0_i32_1 = arith.constant 0 : i32
    return %c0_i32, %c0_i32_0 : i32, i32
  }
  func.func @transform_7(%arg0: i32, %arg1: i32) -> (i32, i32) {
    %c0_i32 = arith.constant 0 : i32
    %c0_i32_0 = arith.constant 0 : i32
    %c0_i32_1 = arith.constant 0 : i32
    return %c0_i32, %c0_i32_0 : i32, i32
  }
  func.func @transform_8(%arg0: i32, %arg1: i32) -> (i32, i32) {
    %c0_i32 = arith.constant 0 : i32
    %c0_i32_0 = arith.constant 0 : i32
    %c0_i32_1 = arith.constant 0 : i32
    return %c0_i32, %c0_i32_0 : i32, i32
  }
  func.func @transform_9(%arg0: i32, %arg1: i32) -> (i32, i32) {
    %c0_i32 = arith.constant 0 : i32
    %c0_i32_0 = arith.constant 0 : i32
    %c0_i32_1 = arith.constant 0 : i32
    return %c0_i32, %c0_i32_0 : i32, i32
  }
  func.func @transform_10(%arg0: i32, %arg1: i32) -> (i32, i32) {
    %c0_i32 = arith.constant 0 : i32
    %c0_i32_0 = arith.constant 0 : i32
    %c0_i32_1 = arith.constant 0 : i32
    return %c0_i32, %c0_i32_0 : i32, i32
  }
  func.func @transform_11(%arg0: i32, %arg1: i32) -> (i32, i32, i32) {
    %c0_i32 = arith.constant 0 : i32
    %c0_i32_0 = arith.constant 0 : i32
    return %arg0, %arg1, %c0_i32 : i32, i32, i32
  }
}

module attributes {stable_mosaic.version = 11 : i64} {
  func.func @_mha_ln_kernel(%arg0: i32, %arg1: i32, %arg2: memref<1x8x32xf32, #tpu.memory_space<vmem>>, %arg3: memref<1x8x32xf32, #tpu.memory_space<vmem>>, %arg4: memref<1x1x8xf32, #tpu.memory_space<vmem>>, %arg5: memref<32x32xbf16, #tpu.memory_space<vmem>>, %arg6: memref<1x32xf32, #tpu.memory_space<vmem>>, %arg7: memref<32x64xbf16, #tpu.memory_space<vmem>>, %arg8: memref<1x64xf32, #tpu.memory_space<vmem>>, %arg9: memref<32x32xbf16, #tpu.memory_space<vmem>>, %arg10: memref<1x32xf32, #tpu.memory_space<vmem>>, %arg11: memref<1x32xf32, #tpu.memory_space<vmem>>, %arg12: memref<1x32xf32, #tpu.memory_space<vmem>>, %arg13: memref<1x8x32xf32, #tpu.memory_space<vmem>>, %arg14: memref<8x32xf32, #tpu.memory_space<vmem>>) attributes {dimension_semantics = [#tpu.dimension_semantics<parallel>, #tpu.dimension_semantics<parallel>], iteration_bounds = array<i64: 2, 1>, scalar_prefetch = 0 : i64, scratch_operands = 1 : i64, tpu.core_type = #tpu.core_type<tc>, window_params = [{transform_indices = @transform_0, window_bounds = array<i64: 1, 8, 32>}, {transform_indices = @transform_1, window_bounds = array<i64: 1, 8, 32>}, {transform_indices = @transform_2, window_bounds = array<i64: 1, 1, 8>}, {pipeline_mode = #tpu.pipeline_mode<synchronous>, transform_indices = @transform_3, window_bounds = array<i64: 32, 32>}, {pipeline_mode = #tpu.pipeline_mode<synchronous>, transform_indices = @transform_4, window_bounds = array<i64: 1, 32>}, {pipeline_mode = #tpu.pipeline_mode<synchronous>, transform_indices = @transform_5, window_bounds = array<i64: 32, 64>}, {pipeline_mode = #tpu.pipeline_mode<synchronous>, transform_indices = @transform_6, window_bounds = array<i64: 1, 64>}, {pipeline_mode = #tpu.pipeline_mode<synchronous>, transform_indices = @transform_7, window_bounds = array<i64: 32, 32>}, {pipeline_mode = #tpu.pipeline_mode<synchronous>, transform_indices = @transform_8, window_bounds = array<i64: 1, 32>}, {pipeline_mode = #tpu.pipeline_mode<synchronous>, transform_indices = @transform_9, window_bounds = array<i64: 1, 32>}, {pipeline_mode = #tpu.pipeline_mode<synchronous>, transform_indices = @transform_10, window_bounds = array<i64: 1, 32>}, {transform_indices = @transform_11, window_bounds = array<i64: 1, 8, 32>}]} {
    %c0 = arith.constant 0 : index
    %c0_0 = arith.constant 0 : index
    %c0_1 = arith.constant 0 : index
    %0 = vector.load %arg2[%c0, %c0_0, %c0_1] : memref<1x8x32xf32, #tpu.memory_space<vmem>>, vector<1x8x32xf32>
    %1 = vector.shape_cast %0 : vector<1x8x32xf32> to vector<8x32xf32>
    %c0_2 = arith.constant 0 : index
    %c0_3 = arith.constant 0 : index
    %c0_4 = arith.constant 0 : index
    %2 = vector.load %arg3[%c0_2, %c0_3, %c0_4] : memref<1x8x32xf32, #tpu.memory_space<vmem>>, vector<1x8x32xf32>
    %3 = vector.shape_cast %2 : vector<1x8x32xf32> to vector<8x32xf32>
    %c0_5 = arith.constant 0 : index
    %c0_6 = arith.constant 0 : index
    %c0_7 = arith.constant 0 : index
    %4 = vector.load %arg4[%c0_5, %c0_6, %c0_7] : memref<1x1x8xf32, #tpu.memory_space<vmem>>, vector<1x1x8xf32>
    %5 = vector.shape_cast %4 : vector<1x1x8xf32> to vector<1x8xf32>
    %6 = arith.truncf %1 : vector<8x32xf32> to vector<8x32xbf16>
    %c0_8 = arith.constant 0 : index
    %c0_9 = arith.constant 0 : index
    %7 = vector.load %arg5[%c0_8, %c0_9] : memref<32x32xbf16, #tpu.memory_space<vmem>>, vector<32x32xbf16>
    %cst = arith.constant dense<0.000000e+00> : vector<8x32xf32>
    %8 = tpu.matmul %6, %7, %cst {dimension_numbers = #tpu.dot_dimension_numbers<[1], [0], [0], [1], [0, 0, 1, 1], [], []>} : vector<8x32xbf16>, vector<32x32xbf16>, vector<8x32xf32> -> vector<8x32xf32>
    %c0_10 = arith.constant 0 : index
    %c0_11 = arith.constant 0 : index
    %9 = vector.load %arg6[%c0_10, %c0_11] : memref<1x32xf32, #tpu.memory_space<vmem>>, vector<1x32xf32>
    %10 = vector.broadcast %9 : vector<1x32xf32> to vector<8x32xf32>
    %11 = arith.addf %8, %10 : vector<8x32xf32>
    %12 = arith.truncf %3 : vector<8x32xf32> to vector<8x32xbf16>
    %c0_12 = arith.constant 0 : index
    %c0_13 = arith.constant 0 : index
    %13 = vector.load %arg7[%c0_12, %c0_13] : memref<32x64xbf16, #tpu.memory_space<vmem>>, vector<32x64xbf16>
    %cst_14 = arith.constant dense<0.000000e+00> : vector<8x64xf32>
    %14 = tpu.matmul %12, %13, %cst_14 {dimension_numbers = #tpu.dot_dimension_numbers<[1], [0], [0], [1], [0, 0, 1, 1], [], []>} : vector<8x32xbf16>, vector<32x64xbf16>, vector<8x64xf32> -> vector<8x64xf32>
    %c0_15 = arith.constant 0 : index
    %c0_16 = arith.constant 0 : index
    %15 = vector.load %arg8[%c0_15, %c0_16] : memref<1x64xf32, #tpu.memory_space<vmem>>, vector<1x64xf32>
    %16 = vector.broadcast %15 : vector<1x64xf32> to vector<8x64xf32>
    %17 = arith.addf %14, %16 : vector<8x64xf32>
    %18 = vector.extract_strided_slice %17 {offsets = [0, 0], sizes = [8, 32], strides = [1, 1]} : vector<8x64xf32> to vector<8x32xf32>
    %19 = vector.extract_strided_slice %17 {offsets = [0, 32], sizes = [8, 32], strides = [1, 1]} : vector<8x64xf32> to vector<8x32xf32>
    %20 = vector.extract_strided_slice %11 {offsets = [0, 0], sizes = [8, 8], strides = [1, 1]} : vector<8x32xf32> to vector<8x8xf32>
    %21 = arith.truncf %20 : vector<8x8xf32> to vector<8x8xbf16>
    %22 = vector.extract_strided_slice %18 {offsets = [0, 0], sizes = [8, 8], strides = [1, 1]} : vector<8x32xf32> to vector<8x8xf32>
    %23 = arith.truncf %22 : vector<8x8xf32> to vector<8x8xbf16>
    %24 = vector.extract_strided_slice %19 {offsets = [0, 0], sizes = [8, 8], strides = [1, 1]} : vector<8x32xf32> to vector<8x8xf32>
    %25 = arith.truncf %24 : vector<8x8xf32> to vector<8x8xbf16>
    %cst_17 = arith.constant dense<0.000000e+00> : vector<8x8xf32>
    %26 = tpu.matmul %21, %23, %cst_17 {dimension_numbers = #tpu.dot_dimension_numbers<[1], [1], [0], [0], [0, 0, 1, 0], [], []>} : vector<8x8xbf16>, vector<8x8xbf16>, vector<8x8xf32> -> vector<8x8xf32>
    %cst_18 = arith.constant 0.353553385 : f32
    %27 = vector.broadcast %cst_18 : f32 to vector<8x8xf32>
    %28 = arith.mulf %26, %27 : vector<8x8xf32>
    %29 = vector.broadcast %5 : vector<1x8xf32> to vector<8x8xf32>
    %30 = arith.addf %28, %29 : vector<8x8xf32>
    %cst_19 = arith.constant dense<0xFF800000> : vector<8xf32>
    %31 = vector.multi_reduction <maximumf>, %30, %cst_19 [1] : vector<8x8xf32> to vector<8xf32>
    %32 = vector.shape_cast %31 : vector<8xf32> to vector<8x1xf32>
    %33 = vector.broadcast %32 : vector<8x1xf32> to vector<8x8xf32>
    %34 = arith.subf %30, %33 : vector<8x8xf32>
    %35 = math.exp %34 : vector<8x8xf32>
    %cst_20 = arith.constant dense<0.000000e+00> : vector<8xf32>
    %36 = vector.multi_reduction <add>, %35, %cst_20 [1] : vector<8x8xf32> to vector<8xf32>
    %37 = vector.shape_cast %36 : vector<8xf32> to vector<8x1xf32>
    %38 = vector.broadcast %37 : vector<8x1xf32> to vector<8x8xf32>
    %39 = arith.divf %35, %38 : vector<8x8xf32>
    %40 = arith.truncf %39 : vector<8x8xf32> to vector<8x8xbf16>
    %cst_21 = arith.constant dense<0.000000e+00> : vector<8x8xf32>
    %41 = tpu.matmul %40, %25, %cst_21 {dimension_numbers = #tpu.dot_dimension_numbers<[1], [0], [0], [1], [0, 0, 1, 1], [], []>} : vector<8x8xbf16>, vector<8x8xbf16>, vector<8x8xf32> -> vector<8x8xf32>
    %c0_22 = arith.constant 0 : index
    %c0_23 = arith.constant 0 : index
    %42 = vector.load %arg14[%c0_22, %c0_23] : memref<8x32xf32, #tpu.memory_space<vmem>>, vector<8x8xf32>
    tpu.vector_store %arg14[%c0_22, %c0_23], %41 {strides = array<i32>} : memref<8x32xf32, #tpu.memory_space<vmem>>, vector<8x8xf32>,
    %43 = vector.extract_strided_slice %11 {offsets = [0, 8], sizes = [8, 8], strides = [1, 1]} : vector<8x32xf32> to vector<8x8xf32>
    %44 = arith.truncf %43 : vector<8x8xf32> to vector<8x8xbf16>
    %45 = vector.extract_strided_slice %18 {offsets = [0, 8], sizes = [8, 8], strides = [1, 1]} : vector<8x32xf32> to vector<8x8xf32>
    %46 = arith.truncf %45 : vector<8x8xf32> to vector<8x8xbf16>
    %47 = vector.extract_strided_slice %19 {offsets = [0, 8], sizes = [8, 8], strides = [1, 1]} : vector<8x32xf32> to vector<8x8xf32>
    %48 = arith.truncf %47 : vector<8x8xf32> to vector<8x8xbf16>
    %cst_24 = arith.constant dense<0.000000e+00> : vector<8x8xf32>
    %49 = tpu.matmul %44, %46, %cst_24 {dimension_numbers = #tpu.dot_dimension_numbers<[1], [1], [0], [0], [0, 0, 1, 0], [], []>} : vector<8x8xbf16>, vector<8x8xbf16>, vector<8x8xf32> -> vector<8x8xf32>
    %cst_25 = arith.constant 0.353553385 : f32
    %50 = vector.broadcast %cst_25 : f32 to vector<8x8xf32>
    %51 = arith.mulf %49, %50 : vector<8x8xf32>
    %52 = vector.broadcast %5 : vector<1x8xf32> to vector<8x8xf32>
    %53 = arith.addf %51, %52 : vector<8x8xf32>
    %cst_26 = arith.constant dense<0xFF800000> : vector<8xf32>
    %54 = vector.multi_reduction <maximumf>, %53, %cst_26 [1] : vector<8x8xf32> to vector<8xf32>
    %55 = vector.shape_cast %54 : vector<8xf32> to vector<8x1xf32>
    %56 = vector.broadcast %55 : vector<8x1xf32> to vector<8x8xf32>
    %57 = arith.subf %53, %56 : vector<8x8xf32>
    %58 = math.exp %57 : vector<8x8xf32>
    %cst_27 = arith.constant dense<0.000000e+00> : vector<8xf32>
    %59 = vector.multi_reduction <add>, %58, %cst_27 [1] : vector<8x8xf32> to vector<8xf32>
    %60 = vector.shape_cast %59 : vector<8xf32> to vector<8x1xf32>
    %61 = vector.broadcast %60 : vector<8x1xf32> to vector<8x8xf32>
    %62 = arith.divf %58, %61 : vector<8x8xf32>
    %63 = arith.truncf %62 : vector<8x8xf32> to vector<8x8xbf16>
    %cst_28 = arith.constant dense<0.000000e+00> : vector<8x8xf32>
    %64 = tpu.matmul %63, %48, %cst_28 {dimension_numbers = #tpu.dot_dimension_numbers<[1], [0], [0], [1], [0, 0, 1, 1], [], []>} : vector<8x8xbf16>, vector<8x8xbf16>, vector<8x8xf32> -> vector<8x8xf32>
    %c0_29 = arith.constant 0 : index
    %c8 = arith.constant 8 : index
    %65 = vector.load %arg14[%c0_29, %c8] : memref<8x32xf32, #tpu.memory_space<vmem>>, vector<8x8xf32>
    tpu.vector_store %arg14[%c0_29, %c8], %64 {strides = array<i32>} : memref<8x32xf32, #tpu.memory_space<vmem>>, vector<8x8xf32>,
    %66 = vector.extract_strided_slice %11 {offsets = [0, 16], sizes = [8, 8], strides = [1, 1]} : vector<8x32xf32> to vector<8x8xf32>
    %67 = arith.truncf %66 : vector<8x8xf32> to vector<8x8xbf16>
    %68 = vector.extract_strided_slice %18 {offsets = [0, 16], sizes = [8, 8], strides = [1, 1]} : vector<8x32xf32> to vector<8x8xf32>
    %69 = arith.truncf %68 : vector<8x8xf32> to vector<8x8xbf16>
    %70 = vector.extract_strided_slice %19 {offsets = [0, 16], sizes = [8, 8], strides = [1, 1]} : vector<8x32xf32> to vector<8x8xf32>
    %71 = arith.truncf %70 : vector<8x8xf32> to vector<8x8xbf16>
    %cst_30 = arith.constant dense<0.000000e+00> : vector<8x8xf32>
    %72 = tpu.matmul %67, %69, %cst_30 {dimension_numbers = #tpu.dot_dimension_numbers<[1], [1], [0], [0], [0, 0, 1, 0], [], []>} : vector<8x8xbf16>, vector<8x8xbf16>, vector<8x8xf32> -> vector<8x8xf32>
    %cst_31 = arith.constant 0.353553385 : f32
    %73 = vector.broadcast %cst_31 : f32 to vector<8x8xf32>
    %74 = arith.mulf %72, %73 : vector<8x8xf32>
    %75 = vector.broadcast %5 : vector<1x8xf32> to vector<8x8xf32>
    %76 = arith.addf %74, %75 : vector<8x8xf32>
    %cst_32 = arith.constant dense<0xFF800000> : vector<8xf32>
    %77 = vector.multi_reduction <maximumf>, %76, %cst_32 [1] : vector<8x8xf32> to vector<8xf32>
    %78 = vector.shape_cast %77 : vector<8xf32> to vector<8x1xf32>
    %79 = vector.broadcast %78 : vector<8x1xf32> to vector<8x8xf32>
    %80 = arith.subf %76, %79 : vector<8x8xf32>
    %81 = math.exp %80 : vector<8x8xf32>
    %cst_33 = arith.constant dense<0.000000e+00> : vector<8xf32>
    %82 = vector.multi_reduction <add>, %81, %cst_33 [1] : vector<8x8xf32> to vector<8xf32>
    %83 = vector.shape_cast %82 : vector<8xf32> to vector<8x1xf32>
    %84 = vector.broadcast %83 : vector<8x1xf32> to vector<8x8xf32>
    %85 = arith.divf %81, %84 : vector<8x8xf32>
    %86 = arith.truncf %85 : vector<8x8xf32> to vector<8x8xbf16>
    %cst_34 = arith.constant dense<0.000000e+00> : vector<8x8xf32>
    %87 = tpu.matmul %86, %71, %cst_34 {dimension_numbers = #tpu.dot_dimension_numbers<[1], [0], [0], [1], [0, 0, 1, 1], [], []>} : vector<8x8xbf16>, vector<8x8xbf16>, vector<8x8xf32> -> vector<8x8xf32>
    %c0_35 = arith.constant 0 : index
    %c16 = arith.constant 16 : index
    %88 = vector.load %arg14[%c0_35, %c16] : memref<8x32xf32, #tpu.memory_space<vmem>>, vector<8x8xf32>
    tpu.vector_store %arg14[%c0_35, %c16], %87 {strides = array<i32>} : memref<8x32xf32, #tpu.memory_space<vmem>>, vector<8x8xf32>,
    %89 = vector.extract_strided_slice %11 {offsets = [0, 24], sizes = [8, 8], strides = [1, 1]} : vector<8x32xf32> to vector<8x8xf32>
    %90 = arith.truncf %89 : vector<8x8xf32> to vector<8x8xbf16>
    %91 = vector.extract_strided_slice %18 {offsets = [0, 24], sizes = [8, 8], strides = [1, 1]} : vector<8x32xf32> to vector<8x8xf32>
    %92 = arith.truncf %91 : vector<8x8xf32> to vector<8x8xbf16>
    %93 = vector.extract_strided_slice %19 {offsets = [0, 24], sizes = [8, 8], strides = [1, 1]} : vector<8x32xf32> to vector<8x8xf32>
    %94 = arith.truncf %93 : vector<8x8xf32> to vector<8x8xbf16>
    %cst_36 = arith.constant dense<0.000000e+00> : vector<8x8xf32>
    %95 = tpu.matmul %90, %92, %cst_36 {dimension_numbers = #tpu.dot_dimension_numbers<[1], [1], [0], [0], [0, 0, 1, 0], [], []>} : vector<8x8xbf16>, vector<8x8xbf16>, vector<8x8xf32> -> vector<8x8xf32>
    %cst_37 = arith.constant 0.353553385 : f32
    %96 = vector.broadcast %cst_37 : f32 to vector<8x8xf32>
    %97 = arith.mulf %95, %96 : vector<8x8xf32>
    %98 = vector.broadcast %5 : vector<1x8xf32> to vector<8x8xf32>
    %99 = arith.addf %97, %98 : vector<8x8xf32>
    %cst_38 = arith.constant dense<0xFF800000> : vector<8xf32>
    %100 = vector.multi_reduction <maximumf>, %99, %cst_38 [1] : vector<8x8xf32> to vector<8xf32>
    %101 = vector.shape_cast %100 : vector<8xf32> to vector<8x1xf32>
    %102 = vector.broadcast %101 : vector<8x1xf32> to vector<8x8xf32>
    %103 = arith.subf %99, %102 : vector<8x8xf32>
    %104 = math.exp %103 : vector<8x8xf32>
    %cst_39 = arith.constant dense<0.000000e+00> : vector<8xf32>
    %105 = vector.multi_reduction <add>, %104, %cst_39 [1] : vector<8x8xf32> to vector<8xf32>
    %106 = vector.shape_cast %105 : vector<8xf32> to vector<8x1xf32>
    %107 = vector.broadcast %106 : vector<8x1xf32> to vector<8x8xf32>
    %108 = arith.divf %104, %107 : vector<8x8xf32>
    %109 = arith.truncf %108 : vector<8x8xf32> to vector<8x8xbf16>
    %cst_40 = arith.constant dense<0.000000e+00> : vector<8x8xf32>
    %110 = tpu.matmul %109, %94, %cst_40 {dimension_numbers = #tpu.dot_dimension_numbers<[1], [0], [0], [1], [0, 0, 1, 1], [], []>} : vector<8x8xbf16>, vector<8x8xbf16>, vector<8x8xf32> -> vector<8x8xf32>
    %c0_41 = arith.constant 0 : index
    %c24 = arith.constant 24 : index
    %111 = vector.load %arg14[%c0_41, %c24] : memref<8x32xf32, #tpu.memory_space<vmem>>, vector<8x8xf32>
    tpu.vector_store %arg14[%c0_41, %c24], %110 {strides = array<i32>} : memref<8x32xf32, #tpu.memory_space<vmem>>, vector<8x8xf32>,
    %c0_42 = arith.constant 0 : index
    %c0_43 = arith.constant 0 : index
    %112 = vector.load %arg14[%c0_42, %c0_43] : memref<8x32xf32, #tpu.memory_space<vmem>>, vector<8x32xf32>
    %113 = arith.truncf %112 : vector<8x32xf32> to vector<8x32xbf16>
    %c0_44 = arith.constant 0 : index
    %c0_45 = arith.constant 0 : index
    %114 = vector.load %arg9[%c0_44, %c0_45] : memref<32x32xbf16, #tpu.memory_space<vmem>>, vector<32x32xbf16>
    %cst_46 = arith.constant dense<0.000000e+00> : vector<8x32xf32>
    %115 = tpu.matmul %113, %114, %cst_46 {dimension_numbers = #tpu.dot_dimension_numbers<[1], [0], [0], [1], [0, 0, 1, 1], [], []>} : vector<8x32xbf16>, vector<32x32xbf16>, vector<8x32xf32> -> vector<8x32xf32>
    %c0_47 = arith.constant 0 : index
    %c0_48 = arith.constant 0 : index
    %116 = vector.load %arg10[%c0_47, %c0_48] : memref<1x32xf32, #tpu.memory_space<vmem>>, vector<1x32xf32>
    %117 = vector.broadcast %116 : vector<1x32xf32> to vector<8x32xf32>
    %118 = arith.addf %115, %117 : vector<8x32xf32>
    %119 = arith.addf %1, %118 : vector<8x32xf32>
    %cst_49 = arith.constant dense<0.000000e+00> : vector<8xf32>
    %120 = vector.multi_reduction <add>, %119, %cst_49 [1] : vector<8x32xf32> to vector<8xf32>
    %121 = vector.shape_cast %120 : vector<8xf32> to vector<8x1xf32>
    %cst_50 = arith.constant 3.200000e+01 : f32
    %122 = vector.broadcast %cst_50 : f32 to vector<8x1xf32>
    %123 = arith.divf %121, %122 : vector<8x1xf32>
    %124 = vector.broadcast %123 : vector<8x1xf32> to vector<8x32xf32>
    %125 = arith.subf %119, %124 : vector<8x32xf32>
    %126 = arith.mulf %125, %125 : vector<8x32xf32>
    %cst_51 = arith.constant dense<0.000000e+00> : vector<8xf32>
    %127 = vector.multi_reduction <add>, %126, %cst_51 [1] : vector<8x32xf32> to vector<8xf32>
    %128 = vector.shape_cast %127 : vector<8xf32> to vector<8x1xf32>
    %cst_52 = arith.constant 3.200000e+01 : f32
    %129 = vector.broadcast %cst_52 : f32 to vector<8x1xf32>
    %130 = arith.divf %128, %129 : vector<8x1xf32>
    %131 = vector.broadcast %123 : vector<8x1xf32> to vector<8x32xf32>
    %132 = arith.subf %119, %131 : vector<8x32xf32>
    %cst_53 = arith.constant 9.99999974E-6 : f32
    %133 = vector.broadcast %cst_53 : f32 to vector<8x1xf32>
    %134 = arith.addf %130, %133 : vector<8x1xf32>
    %135 = math.rsqrt %134 : vector<8x1xf32>
    %136 = vector.broadcast %135 : vector<8x1xf32> to vector<8x32xf32>
    %137 = arith.mulf %132, %136 : vector<8x32xf32>
    %c0_54 = arith.constant 0 : index
    %c0_55 = arith.constant 0 : index
    %138 = vector.load %arg11[%c0_54, %c0_55] : memref<1x32xf32, #tpu.memory_space<vmem>>, vector<1x32xf32>
    %139 = vector.broadcast %138 : vector<1x32xf32> to vector<8x32xf32>
    %140 = arith.mulf %137, %139 : vector<8x32xf32>
    %c0_56 = arith.constant 0 : index
    %c0_57 = arith.constant 0 : index
    %141 = vector.load %arg12[%c0_56, %c0_57] : memref<1x32xf32, #tpu.memory_space<vmem>>, vector<1x32xf32>
    %142 = vector.broadcast %141 : vector<1x32xf32> to vector<8x32xf32>
    %143 = arith.addf %140, %142 : vector<8x32xf32>
    %c0_58 = arith.constant 0 : index
    %c0_59 = arith.constant 0 : index
    %c0_60 = arith.constant 0 : index
    %144 = vector.load %arg13[%c0_58, %c0_59, %c0_60] : memref<1x8x32xf32, #tpu.memory_space<vmem>>, vector<1x8x32xf32>
    %145 = vector.shape_cast %144 : vector<1x8x32xf32> to vector<8x32xf32>
    %146 = vector.shape_cast %143 : vector<8x32xf32> to vector<1x8x32xf32>
    tpu.vector_store %arg13[%c0_58, %c0_59, %c0_60], %146 {strides = array<i32>} : memref<1x8x32xf32, #tpu.memory_space<vmem>>, vector<1x8x32xf32>,
    return
  }
  func.func @transform_0(%arg0: i32, %arg1: i32) -> (i32, i32, i32) {
    %c0_i32 = arith.constant 0 : i32
    %c0_i32_0 = arith.constant 0 : i32
    return %arg0, %arg1, %c0_i32 : i32, i32, i32
  }
  func.func @transform_1(%arg0: i32, %arg1: i32) -> (i32, i32, i32) {
    %c0_i32 = arith.constant 0 : i32
    %c0_i32_0 = arith.constant 0 : i32
    %c0_i32_1 = arith.constant 0 : i32
    return %arg0, %c0_i32, %c0_i32_0 : i32, i32, i32
  }
  func.func @transform_2(%arg0: i32, %arg1: i32) -> (i32, i32, i32) {
    %c0_i32 = arith.constant 0 : i32
    %c0_i32_0 = arith.constant 0 : i32
    %c0_i32_1 = arith.constant 0 : i32
    return %arg0, %c0_i32, %c0_i32_0 : i32, i32, i32
  }
  func.func @transform_3(%arg0: i32, %arg1: i32) -> (i32, i32) {
    %c0_i32 = arith.constant 0 : i32
    %c0_i32_0 = arith.constant 0 : i32
    %c0_i32_1 = arith.constant 0 : i32
    return %c0_i32, %c0_i32_0 : i32, i32
  }
  func.func @transform_4(%arg0: i32, %arg1: i32) -> (i32, i32) {
    %c0_i32 = arith.constant 0 : i32
    %c0_i32_0 = arith.constant 0 : i32
    %c0_i32_1 = arith.constant 0 : i32
    return %c0_i32, %c0_i32_0 : i32, i32
  }
  func.func @transform_5(%arg0: i32, %arg1: i32) -> (i32, i32) {
    %c0_i32 = arith.constant 0 : i32
    %c0_i32_0 = arith.constant 0 : i32
    %c0_i32_1 = arith.constant 0 : i32
    return %c0_i32, %c0_i32_0 : i32, i32
  }
  func.func @transform_6(%arg0: i32, %arg1: i32) -> (i32, i32) {
    %c0_i32 = arith.constant 0 : i32
    %c0_i32_0 = arith.constant 0 : i32
    %c0_i32_1 = arith.constant 0 : i32
    return %c0_i32, %c0_i32_0 : i32, i32
  }
  func.func @transform_7(%arg0: i32, %arg1: i32) -> (i32, i32) {
    %c0_i32 = arith.constant 0 : i32
    %c0_i32_0 = arith.constant 0 : i32
    %c0_i32_1 = arith.constant 0 : i32
    return %c0_i32, %c0_i32_0 : i32, i32
  }
  func.func @transform_8(%arg0: i32, %arg1: i32) -> (i32, i32) {
    %c0_i32 = arith.constant 0 : i32
    %c0_i32_0 = arith.constant 0 : i32
    %c0_i32_1 = arith.constant 0 : i32
    return %c0_i32, %c0_i32_0 : i32, i32
  }
  func.func @transform_9(%arg0: i32, %arg1: i32) -> (i32, i32) {
    %c0_i32 = arith.constant 0 : i32
    %c0_i32_0 = arith.constant 0 : i32
    %c0_i32_1 = arith.constant 0 : i32
    return %c0_i32, %c0_i32_0 : i32, i32
  }
  func.func @transform_10(%arg0: i32, %arg1: i32) -> (i32, i32) {
    %c0_i32 = arith.constant 0 : i32
    %c0_i32_0 = arith.constant 0 : i32
    %c0_i32_1 = arith.constant 0 : i32
    return %c0_i32, %c0_i32_0 : i32, i32
  }
  func.func @transform_11(%arg0: i32, %arg1: i32) -> (i32, i32, i32) {
    %c0_i32 = arith.constant 0 : i32
    %c0_i32_0 = arith.constant 0 : i32
    return %arg0, %arg1, %c0_i32 : i32, i32, i32
  }
}

module attributes {stable_mosaic.version = 11 : i64} {
  func.func @_ffn_ln_kernel(%arg0: i32, %arg1: i32, %arg2: memref<8x32xf32, #tpu.memory_space<vmem>>, %arg3: memref<32x64xbf16, #tpu.memory_space<vmem>>, %arg4: memref<1x64xf32, #tpu.memory_space<vmem>>, %arg5: memref<64x32xbf16, #tpu.memory_space<vmem>>, %arg6: memref<1x32xf32, #tpu.memory_space<vmem>>, %arg7: memref<1x32xf32, #tpu.memory_space<vmem>>, %arg8: memref<1x32xf32, #tpu.memory_space<vmem>>, %arg9: memref<8x32xf32, #tpu.memory_space<vmem>>, %arg10: memref<8x32xf32, #tpu.memory_space<vmem>>) attributes {dimension_semantics = [#tpu.dimension_semantics<parallel>, #tpu.dimension_semantics<arbitrary>], iteration_bounds = array<i64: 2, 1>, scalar_prefetch = 0 : i64, scratch_operands = 1 : i64, tpu.core_type = #tpu.core_type<tc>, window_params = [{transform_indices = @transform_0, window_bounds = array<i64: 8, 32>}, {transform_indices = @transform_1, window_bounds = array<i64: 32, 64>}, {transform_indices = @transform_2, window_bounds = array<i64: 1, 64>}, {transform_indices = @transform_3, window_bounds = array<i64: 64, 32>}, {pipeline_mode = #tpu.pipeline_mode<synchronous>, transform_indices = @transform_4, window_bounds = array<i64: 1, 32>}, {pipeline_mode = #tpu.pipeline_mode<synchronous>, transform_indices = @transform_5, window_bounds = array<i64: 1, 32>}, {pipeline_mode = #tpu.pipeline_mode<synchronous>, transform_indices = @transform_6, window_bounds = array<i64: 1, 32>}, {transform_indices = @transform_7, window_bounds = array<i64: 8, 32>}]} {
    %c0_i32 = arith.constant 0 : i32
    %0 = arith.cmpi eq, %arg1, %c0_i32 : i32
    %1 = arith.extui %0 : i1 to i32
    %c0_i32_0 = arith.constant 0 : i32
    %2 = arith.cmpi ne, %1, %c0_i32_0 : i32
    scf.if %2 {
      %cst_16 = arith.constant 0.000000e+00 : f32
      %21 = vector.broadcast %cst_16 : f32 to vector<8x32xf32>
      %c0_17 = arith.constant 0 : index
      %c0_18 = arith.constant 0 : index
      %22 = vector.load %arg10[%c0_17, %c0_18] : memref<8x32xf32, #tpu.memory_space<vmem>>, vector<8x32xf32>
      tpu.vector_store %arg10[%c0_17, %c0_18], %21 {strides = array<i32>} : memref<8x32xf32, #tpu.memory_space<vmem>>, vector<8x32xf32>,
    } else {
    }
    %c0 = arith.constant 0 : index
    %c0_1 = arith.constant 0 : index
    %3 = vector.load %arg2[%c0, %c0_1] : memref<8x32xf32, #tpu.memory_space<vmem>>, vector<8x32xf32>
    %4 = arith.truncf %3 : vector<8x32xf32> to vector<8x32xbf16>
    %c0_2 = arith.constant 0 : index
    %c0_3 = arith.constant 0 : index
    %5 = vector.load %arg3[%c0_2, %c0_3] : memref<32x64xbf16, #tpu.memory_space<vmem>>, vector<32x64xbf16>
    %cst = arith.constant dense<0.000000e+00> : vector<8x64xf32>
    %6 = tpu.matmul %4, %5, %cst {dimension_numbers = #tpu.dot_dimension_numbers<[1], [0], [0], [1], [0, 0, 1, 1], [], []>} : vector<8x32xbf16>, vector<32x64xbf16>, vector<8x64xf32> -> vector<8x64xf32>
    %c0_4 = arith.constant 0 : index
    %c0_5 = arith.constant 0 : index
    %7 = vector.load %arg4[%c0_4, %c0_5] : memref<1x64xf32, #tpu.memory_space<vmem>>, vector<1x64xf32>
    %8 = vector.broadcast %7 : vector<1x64xf32> to vector<8x64xf32>
    %9 = arith.addf %6, %8 : vector<8x64xf32>
    %cst_6 = arith.constant 0.000000e+00 : f32
    %10 = vector.broadcast %cst_6 : f32 to vector<8x64xf32>
    %11 = arith.maximumf %9, %10 : vector<8x64xf32>
    %c0_7 = arith.constant 0 : index
    %c0_8 = arith.constant 0 : index
    %12 = vector.load %arg10[%c0_7, %c0_8] : memref<8x32xf32, #tpu.memory_space<vmem>>, vector<8x32xf32>
    %13 = arith.truncf %11 : vector<8x64xf32> to vector<8x64xbf16>
    %c0_9 = arith.constant 0 : index
    %c0_10 = arith.constant 0 : index
    %14 = vector.load %arg5[%c0_9, %c0_10] : memref<64x32xbf16, #tpu.memory_space<vmem>>, vector<64x32xbf16>
    %cst_11 = arith.constant dense<0.000000e+00> : vector<8x32xf32>
    %15 = tpu.matmul %13, %14, %cst_11 {dimension_numbers = #tpu.dot_dimension_numbers<[1], [0], [0], [1], [0, 0, 1, 1], [], []>} : vector<8x64xbf16>, vector<64x32xbf16>, vector<8x32xf32> -> vector<8x32xf32>
    %16 = arith.addf %12, %15 : vector<8x32xf32>
    %c0_12 = arith.constant 0 : index
    %c0_13 = arith.constant 0 : index
    %17 = vector.load %arg10[%c0_12, %c0_13] : memref<8x32xf32, #tpu.memory_space<vmem>>, vector<8x32xf32>
    tpu.vector_store %arg10[%c0_12, %c0_13], %16 {strides = array<i32>} : memref<8x32xf32, #tpu.memory_space<vmem>>, vector<8x32xf32>,
    %c0_i32_14 = arith.constant 0 : i32
    %18 = arith.cmpi eq, %arg1, %c0_i32_14 : i32
    %19 = arith.extui %18 : i1 to i32
    %c0_i32_15 = arith.constant 0 : i32
    %20 = arith.cmpi ne, %19, %c0_i32_15 : i32
    scf.if %20 {
      %c0_16 = arith.constant 0 : index
      %c0_17 = arith.constant 0 : index
      %21 = vector.load %arg10[%c0_16, %c0_17] : memref<8x32xf32, #tpu.memory_space<vmem>>, vector<8x32xf32>
      %22 = arith.addf %3, %21 : vector<8x32xf32>
      %c0_18 = arith.constant 0 : index
      %c0_19 = arith.constant 0 : index
      %23 = vector.load %arg6[%c0_18, %c0_19] : memref<1x32xf32, #tpu.memory_space<vmem>>, vector<1x32xf32>
      %24 = vector.broadcast %23 : vector<1x32xf32> to vector<8x32xf32>
      %25 = arith.addf %22, %24 : vector<8x32xf32>
      %cst_20 = arith.constant dense<0.000000e+00> : vector<8xf32>
      %26 = vector.multi_reduction <add>, %25, %cst_20 [1] : vector<8x32xf32> to vector<8xf32>
      %27 = vector.shape_cast %26 : vector<8xf32> to vector<8x1xf32>
      %cst_21 = arith.constant 3.200000e+01 : f32
      %28 = vector.broadcast %cst_21 : f32 to vector<8x1xf32>
      %29 = arith.divf %27, %28 : vector<8x1xf32>
      %30 = vector.broadcast %29 : vector<8x1xf32> to vector<8x32xf32>
      %31 = arith.subf %25, %30 : vector<8x32xf32>
      %32 = arith.mulf %31, %31 : vector<8x32xf32>
      %cst_22 = arith.constant dense<0.000000e+00> : vector<8xf32>
      %33 = vector.multi_reduction <add>, %32, %cst_22 [1] : vector<8x32xf32> to vector<8xf32>
      %34 = vector.shape_cast %33 : vector<8xf32> to vector<8x1xf32>
      %cst_23 = arith.constant 3.200000e+01 : f32
      %35 = vector.broadcast %cst_23 : f32 to vector<8x1xf32>
      %36 = arith.divf %34, %35 : vector<8x1xf32>
      %37 = vector.broadcast %29 : vector<8x1xf32> to vector<8x32xf32>
      %38 = arith.subf %25, %37 : vector<8x32xf32>
      %cst_24 = arith.constant 9.99999974E-6 : f32
      %39 = vector.broadcast %cst_24 : f32 to vector<8x1xf32>
      %40 = arith.addf %36, %39 : vector<8x1xf32>
      %41 = math.rsqrt %40 : vector<8x1xf32>
      %42 = vector.broadcast %41 : vector<8x1xf32> to vector<8x32xf32>
      %43 = arith.mulf %38, %42 : vector<8x32xf32>
      %c0_25 = arith.constant 0 : index
      %c0_26 = arith.constant 0 : index
      %44 = vector.load %arg7[%c0_25, %c0_26] : memref<1x32xf32, #tpu.memory_space<vmem>>, vector<1x32xf32>
      %45 = vector.broadcast %44 : vector<1x32xf32> to vector<8x32xf32>
      %46 = arith.mulf %43, %45 : vector<8x32xf32>
      %c0_27 = arith.constant 0 : index
      %c0_28 = arith.constant 0 : index
      %47 = vector.load %arg8[%c0_27, %c0_28] : memref<1x32xf32, #tpu.memory_space<vmem>>, vector<1x32xf32>
      %48 = vector.broadcast %47 : vector<1x32xf32> to vector<8x32xf32>
      %49 = arith.addf %46, %48 : vector<8x32xf32>
      %c0_29 = arith.constant 0 : index
      %c0_30 = arith.constant 0 : index
      %50 = vector.load %arg9[%c0_29, %c0_30] : memref<8x32xf32, #tpu.memory_space<vmem>>, vector<8x32xf32>
      tpu.vector_store %arg9[%c0_29, %c0_30], %49 {strides = array<i32>} : memref<8x32xf32, #tpu.memory_space<vmem>>, vector<8x32xf32>,
    } else {
    }
    return
  }
  func.func @transform_0(%arg0: i32, %arg1: i32) -> (i32, i32) {
    %c0_i32 = arith.constant 0 : i32
    %c0_i32_0 = arith.constant 0 : i32
    return %arg0, %c0_i32 : i32, i32
  }
  func.func @transform_1(%arg0: i32, %arg1: i32) -> (i32, i32) {
    %c0_i32 = arith.constant 0 : i32
    %c0_i32_0 = arith.constant 0 : i32
    return %c0_i32, %arg1 : i32, i32
  }
  func.func @transform_2(%arg0: i32, %arg1: i32) -> (i32, i32) {
    %c0_i32 = arith.constant 0 : i32
    %c0_i32_0 = arith.constant 0 : i32
    return %c0_i32, %arg1 : i32, i32
  }
  func.func @transform_3(%arg0: i32, %arg1: i32) -> (i32, i32) {
    %c0_i32 = arith.constant 0 : i32
    %c0_i32_0 = arith.constant 0 : i32
    return %arg1, %c0_i32 : i32, i32
  }
  func.func @transform_4(%arg0: i32, %arg1: i32) -> (i32, i32) {
    %c0_i32 = arith.constant 0 : i32
    %c0_i32_0 = arith.constant 0 : i32
    %c0_i32_1 = arith.constant 0 : i32
    return %c0_i32, %c0_i32_0 : i32, i32
  }
  func.func @transform_5(%arg0: i32, %arg1: i32) -> (i32, i32) {
    %c0_i32 = arith.constant 0 : i32
    %c0_i32_0 = arith.constant 0 : i32
    %c0_i32_1 = arith.constant 0 : i32
    return %c0_i32, %c0_i32_0 : i32, i32
  }
  func.func @transform_6(%arg0: i32, %arg1: i32) -> (i32, i32) {
    %c0_i32 = arith.constant 0 : i32
    %c0_i32_0 = arith.constant 0 : i32
    %c0_i32_1 = arith.constant 0 : i32
    return %c0_i32, %c0_i32_0 : i32, i32
  }
  func.func @transform_7(%arg0: i32, %arg1: i32) -> (i32, i32) {
    %c0_i32 = arith.constant 0 : i32
    %c0_i32_0 = arith.constant 0 : i32
    return %arg0, %c0_i32 : i32, i32
  }
}

module attributes {stable_mosaic.version = 11 : i64} {
  func.func @_matmul_bias_kernel(%arg0: i32, %arg1: i32, %arg2: i32, %arg3: memref<16x32xf32, #tpu.memory_space<vmem>>, %arg4: memref<32x128xbf16, #tpu.memory_space<vmem>>, %arg5: memref<1x128xf32, #tpu.memory_space<vmem>>, %arg6: memref<16x128xf32, #tpu.memory_space<vmem>>, %arg7: memref<16x128xf32, #tpu.memory_space<vmem>>) attributes {dimension_semantics = [#tpu.dimension_semantics<parallel>, #tpu.dimension_semantics<parallel>, #tpu.dimension_semantics<arbitrary>], iteration_bounds = array<i64: 1, 1, 1>, scalar_prefetch = 0 : i64, scratch_operands = 1 : i64, tpu.core_type = #tpu.core_type<tc>, window_params = [{transform_indices = @transform_0, window_bounds = array<i64: 16, 32>}, {transform_indices = @transform_1, window_bounds = array<i64: 32, 128>}, {transform_indices = @transform_2, window_bounds = array<i64: 1, 128>}, {transform_indices = @transform_3, window_bounds = array<i64: 16, 128>}]} {
    %c0_i32 = arith.constant 0 : i32
    %0 = arith.cmpi eq, %arg2, %c0_i32 : i32
    %1 = arith.extui %0 : i1 to i32
    %c0_i32_0 = arith.constant 0 : i32
    %2 = arith.cmpi ne, %1, %c0_i32_0 : i32
    scf.if %2 {
      %cst_10 = arith.constant 0.000000e+00 : f32
      %13 = vector.broadcast %cst_10 : f32 to vector<16x128xf32>
      %c0_11 = arith.constant 0 : index
      %c0_12 = arith.constant 0 : index
      %14 = vector.load %arg7[%c0_11, %c0_12] : memref<16x128xf32, #tpu.memory_space<vmem>>, vector<16x128xf32>
      tpu.vector_store %arg7[%c0_11, %c0_12], %13 {strides = array<i32>} : memref<16x128xf32, #tpu.memory_space<vmem>>, vector<16x128xf32>,
    } else {
    }
    %c0 = arith.constant 0 : index
    %c0_1 = arith.constant 0 : index
    %3 = vector.load %arg7[%c0, %c0_1] : memref<16x128xf32, #tpu.memory_space<vmem>>, vector<16x128xf32>
    %c0_2 = arith.constant 0 : index
    %c0_3 = arith.constant 0 : index
    %4 = vector.load %arg3[%c0_2, %c0_3] : memref<16x32xf32, #tpu.memory_space<vmem>>, vector<16x32xf32>
    %5 = arith.truncf %4 : vector<16x32xf32> to vector<16x32xbf16>
    %c0_4 = arith.constant 0 : index
    %c0_5 = arith.constant 0 : index
    %6 = vector.load %arg4[%c0_4, %c0_5] : memref<32x128xbf16, #tpu.memory_space<vmem>>, vector<32x128xbf16>
    %cst = arith.constant dense<0.000000e+00> : vector<16x128xf32>
    %7 = tpu.matmul %5, %6, %cst {dimension_numbers = #tpu.dot_dimension_numbers<[1], [0], [0], [1], [0, 0, 1, 1], [], []>} : vector<16x32xbf16>, vector<32x128xbf16>, vector<16x128xf32> -> vector<16x128xf32>
    %8 = arith.addf %3, %7 : vector<16x128xf32>
    %c0_6 = arith.constant 0 : index
    %c0_7 = arith.constant 0 : index
    %9 = vector.load %arg7[%c0_6, %c0_7] : memref<16x128xf32, #tpu.memory_space<vmem>>, vector<16x128xf32>
    tpu.vector_store %arg7[%c0_6, %c0_7], %8 {strides = array<i32>} : memref<16x128xf32, #tpu.memory_space<vmem>>, vector<16x128xf32>,
    %c0_i32_8 = arith.constant 0 : i32
    %10 = arith.cmpi eq, %arg2, %c0_i32_8 : i32
    %11 = arith.extui %10 : i1 to i32
    %c0_i32_9 = arith.constant 0 : i32
    %12 = arith.cmpi ne, %11, %c0_i32_9 : i32
    scf.if %12 {
      %c0_10 = arith.constant 0 : index
      %c0_11 = arith.constant 0 : index
      %13 = vector.load %arg7[%c0_10, %c0_11] : memref<16x128xf32, #tpu.memory_space<vmem>>, vector<16x128xf32>
      %c0_12 = arith.constant 0 : index
      %c0_13 = arith.constant 0 : index
      %14 = vector.load %arg5[%c0_12, %c0_13] : memref<1x128xf32, #tpu.memory_space<vmem>>, vector<1x128xf32>
      %15 = vector.broadcast %14 : vector<1x128xf32> to vector<16x128xf32>
      %16 = arith.addf %13, %15 : vector<16x128xf32>
      %c0_14 = arith.constant 0 : index
      %c0_15 = arith.constant 0 : index
      %17 = vector.load %arg6[%c0_14, %c0_15] : memref<16x128xf32, #tpu.memory_space<vmem>>, vector<16x128xf32>
      tpu.vector_store %arg6[%c0_14, %c0_15], %16 {strides = array<i32>} : memref<16x128xf32, #tpu.memory_space<vmem>>, vector<16x128xf32>,
    } else {
    }
    return
  }
  func.func @transform_0(%arg0: i32, %arg1: i32, %arg2: i32) -> (i32, i32) {
    %c0_i32 = arith.constant 0 : i32
    return %arg0, %arg2 : i32, i32
  }
  func.func @transform_1(%arg0: i32, %arg1: i32, %arg2: i32) -> (i32, i32) {
    %c0_i32 = arith.constant 0 : i32
    return %arg2, %arg1 : i32, i32
  }
  func.func @transform_2(%arg0: i32, %arg1: i32, %arg2: i32) -> (i32, i32) {
    %c0_i32 = arith.constant 0 : i32
    %c0_i32_0 = arith.constant 0 : i32
    return %c0_i32, %arg1 : i32, i32
  }
  func.func @transform_3(%arg0: i32, %arg1: i32, %arg2: i32) -> (i32, i32) {
    %c0_i32 = arith.constant 0 : i32
    return %arg0, %arg1 : i32, i32
  }
}

</mosaic_0001>

<llo_original>
// kernel: decoder_forward.9
$region0: #{decoder_forward.9}
  #allocation0 [shape = 'u32[]', space=smem, size = 0x4, offset = 0x4, fixed_abs, tag = 'smem constant byte address 0x4 - core index']
  #allocation1 [shape = 'u32[72,128]{1,0:T(1,128)}', space=vmem, size = 0x9000, scoped, tag = 'internal scratch']
  #allocation2 [shape = 'f32[8,32]{1,0:T(8,128)}', space=vmem, size = 0x1000, scoped, tag = 'scratch operand']
  %s0 = inlined_call_operand.vmem [shape: f32[16,32], index: 0, kind: input, shape index: {}]
  %s1 = inlined_call_operand.vmem [shape: bf16[32,64], index: 1, kind: input, shape index: {}]
  %s2 = inlined_call_operand.vmem [shape: f32[1,64], index: 2, kind: input, shape index: {}]
  %s3 = inlined_call_operand.vmem [shape: bf16[64,32], index: 3, kind: input, shape index: {}]
  %s4 = inlined_call_operand.vmem [shape: f32[1,32], index: 4, kind: input, shape index: {}]
  %s5 = inlined_call_operand.vmem [shape: f32[1,32], index: 5, kind: input, shape index: {}]
  %s6 = inlined_call_operand.vmem [shape: f32[1,32], index: 6, kind: input, shape index: {}]
  %s7 = inlined_call_operand.vmem [shape: f32[16,32], index: 7, kind: output, shape index: {}]
  %s8 = sld [smem:[#allocation0]]
  $region69: #{decoder_forward.9} parent=0
    _
  %s10 = ssub.s32 1, %s8
  %s11 = scalar_select 0, %s10, %s8
  loop: start=0, step=1, limit=4
  $region2: #{decoder_forward.9} parent=0 // loop_pre_header
    _
  $region3: #{decoder_forward.9} parent=0 // loop_header
    %s13 = sphi 0, %s17
    %p14 = scmp.ge.s32.totalorder %s13, 4
    %s20 = sphi 0, %s32
    %s21 = sphi 0, %s28
    %s22 = sphi 0, %s20
    %s23 = sphi 0, %s21
    %s24 = sphi 0, %s22
    %s25 = sphi 0, %s23
    %s35 = sphi 0, %s37
    %s38 = sphi 0, %s35
    %s39 = sphi 0, %s38
    %s55 = sphi 0, %s39
    %s61 = sphi 0, %s63
    %s64 = sphi 0, %s61
    %s65 = sphi 0, %s64
    %s81 = sphi 0, %s65
    %s87 = sphi 0, %s89
    %s90 = sphi 0, %s87
    %s91 = sphi 0, %s90
    %s107 = sphi 0, %s91
    %s113 = sphi 0, %s115
    %s116 = sphi 0, %s113
    %s117 = sphi 0, %s116
    %s133 = sphi 0, %s117
    %s137 = sphi 0, %s137
    %s139 = sphi 0, %s137
    %s140 = sphi 0, %s139
    %s154 = sphi 0, %s140
    %s158 = sphi 0, %s158
    %s160 = sphi 0, %s158
    %s161 = sphi 0, %s160
    %s175 = sphi 0, %s161
    %s179 = sphi 0, %s179
    %s181 = sphi 0, %s179
    %s182 = sphi 0, %s181
    %s196 = sphi 0, %s182
    %s202 = sphi 0, %s204
    %s205 = sphi 0, %s202
    %s206 = sphi 0, %s205
    %s222 = sphi 0, %s206
  $region4: #{decoder_forward.9} parent=0 // loop_header_branch
    %16 = sbr.rel (%p14) target = $region8
  $region5: #{decoder_forward.9} parent=0 // loop_body
    %s18 = ssub.s32 %s13, 1
    %s19 = ssub.s32 %s13, 2
    %s26 = sadd.s32 1, %s21
    %p27 = scmp.ge.s32.totalorder %s26, 1
    %s28 = scalar_select %p27, 0, %s26
    %s29 = sadd.s32 1, %s20
    %s30 = scalar_select %p27, %s29, %s20
    %p31 = scmp.ge.s32.totalorder %s30, 2
    %s32 = scalar_select %p31, 0, %s30
    %s33 = ssub.s32 %s20, %s32
    %p34 = scmp.eq.s32.totalorder %s33, 0
    %s36 = sadd.s32 %s35, 1
    %s37 = scalar_select %p34, %s35, %s36
    %p40 = pneg %p34
    %p41 = scmp.eq.s32.totalorder %s13, 1
    %p42 = por %p40, %p41
    %p43 = scmp.ne.s32.totalorder %s35, %s38
    %p44 = scmp.eq.s32.totalorder %s13, 0
    %p45 = por %p43, %p44
    %p46 = scmp.ne.s32.totalorder %s35, %s38
    %p47 = scmp.eq.s32.totalorder %s18, 1
    %p48 = por %p46, %p47
    %p49 = scmp.ne.s32.totalorder %s38, %s39
    %p50 = scmp.eq.s32.totalorder %s18, 0
    %p51 = por %p49, %p50
    %p52 = scmp.ne.s32.totalorder %s38, %s39
    %p53 = scmp.eq.s32.totalorder %s19, 1
    %p54 = por %p52, %p53
    %p56 = scmp.ne.s32.totalorder %s39, %s55
    %p57 = scmp.eq.s32.totalorder %s19, 0
    %p58 = por %p56, %p57
    %s59 = ssub.s32 %s21, %s28
    %p60 = scmp.eq.s32.totalorder %s59, 0
    %s62 = sadd.s32 %s61, 1
    %s63 = scalar_select %p60, %s61, %s62
    %p66 = pneg %p60
    %p67 = scmp.eq.s32.totalorder %s13, 1
    %p68 = por %p66, %p67
    %p69 = scmp.ne.s32.totalorder %s61, %s64
    %p70 = scmp.eq.s32.totalorder %s13, 0
    %p71 = por %p69, %p70
    %p72 = scmp.ne.s32.totalorder %s61, %s64
    %p73 = scmp.eq.s32.totalorder %s18, 1
    %p74 = por %p72, %p73
    %p75 = scmp.ne.s32.totalorder %s64, %s65
    %p76 = scmp.eq.s32.totalorder %s18, 0
    %p77 = por %p75, %p76
    %p78 = scmp.ne.s32.totalorder %s64, %s65
    %p79 = scmp.eq.s32.totalorder %s19, 1
    %p80 = por %p78, %p79
    %p82 = scmp.ne.s32.totalorder %s65, %s81
    %p83 = scmp.eq.s32.totalorder %s19, 0
    %p84 = por %p82, %p83
    %s85 = ssub.s32 %s21, %s28
    %p86 = scmp.eq.s32.totalorder %s85, 0
    %s88 = sadd.s32 %s87, 1
    %s89 = scalar_select %p86, %s87, %s88
    %p92 = pneg %p86
    %p93 = scmp.eq.s32.totalorder %s13, 1
    %p94 = por %p92, %p93
    %p95 = scmp.ne.s32.totalorder %s87, %s90
    %p96 = scmp.eq.s32.totalorder %s13, 0
    %p97 = por %p95, %p96
    %p98 = scmp.ne.s32.totalorder %s87, %s90
    %p99 = scmp.eq.s32.totalorder %s18, 1
    %p100 = por %p98, %p99
    %p101 = scmp.ne.s32.totalorder %s90, %s91
    %p102 = scmp.eq.s32.totalorder %s18, 0
    %p103 = por %p101, %p102
    %p104 = scmp.ne.s32.totalorder %s90, %s91
    %p105 = scmp.eq.s32.totalorder %s19, 1
    %p106 = por %p104, %p105
    %p108 = scmp.ne.s32.totalorder %s91, %s107
    %p109 = scmp.eq.s32.totalorder %s19, 0
    %p110 = por %p108, %p109
    %s111 = ssub.s32 %s21, %s28
    %p112 = scmp.eq.s32.totalorder %s111, 0
    %s114 = sadd.s32 %s113, 1
    %s115 = scalar_select %p112, %s113, %s114
    %p118 = pneg %p112
    %p119 = scmp.eq.s32.totalorder %s13, 1
    %p120 = por %p118, %p119
    %p121 = scmp.ne.s32.totalorder %s113, %s116
    %p122 = scmp.eq.s32.totalorder %s13, 0
    %p123 = por %p121, %p122
    %p124 = scmp.ne.s32.totalorder %s113, %s116
    %p125 = scmp.eq.s32.totalorder %s18, 1
    %p126 = por %p124, %p125
    %p127 = scmp.ne.s32.totalorder %s116, %s117
    %p128 = scmp.eq.s32.totalorder %s18, 0
    %p129 = por %p127, %p128
    %p130 = scmp.ne.s32.totalorder %s116, %s117
    %p131 = scmp.eq.s32.totalorder %s19, 1
    %p132 = por %p130, %p131
    %p134 = scmp.ne.s32.totalorder %s117, %s133
    %p135 = scmp.eq.s32.totalorder %s19, 0
    %p136 = por %p134, %p135
    %s138 = sadd.s32 %s137, 1
    %p141 = scmp.eq.s32.totalorder %s13, 1
    %p142 = scmp.ne.s32.totalorder %s137, %s139
    %p143 = scmp.eq.s32.totalorder %s13, 0
    %p144 = por %p142, %p143
    %p145 = scmp.ne.s32.totalorder %s137, %s139
    %p146 = scmp.eq.s32.totalorder %s18, 1
    %p147 = por %p145, %p146
    %p148 = scmp.ne.s32.totalorder %s139, %s140
    %p149 = scmp.eq.s32.totalorder %s18, 0
    %p150 = por %p148, %p149
    %p151 = scmp.ne.s32.totalorder %s139, %s140
    %p152 = scmp.eq.s32.totalorder %s19, 1
    %p153 = por %p151, %p152
    %p155 = scmp.ne.s32.totalorder %s140, %s154
    %p156 = scmp.eq.s32.totalorder %s19, 0
    %p157 = por %p155, %p156
    %s159 = sadd.s32 %s158, 1
    %p162 = scmp.eq.s32.totalorder %s13, 1
    %p163 = scmp.ne.s32.totalorder %s158, %s160
    %p164 = scmp.eq.s32.totalorder %s13, 0
    %p165 = por %p163, %p164
    %p166 = scmp.ne.s32.totalorder %s158, %s160
    %p167 = scmp.eq.s32.totalorder %s18, 1
    %p168 = por %p166, %p167
    %p169 = scmp.ne.s32.totalorder %s160, %s161
    %p170 = scmp.eq.s32.totalorder %s18, 0
    %p171 = por %p169, %p170
    %p172 = scmp.ne.s32.totalorder %s160, %s161
    %p173 = scmp.eq.s32.totalorder %s19, 1
    %p174 = por %p172, %p173
    %p176 = scmp.ne.s32.totalorder %s161, %s175
    %p177 = scmp.eq.s32.totalorder %s19, 0
    %p178 = por %p176, %p177
    %s180 = sadd.s32 %s179, 1
    %p183 = scmp.eq.s32.totalorder %s13, 1
    %p184 = scmp.ne.s32.totalorder %s179, %s181
    %p185 = scmp.eq.s32.totalorder %s13, 0
    %p186 = por %p184, %p185
    %p187 = scmp.ne.s32.totalorder %s179, %s181
    %p188 = scmp.eq.s32.totalorder %s18, 1
    %p189 = por %p187, %p188
    %p190 = scmp.ne.s32.totalorder %s181, %s182
    %p191 = scmp.eq.s32.totalorder %s18, 0
    %p192 = por %p190, %p191
    %p193 = scmp.ne.s32.totalorder %s181, %s182
    %p194 = scmp.eq.s32.totalorder %s19, 1
    %p195 = por %p193, %p194
    %p197 = scmp.ne.s32.totalorder %s182, %s196
    %p198 = scmp.eq.s32.totalorder %s19, 0
    %p199 = por %p197, %p198
    %s200 = ssub.s32 %s20, %s32
    %p201 = scmp.eq.s32.totalorder %s200, 0
    %s203 = sadd.s32 %s202, 1
    %s204 = scalar_select %p201, %s202, %s203
    %p207 = pneg %p201
    %p208 = scmp.eq.s32.totalorder %s13, 1
    %p209 = por %p207, %p208
    %p210 = scmp.ne.s32.totalorder %s202, %s205
    %p211 = scmp.eq.s32.totalorder %s13, 0
    %p212 = por %p210, %p211
    %p213 = scmp.ne.s32.totalorder %s202, %s205
    %p214 = scmp.eq.s32.totalorder %s18, 1
    %p215 = por %p213, %p214
    %p216 = scmp.ne.s32.totalorder %s205, %s206
    %p217 = scmp.eq.s32.totalorder %s18, 0
    %p218 = por %p216, %p217
    %p219 = scmp.ne.s32.totalorder %s205, %s206
    %p220 = scmp.eq.s32.totalorder %s19, 1
    %p221 = por %p219, %p220
    %p223 = scmp.ne.s32.totalorder %s206, %s222
    %p224 = scmp.eq.s32.totalorder %s19, 0
    %p225 = por %p223, %p224
    %p226 = scmp.le.s32.totalorder 1, %s13
    %p227 = scmp.lt.s32.totalorder %s13, 3
    %p228 = pnand %p226, %p227
    %p229 = pneg %p228
    // Predicated region
    $region9: #{decoder_forward.9} parent=5 // pred_check
      _
    $region10: #{decoder_forward.9} parent=5 // pred_check_branch
      %231 = sbr.rel (%p228) target = $region12
    $region11: #{decoder_forward.9} parent=5 // pred_region
      %s232 = ssub.s32 %s13, 1
      // Predicated region
      $region13: #{decoder_forward.9} parent=11 // pred_check
        %p233 = pneg %p77
      $region14: #{decoder_forward.9} parent=11 // pred_check_branch
        %235 = sbr.rel (%p233) target = $region16
      $region15: #{decoder_forward.9} parent=11 // pred_region
        %p236 = scmp.lt.s32.totalorder %s23, 0
        %s237 = scalar_select %p236, %s23, 0
        %s238 = smul.addr %s237, 4
        %s239 = scalar_lea.vmem %s1, %s238
      $region16: #{decoder_forward.9} parent=11 // pred_fallthru
        _
      // Predicated region
      $region17: #{decoder_forward.9} parent=11 // pred_check
        %p240 = pneg %p103
      $region18: #{decoder_forward.9} parent=11 // pred_check_branch
        %242 = sbr.rel (%p240) target = $region20
      $region19: #{decoder_forward.9} parent=11 // pred_region
        %p243 = scmp.lt.s32.totalorder %s23, 0
        %s244 = scalar_select %p243, %s23, 0
        %s245 = scalar_lea.vmem %s2, %s244
      $region20: #{decoder_forward.9} parent=11 // pred_fallthru
        _
      // Predicated region
      $region21: #{decoder_forward.9} parent=11 // pred_check
        %p246 = pneg %p129
      $region22: #{decoder_forward.9} parent=11 // pred_check_branch
        %248 = sbr.rel (%p246) target = $region24
      $region23: #{decoder_forward.9} parent=11 // pred_region
        %s249 = smul.u32 8, %s23
        %p250 = scmp.lt.s32.totalorder %s249, 7
        %s251 = scalar_select %p250, %s249, 7
        %s252 = smul.addr %s251, 4
        %s253 = scalar_lea.vmem %s3, %s252
        %s254 = smul.u32 8, %s23
      $region24: #{decoder_forward.9} parent=11 // pred_fallthru
        _
      // Predicated region
      $region25: #{decoder_forward.9} parent=11 // pred_check
        %p255 = pneg %p150
      $region26: #{decoder_forward.9} parent=11 // pred_check_branch
        %257 = sbr.rel (%p255) target = $region28
      $region27: #{decoder_forward.9} parent=11 // pred_region
        _
      $region28: #{decoder_forward.9} parent=11 // pred_fallthru
        _
      // Predicated region
      $region29: #{decoder_forward.9} parent=11 // pred_check
        %p258 = pneg %p171
      $region30: #{decoder_forward.9} parent=11 // pred_check_branch
        %260 = sbr.rel (%p258) target = $region32
      $region31: #{decoder_forward.9} parent=11 // pred_region
        _
      $region32: #{decoder_forward.9} parent=11 // pred_fallthru
        _
      // Predicated region
      $region33: #{decoder_forward.9} parent=11 // pred_check
        %p261 = pneg %p192
      $region34: #{decoder_forward.9} parent=11 // pred_check_branch
        %263 = sbr.rel (%p261) target = $region36
      $region35: #{decoder_forward.9} parent=11 // pred_region
        _
      $region36: #{decoder_forward.9} parent=11 // pred_fallthru
        _
    $region12: #{decoder_forward.9} parent=5 // pred_fallthru
      _
    %p264 = scmp.lt.s32.totalorder %s13, 2
    // Predicated region
    $region37: #{decoder_forward.9} parent=5 // pred_check
      %p265 = pneg %p264
    $region38: #{decoder_forward.9} parent=5 // pred_check_branch
      %267 = sbr.rel (%p265) target = $region40
    $region39: #{decoder_forward.9} parent=5 // pred_region
      // Predicated region
      $region41: #{decoder_forward.9} parent=39 // pred_check
        %p268 = pneg %p45
      $region42: #{decoder_forward.9} parent=39 // pred_check_branch
        %270 = sbr.rel (%p268) target = $region44
      $region43: #{decoder_forward.9} parent=39 // pred_region
        %p271 = scmp.lt.s32.totalorder %s20, 1
        %s272 = scalar_select %p271, %s20, 1
        %s273 = smul.addr %s272, 8
        %s274 = scalar_lea.vmem %s0, %s273
      $region44: #{decoder_forward.9} parent=39 // pred_fallthru
        _
    $region40: #{decoder_forward.9} parent=5 // pred_fallthru
      _
    %p275 = scmp.le.s32.totalorder 1, %s13
    %p276 = scmp.lt.s32.totalorder %s13, 3
    %p277 = pnand %p275, %p276
    %p278 = pneg %p277
    // Predicated region
    $region45: #{decoder_forward.9} parent=5 // pred_check
      _
    $region46: #{decoder_forward.9} parent=5 // pred_check_branch
      %280 = sbr.rel (%p277) target = $region48
    $region47: #{decoder_forward.9} parent=5 // pred_region
      %s281 = ssub.s32 %s13, 1
      %p282 = scmp.lt.s32.totalorder %s22, 1
      %s283 = scalar_select %p282, %s22, 1
      %s284 = smul.addr %s283, 8
      %s285 = scalar_lea.vmem %s0, %s284
      %p286 = pneg %p51
      %p287 = pneg %p48
      %p288 = scmp.lt.s32.totalorder %s23, 0
      %s289 = scalar_select %p288, %s23, 0
      %s290 = smul.addr %s289, 4
      %s291 = scalar_lea.vmem %s1, %s290
      %p292 = pneg %p77
      %p293 = pneg %p74
      %p294 = scmp.lt.s32.totalorder %s23, 0
      %s295 = scalar_select %p294, %s23, 0
      %s296 = scalar_lea.vmem %s2, %s295
      %p297 = pneg %p103
      %p298 = pneg %p100
      %s299 = smul.u32 8, %s23
      %p300 = scmp.lt.s32.totalorder %s299, 7
      %s301 = scalar_select %p300, %s299, 7
      %s302 = smul.addr %s301, 4
      %s303 = scalar_lea.vmem %s3, %s302
      %p304 = pneg %p129
      %p305 = pneg %p126
      %p306 = pneg %p150
      %p307 = pneg %p147
      %p308 = pneg %p171
      %p309 = pneg %p168
      %p310 = pneg %p192
      %p311 = pneg %p189
      %p312 = pneg %p218
      %p313 = pneg %p215
      %p314 = scmp.lt.s32.totalorder %s22, 1
      %s315 = scalar_select %p314, %s22, 1
      %s316 = smul.addr %s315, 8
      %s317 = scalar_lea.vmem %s7, %s316
      %p318 = scmp.lt.s32.totalorder %s22, 1
      %s319 = scalar_select %p318, %s22, 1
      %s320 = smul.addr %s319, 8
      %s321 = scalar_lea.vmem %s0, %s320
      %p322 = scmp.lt.s32.totalorder %s23, 0
      %s323 = scalar_select %p322, %s23, 0
      %s324 = smul.addr %s323, 4
      %s325 = scalar_lea.vmem %s1, %s324
      %p326 = scmp.lt.s32.totalorder %s23, 0
      %s327 = scalar_select %p326, %s23, 0
      %s328 = scalar_lea.vmem %s2, %s327
      %s329 = smul.u32 8, %s23
      %p330 = scmp.lt.s32.totalorder %s329, 7
      %s331 = scalar_select %p330, %s329, 7
      %s332 = smul.addr %s331, 4
      %s333 = scalar_lea.vmem %s3, %s332
      %s334 = smul.u32 8, %s23
      %p335 = scmp.lt.s32.totalorder %s22, 1
      %s336 = scalar_select %p335, %s22, 1
      %s337 = smul.addr %s336, 8
      %s338 = scalar_lea.vmem %s7, %s337
      %p340 = scmp.eq.s32.totalorder %s23, 0
      // Predicated region
      $region49: #{decoder_forward.9} parent=47 // pred_check
        %p341 = pneg %p340
      $region50: #{decoder_forward.9} parent=47 // pred_check_branch
        %343 = sbr.rel (%p341) target = $region52
      $region51: #{decoder_forward.9} parent=47 // pred_region
        %vm344 = vcmask 261120
        %345 = vst.msk [vmem:[#allocation2] sm:$0xff] %vm344, 0.0
      $region52: #{decoder_forward.9} parent=47 // pred_fallthru
        _
      %v346 = vld [vmem:[%s321] sm:$0xff]
      %v347 = vpack.c.bf16 %v346, %v346
      %v348 = vld [vmem:[%s325] sm:$0xf]
      %v349 = vld [vmem:[%s325 + $0x4] sm:$0xf]
      %v350 = vld [vmem:[%s325 + $0x8] sm:$0xf]
      %v351 = vld [vmem:[%s325 + $0xc] sm:$0xf]
      %v352 = vld [vmem:[%s328] sm:$0x1]
      %v354 = vperm.slane %v352, 0
      %v360 = vunpack.c.l.b16 %v348
      %v361 = vunpack.c.l.b16 %v349
      %v362 = vunpack.c.l.b16 %v350
      %v363 = vunpack.c.l.b16 %v351
      %v364 = vpack.c.b16 %v361, %v360
      %v365 = vpack.c.b16 %v363, %v362
      %vm368 = vcmask 261120
      %v370 = vsel %vm368, %v347, 0
      %372 = vmatpush.bf16.msra.mxu0 0
      %373 = vmatpush.bf16.msra.mxu0 0
      %374 = vmatpush.bf16.msra.mxu0 0
      %375 = vmatpush.bf16.msra.mxu0 0
      %376 = vmatpush.bf16.msra.mxu0 0
      %377 = vmatpush.bf16.msra.mxu0 0
      %378 = vmatpush.bf16.msra.mxu0 %v365
      %379 = vmatpush.bf16.msra.mxu0 %v364
      %380 = vmatmul.bf16.gmra.mxu0 %v370
      %v381 = vpop.f32.mrf.mxu0
      %v382 = vadd.f32 %v354, %v381
      %v383 = vpop.f32.mrf.mxu0
      %384 = vdwg.mxu0
      %v385 = vmax.f32 %v382, 0.0
      %v386 = vld [vmem:[#allocation2] sm:$0xff]
      %v387 = vpack.c.bf16 %v385, %v385
      %v388 = vld [vmem:[%s333] sm:$0xf]
      %v389 = vld [vmem:[%s333 + $0x4] sm:$0xf]
      %v390 = vld [vmem:[%s333 + $0x8] sm:$0xf]
      %v391 = vld [vmem:[%s333 + $0xc] sm:$0xf]
      %v392 = vld [vmem:[%s333 + $0x10] sm:$0xf]
      %v393 = vld [vmem:[%s333 + $0x14] sm:$0xf]
      %v394 = vld [vmem:[%s333 + $0x18] sm:$0xf]
      %v395 = vld [vmem:[%s333 + $0x1c] sm:$0xf]
      %v404 = vunpack.c.l.b16 %v388
      %v405 = vunpack.c.l.b16 %v389
      %v406 = vunpack.c.l.b16 %v390
      %v407 = vunpack.c.l.b16 %v391
      %v408 = vunpack.c.l.b16 %v392
      %v409 = vunpack.c.l.b16 %v393
      %v410 = vunpack.c.l.b16 %v394
      %v411 = vunpack.c.l.b16 %v395
      %v412 = vpack.c.b16 %v405, %v404
      %v413 = vpack.c.b16 %v407, %v406
      %v414 = vpack.c.b16 %v409, %v408
      %v415 = vpack.c.b16 %v411, %v410
      %vm420 = vcmask 523264
      %v422 = vsel %vm420, %v387, 0
      %424 = vmatpush.bf16.msra.mxu0 0
      %425 = vmatpush.bf16.msra.mxu0 0
      %426 = vmatpush.bf16.msra.mxu0 0
      %427 = vmatpush.bf16.msra.mxu0 0
      %428 = vmatpush.bf16.msra.mxu0 %v415
      %429 = vmatpush.bf16.msra.mxu0 %v414
      %430 = vmatpush.bf16.msra.mxu0 %v413
      %431 = vmatpush.bf16.msra.mxu0 %v412
      %432 = vmatmul.bf16.gmra.mxu0 %v422
      %v433 = vpop.f32.mrf.mxu0
      %v434 = vadd.f32 0.0, %v433
      %v435 = vpop.f32.mrf.mxu0
      %436 = vdwg.mxu0
      %v437 = vadd.f32 %v386, %v434
      %438 = vst.msk [vmem:[#allocation2] sm:$0xff] %vm368, %v437
      // Predicated region
      $region53: #{decoder_forward.9} parent=47 // pred_check
        %p439 = pneg %p340
      $region54: #{decoder_forward.9} parent=47 // pred_check_branch
        %441 = sbr.rel (%p439) target = $region56
      $region55: #{decoder_forward.9} parent=47 // pred_region
        %v442 = vld [vmem:[#allocation2] sm:$0xff]
        %v443 = vadd.f32 %v346, %v442
        %v444 = vld [vmem:[%s4] sm:$0x1]
        %v446 = vperm.slane %v444, 0
        %v448 = vadd.f32 %v443, %v446
        %v449 = vsel %vm368, %v448, 0.0
        %450 = vadd.xlane.f32.xlu0 %v449
        %v451 = vpop.xlane.xlu0 %450
        %v452 = vrcp.pop 32.0
        %v453 = vmul.f32 32.0, %v452
        %v454 = vsub.f32 1.0, %v453
        %v455 = vmul.f32 %v452, %v454
        %v456 = vadd.f32 %v452, %v455
        %vm457 = vweird.f32 %v452
        %v458 = vsel %vm457, %v452, %v456
        %v459 = vmul.f32 %v451, %v458
        %v460 = vsub.f32 %v448, %v459
        %v461 = vmul.f32 %v460, %v460
        %v462 = vsel %vm368, %v461, 0.0
        %463 = vadd.xlane.f32.xlu0 %v462
        %v464 = vpop.xlane.xlu0 %463
        %v465 = vmul.f32 %v464, %v458
        %v466 = vadd.f32 %v465, 1e-05
        %v467 = vrsqrt.pop %v466
        %v468 = vmul.f32 %v467, %v466
        %v469 = vmul.f32 %v468, %v467
        %v470 = vmul.f32 0.5, %v469
        %v471 = vsub.f32 1.5, %v470
        %v472 = vmul.f32 %v467, %v471
        %vm473 = vweird.f32 %v466
        %vm474 = vweird.f32 %v467
        %vm475 = vmor %vm473, %vm474
        %v476 = vsel %vm475, %v467, %v472
        %v477 = vmul.f32 %v460, %v476
        %v478 = vld [vmem:[%s5] sm:$0x1]
        %v480 = vperm.slane %v478, 0
        %v482 = vmul.f32 %v477, %v480
        %v483 = vld [vmem:[%s6] sm:$0x1]
        %v485 = vperm.slane %v483, 0
        %v487 = vadd.f32 %v482, %v485
        %488 = vst.msk [vmem:[%s338] sm:$0xff] %vm368, %v487
      $region56: #{decoder_forward.9} parent=47 // pred_fallthru
        _
      %p489 = scmp.lt.s32.totalorder %s22, 1
      %s490 = scalar_select %p489, %s22, 1
      %s491 = smul.addr %s490, 8
      %s492 = scalar_lea.vmem %s7, %s491
      // Predicated region
      $region57: #{decoder_forward.9} parent=47 // pred_check
        %p493 = pneg %p215
      $region58: #{decoder_forward.9} parent=47 // pred_check_branch
        %495 = sbr.rel (%p493) target = $region60
      $region59: #{decoder_forward.9} parent=47 // pred_region
        _
      $region60: #{decoder_forward.9} parent=47 // pred_fallthru
        _
    $region48: #{decoder_forward.9} parent=5 // pred_fallthru
      _
    %p496 = scmp.le.s32.totalorder 2, %s13
    // Predicated region
    $region61: #{decoder_forward.9} parent=5 // pred_check
      %p497 = pneg %p496
    $region62: #{decoder_forward.9} parent=5 // pred_check_branch
      %499 = sbr.rel (%p497) target = $region64
    $region63: #{decoder_forward.9} parent=5 // pred_region
      %s500 = ssub.s32 %s13, 2
      // Predicated region
      $region65: #{decoder_forward.9} parent=63 // pred_check
        %p501 = pneg %p221
      $region66: #{decoder_forward.9} parent=63 // pred_check_branch
        %503 = sbr.rel (%p501) target = $region68
      $region67: #{decoder_forward.9} parent=63 // pred_region
        %p504 = scmp.lt.s32.totalorder %s24, 1
        %s505 = scalar_select %p504, %s24, 1
        %s506 = smul.addr %s505, 8
        %s507 = scalar_lea.vmem %s7, %s506
      $region68: #{decoder_forward.9} parent=63 // pred_fallthru
        _
    $region64: #{decoder_forward.9} parent=5 // pred_fallthru
      _
  $region6: #{decoder_forward.9} parent=0 // loop_footer
    %s17 = sadd.s32 1, %s13
  $region7: #{decoder_forward.9} parent=0 // loop_footer_branch
    %12 = sbr.rel target = $region3
  $region8: #{decoder_forward.9} parent=0 // loop_exit
    _

// kernel: decoder_forward.7
$region0: #{decoder_forward.7}
  #allocation0 [shape = 'u32[]', space=smem, size = 0x4, offset = 0x4, fixed_abs, tag = 'smem constant byte address 0x4 - core index']
  #allocation1 [shape = 'u32[72,128]{1,0:T(1,128)}', space=vmem, size = 0x9000, scoped, tag = 'internal scratch']
  #allocation2 [shape = 'f32[8,32]{1,0:T(8,128)}', space=vmem, size = 0x1000, scoped, tag = 'scratch operand']
  %s0 = inlined_call_operand.vmem [shape: f32[2,8,32], index: 0, kind: input, shape index: {}, may-alias: {0,1}]
  %s1 = inlined_call_operand.vmem [shape: f32[2,8,32], index: 1, kind: input, shape index: {}, may-alias: {0,1}]
  %s2 = inlined_call_operand.vmem [shape: f32[2,1,8], index: 2, kind: input, shape index: {}]
  %s3 = inlined_call_operand.vmem [shape: bf16[32,32], index: 3, kind: input, shape index: {}]
  %s4 = inlined_call_operand.vmem [shape: f32[1,32], index: 4, kind: input, shape index: {}]
  %s5 = inlined_call_operand.vmem [shape: bf16[32,64], index: 5, kind: input, shape index: {}]
  %s6 = inlined_call_operand.vmem [shape: f32[1,64], index: 6, kind: input, shape index: {}]
  %s7 = inlined_call_operand.vmem [shape: bf16[32,32], index: 7, kind: input, shape index: {}]
  %s8 = inlined_call_operand.vmem [shape: f32[1,32], index: 8, kind: input, shape index: {}]
  %s9 = inlined_call_operand.vmem [shape: f32[1,32], index: 9, kind: input, shape index: {}]
  %s10 = inlined_call_operand.vmem [shape: f32[1,32], index: 10, kind: input, shape index: {}]
  %s11 = inlined_call_operand.vmem [shape: f32[2,8,32], index: 11, kind: output, shape index: {}]
  %s12 = sld [smem:[#allocation0]]
  $region77: #{decoder_forward.7} parent=0
    _
  %s14 = ssub.s32 1, %s12
  %s15 = scalar_select 0, %s14, %s12
  loop: start=0, step=1, limit=4
  $region2: #{decoder_forward.7} parent=0 // loop_pre_header
    _
  $region3: #{decoder_forward.7} parent=0 // loop_header
    %s17 = sphi 0, %s21
    %p18 = scmp.ge.s32.totalorder %s17, 4
    %s24 = sphi 0, %s36
    %s25 = sphi 0, %s32
    %s26 = sphi 0, %s24
    %s27 = sphi 0, %s25
    %s28 = sphi 0, %s26
    %s29 = sphi 0, %s27
    %s41 = sphi 0, %s43
    %s44 = sphi 0, %s41
    %s45 = sphi 0, %s44
    %s61 = sphi 0, %s45
    %s67 = sphi 0, %s69
    %s70 = sphi 0, %s67
    %s71 = sphi 0, %s70
    %s87 = sphi 0, %s71
    %s93 = sphi 0, %s95
    %s96 = sphi 0, %s93
    %s97 = sphi 0, %s96
    %s113 = sphi 0, %s97
    %s117 = sphi 0, %s117
    %s119 = sphi 0, %s117
    %s120 = sphi 0, %s119
    %s134 = sphi 0, %s120
    %s138 = sphi 0, %s138
    %s140 = sphi 0, %s138
    %s141 = sphi 0, %s140
    %s155 = sphi 0, %s141
    %s159 = sphi 0, %s159
    %s161 = sphi 0, %s159
    %s162 = sphi 0, %s161
    %s176 = sphi 0, %s162
    %s180 = sphi 0, %s180
    %s182 = sphi 0, %s180
    %s183 = sphi 0, %s182
    %s197 = sphi 0, %s183
    %s201 = sphi 0, %s201
    %s203 = sphi 0, %s201
    %s204 = sphi 0, %s203
    %s218 = sphi 0, %s204
    %s222 = sphi 0, %s222
    %s224 = sphi 0, %s222
    %s225 = sphi 0, %s224
    %s239 = sphi 0, %s225
    %s243 = sphi 0, %s243
    %s245 = sphi 0, %s243
    %s246 = sphi 0, %s245
    %s260 = sphi 0, %s246
    %s264 = sphi 0, %s264
    %s266 = sphi 0, %s264
    %s267 = sphi 0, %s266
    %s281 = sphi 0, %s267
    %s289 = sphi 0, %s291
    %s292 = sphi 0, %s289
    %s293 = sphi 0, %s292
    %s309 = sphi 0, %s293
  $region4: #{decoder_forward.7} parent=0 // loop_header_branch
    %20 = sbr.rel (%p18) target = $region8
  $region5: #{decoder_forward.7} parent=0 // loop_body
    %s22 = ssub.s32 %s17, 1
    %s23 = ssub.s32 %s17, 2
    %s30 = sadd.s32 1, %s25
    %p31 = scmp.ge.s32.totalorder %s30, 1
    %s32 = scalar_select %p31, 0, %s30
    %s33 = sadd.s32 1, %s24
    %s34 = scalar_select %p31, %s33, %s24
    %p35 = scmp.ge.s32.totalorder %s34, 2
    %s36 = scalar_select %p35, 0, %s34
    %s37 = ssub.s32 %s24, %s36
    %s38 = ssub.s32 %s25, %s32
    %s39 = sor.u32 %s37, %s38
    %p40 = scmp.eq.s32.totalorder %s39, 0
    %s42 = sadd.s32 %s41, 1
    %s43 = scalar_select %p40, %s41, %s42
    %p46 = pneg %p40
    %p47 = scmp.eq.s32.totalorder %s17, 1
    %p48 = por %p46, %p47
    %p49 = scmp.ne.s32.totalorder %s41, %s44
    %p50 = scmp.eq.s32.totalorder %s17, 0
    %p51 = por %p49, %p50
    %p52 = scmp.ne.s32.totalorder %s41, %s44
    %p53 = scmp.eq.s32.totalorder %s22, 1
    %p54 = por %p52, %p53
    %p55 = scmp.ne.s32.totalorder %s44, %s45
    %p56 = scmp.eq.s32.totalorder %s22, 0
    %p57 = por %p55, %p56
    %p58 = scmp.ne.s32.totalorder %s44, %s45
    %p59 = scmp.eq.s32.totalorder %s23, 1
    %p60 = por %p58, %p59
    %p62 = scmp.ne.s32.totalorder %s45, %s61
    %p63 = scmp.eq.s32.totalorder %s23, 0
    %p64 = por %p62, %p63
    %s65 = ssub.s32 %s24, %s36
    %p66 = scmp.eq.s32.totalorder %s65, 0
    %s68 = sadd.s32 %s67, 1
    %s69 = scalar_select %p66, %s67, %s68
    %p72 = pneg %p66
    %p73 = scmp.eq.s32.totalorder %s17, 1
    %p74 = por %p72, %p73
    %p75 = scmp.ne.s32.totalorder %s67, %s70
    %p76 = scmp.eq.s32.totalorder %s17, 0
    %p77 = por %p75, %p76
    %p78 = scmp.ne.s32.totalorder %s67, %s70
    %p79 = scmp.eq.s32.totalorder %s22, 1
    %p80 = por %p78, %p79
    %p81 = scmp.ne.s32.totalorder %s70, %s71
    %p82 = scmp.eq.s32.totalorder %s22, 0
    %p83 = por %p81, %p82
    %p84 = scmp.ne.s32.totalorder %s70, %s71
    %p85 = scmp.eq.s32.totalorder %s23, 1
    %p86 = por %p84, %p85
    %p88 = scmp.ne.s32.totalorder %s71, %s87
    %p89 = scmp.eq.s32.totalorder %s23, 0
    %p90 = por %p88, %p89
    %s91 = ssub.s32 %s24, %s36
    %p92 = scmp.eq.s32.totalorder %s91, 0
    %s94 = sadd.s32 %s93, 1
    %s95 = scalar_select %p92, %s93, %s94
    %p98 = pneg %p92
    %p99 = scmp.eq.s32.totalorder %s17, 1
    %p100 = por %p98, %p99
    %p101 = scmp.ne.s32.totalorder %s93, %s96
    %p102 = scmp.eq.s32.totalorder %s17, 0
    %p103 = por %p101, %p102
    %p104 = scmp.ne.s32.totalorder %s93, %s96
    %p105 = scmp.eq.s32.totalorder %s22, 1
    %p106 = por %p104, %p105
    %p107 = scmp.ne.s32.totalorder %s96, %s97
    %p108 = scmp.eq.s32.totalorder %s22, 0
    %p109 = por %p107, %p108
    %p110 = scmp.ne.s32.totalorder %s96, %s97
    %p111 = scmp.eq.s32.totalorder %s23, 1
    %p112 = por %p110, %p111
    %p114 = scmp.ne.s32.totalorder %s97, %s113
    %p115 = scmp.eq.s32.totalorder %s23, 0
    %p116 = por %p114, %p115
    %s118 = sadd.s32 %s117, 1
    %p121 = scmp.eq.s32.totalorder %s17, 1
    %p122 = scmp.ne.s32.totalorder %s117, %s119
    %p123 = scmp.eq.s32.totalorder %s17, 0
    %p124 = por %p122, %p123
    %p125 = scmp.ne.s32.totalorder %s117, %s119
    %p126 = scmp.eq.s32.totalorder %s22, 1
    %p127 = por %p125, %p126
    %p128 = scmp.ne.s32.totalorder %s119, %s120
    %p129 = scmp.eq.s32.totalorder %s22, 0
    %p130 = por %p128, %p129
    %p131 = scmp.ne.s32.totalorder %s119, %s120
    %p132 = scmp.eq.s32.totalorder %s23, 1
    %p133 = por %p131, %p132
    %p135 = scmp.ne.s32.totalorder %s120, %s134
    %p136 = scmp.eq.s32.totalorder %s23, 0
    %p137 = por %p135, %p136
    %s139 = sadd.s32 %s138, 1
    %p142 = scmp.eq.s32.totalorder %s17, 1
    %p143 = scmp.ne.s32.totalorder %s138, %s140
    %p144 = scmp.eq.s32.totalorder %s17, 0
    %p145 = por %p143, %p144
    %p146 = scmp.ne.s32.totalorder %s138, %s140
    %p147 = scmp.eq.s32.totalorder %s22, 1
    %p148 = por %p146, %p147
    %p149 = scmp.ne.s32.totalorder %s140, %s141
    %p150 = scmp.eq.s32.totalorder %s22, 0
    %p151 = por %p149, %p150
    %p152 = scmp.ne.s32.totalorder %s140, %s141
    %p153 = scmp.eq.s32.totalorder %s23, 1
    %p154 = por %p152, %p153
    %p156 = scmp.ne.s32.totalorder %s141, %s155
    %p157 = scmp.eq.s32.totalorder %s23, 0
    %p158 = por %p156, %p157
    %s160 = sadd.s32 %s159, 1
    %p163 = scmp.eq.s32.totalorder %s17, 1
    %p164 = scmp.ne.s32.totalorder %s159, %s161
    %p165 = scmp.eq.s32.totalorder %s17, 0
    %p166 = por %p164, %p165
    %p167 = scmp.ne.s32.totalorder %s159, %s161
    %p168 = scmp.eq.s32.totalorder %s22, 1
    %p169 = por %p167, %p168
    %p170 = scmp.ne.s32.totalorder %s161, %s162
    %p171 = scmp.eq.s32.totalorder %s22, 0
    %p172 = por %p170, %p171
    %p173 = scmp.ne.s32.totalorder %s161, %s162
    %p174 = scmp.eq.s32.totalorder %s23, 1
    %p175 = por %p173, %p174
    %p177 = scmp.ne.s32.totalorder %s162, %s176
    %p178 = scmp.eq.s32.totalorder %s23, 0
    %p179 = por %p177, %p178
    %s181 = sadd.s32 %s180, 1
    %p184 = scmp.eq.s32.totalorder %s17, 1
    %p185 = scmp.ne.s32.totalorder %s180, %s182
    %p186 = scmp.eq.s32.totalorder %s17, 0
    %p187 = por %p185, %p186
    %p188 = scmp.ne.s32.totalorder %s180, %s182
    %p189 = scmp.eq.s32.totalorder %s22, 1
    %p190 = por %p188, %p189
    %p191 = scmp.ne.s32.totalorder %s182, %s183
    %p192 = scmp.eq.s32.totalorder %s22, 0
    %p193 = por %p191, %p192
    %p194 = scmp.ne.s32.totalorder %s182, %s183
    %p195 = scmp.eq.s32.totalorder %s23, 1
    %p196 = por %p194, %p195
    %p198 = scmp.ne.s32.totalorder %s183, %s197
    %p199 = scmp.eq.s32.totalorder %s23, 0
    %p200 = por %p198, %p199
    %s202 = sadd.s32 %s201, 1
    %p205 = scmp.eq.s32.totalorder %s17, 1
    %p206 = scmp.ne.s32.totalorder %s201, %s203
    %p207 = scmp.eq.s32.totalorder %s17, 0
    %p208 = por %p206, %p207
    %p209 = scmp.ne.s32.totalorder %s201, %s203
    %p210 = scmp.eq.s32.totalorder %s22, 1
    %p211 = por %p209, %p210
    %p212 = scmp.ne.s32.totalorder %s203, %s204
    %p213 = scmp.eq.s32.totalorder %s22, 0
    %p214 = por %p212, %p213
    %p215 = scmp.ne.s32.totalorder %s203, %s204
    %p216 = scmp.eq.s32.totalorder %s23, 1
    %p217 = por %p215, %p216
    %p219 = scmp.ne.s32.totalorder %s204, %s218
    %p220 = scmp.eq.s32.totalorder %s23, 0
    %p221 = por %p219, %p220
    %s223 = sadd.s32 %s222, 1
    %p226 = scmp.eq.s32.totalorder %s17, 1
    %p227 = scmp.ne.s32.totalorder %s222, %s224
    %p228 = scmp.eq.s32.totalorder %s17, 0
    %p229 = por %p227, %p228
    %p230 = scmp.ne.s32.totalorder %s222, %s224
    %p231 = scmp.eq.s32.totalorder %s22, 1
    %p232 = por %p230, %p231
    %p233 = scmp.ne.s32.totalorder %s224, %s225
    %p234 = scmp.eq.s32.totalorder %s22, 0
    %p235 = por %p233, %p234
    %p236 = scmp.ne.s32.totalorder %s224, %s225
    %p237 = scmp.eq.s32.totalorder %s23, 1
    %p238 = por %p236, %p237
    %p240 = scmp.ne.s32.totalorder %s225, %s239
    %p241 = scmp.eq.s32.totalorder %s23, 0
    %p242 = por %p240, %p241
    %s244 = sadd.s32 %s243, 1
    %p247 = scmp.eq.s32.totalorder %s17, 1
    %p248 = scmp.ne.s32.totalorder %s243, %s245
    %p249 = scmp.eq.s32.totalorder %s17, 0
    %p250 = por %p248, %p249
    %p251 = scmp.ne.s32.totalorder %s243, %s245
    %p252 = scmp.eq.s32.totalorder %s22, 1
    %p253 = por %p251, %p252
    %p254 = scmp.ne.s32.totalorder %s245, %s246
    %p255 = scmp.eq.s32.totalorder %s22, 0
    %p256 = por %p254, %p255
    %p257 = scmp.ne.s32.totalorder %s245, %s246
    %p258 = scmp.eq.s32.totalorder %s23, 1
    %p259 = por %p257, %p258
    %p261 = scmp.ne.s32.totalorder %s246, %s260
    %p262 = scmp.eq.s32.totalorder %s23, 0
    %p263 = por %p261, %p262
    %s265 = sadd.s32 %s264, 1
    %p268 = scmp.eq.s32.totalorder %s17, 1
    %p269 = scmp.ne.s32.totalorder %s264, %s266
    %p270 = scmp.eq.s32.totalorder %s17, 0
    %p271 = por %p269, %p270
    %p272 = scmp.ne.s32.totalorder %s264, %s266
    %p273 = scmp.eq.s32.totalorder %s22, 1
    %p274 = por %p272, %p273
    %p275 = scmp.ne.s32.totalorder %s266, %s267
    %p276 = scmp.eq.s32.totalorder %s22, 0
    %p277 = por %p275, %p276
    %p278 = scmp.ne.s32.totalorder %s266, %s267
    %p279 = scmp.eq.s32.totalorder %s23, 1
    %p280 = por %p278, %p279
    %p282 = scmp.ne.s32.totalorder %s267, %s281
    %p283 = scmp.eq.s32.totalorder %s23, 0
    %p284 = por %p282, %p283
    %s285 = ssub.s32 %s24, %s36
    %s286 = ssub.s32 %s25, %s32
    %s287 = sor.u32 %s285, %s286
    %p288 = scmp.eq.s32.totalorder %s287, 0
    %s290 = sadd.s32 %s289, 1
    %s291 = scalar_select %p288, %s289, %s290
    %p294 = pneg %p288
    %p295 = scmp.eq.s32.totalorder %s17, 1
    %p296 = por %p294, %p295
    %p297 = scmp.ne.s32.totalorder %s289, %s292
    %p298 = scmp.eq.s32.totalorder %s17, 0
    %p299 = por %p297, %p298
    %p300 = scmp.ne.s32.totalorder %s289, %s292
    %p301 = scmp.eq.s32.totalorder %s22, 1
    %p302 = por %p300, %p301
    %p303 = scmp.ne.s32.totalorder %s292, %s293
    %p304 = scmp.eq.s32.totalorder %s22, 0
    %p305 = por %p303, %p304
    %p306 = scmp.ne.s32.totalorder %s292, %s293
    %p307 = scmp.eq.s32.totalorder %s23, 1
    %p308 = por %p306, %p307
    %p310 = scmp.ne.s32.totalorder %s293, %s309
    %p311 = scmp.eq.s32.totalorder %s23, 0
    %p312 = por %p310, %p311
    %p313 = scmp.le.s32.totalorder 1, %s17
    %p314 = scmp.lt.s32.totalorder %s17, 3
    %p315 = pnand %p313, %p314
    %p316 = pneg %p315
    // Predicated region
    $region9: #{decoder_forward.7} parent=5 // pred_check
      _
    $region10: #{decoder_forward.7} parent=5 // pred_check_branch
      %318 = sbr.rel (%p315) target = $region12
    $region11: #{decoder_forward.7} parent=5 // pred_region
      %s319 = ssub.s32 %s17, 1
      // Predicated region
      $region13: #{decoder_forward.7} parent=11 // pred_check
        %p320 = pneg %p130
      $region14: #{decoder_forward.7} parent=11 // pred_check_branch
        %322 = sbr.rel (%p320) target = $region16
      $region15: #{decoder_forward.7} parent=11 // pred_region
        _
      $region16: #{decoder_forward.7} parent=11 // pred_fallthru
        _
      // Predicated region
      $region17: #{decoder_forward.7} parent=11 // pred_check
        %p323 = pneg %p151
      $region18: #{decoder_forward.7} parent=11 // pred_check_branch
        %325 = sbr.rel (%p323) target = $region20
      $region19: #{decoder_forward.7} parent=11 // pred_region
        _
      $region20: #{decoder_forward.7} parent=11 // pred_fallthru
        _
      // Predicated region
      $region21: #{decoder_forward.7} parent=11 // pred_check
        %p326 = pneg %p172
      $region22: #{decoder_forward.7} parent=11 // pred_check_branch
        %328 = sbr.rel (%p326) target = $region24
      $region23: #{decoder_forward.7} parent=11 // pred_region
        _
      $region24: #{decoder_forward.7} parent=11 // pred_fallthru
        _
      // Predicated region
      $region25: #{decoder_forward.7} parent=11 // pred_check
        %p329 = pneg %p193
      $region26: #{decoder_forward.7} parent=11 // pred_check_branch
        %331 = sbr.rel (%p329) target = $region28
      $region27: #{decoder_forward.7} parent=11 // pred_region
        _
      $region28: #{decoder_forward.7} parent=11 // pred_fallthru
        _
      // Predicated region
      $region29: #{decoder_forward.7} parent=11 // pred_check
        %p332 = pneg %p214
      $region30: #{decoder_forward.7} parent=11 // pred_check_branch
        %334 = sbr.rel (%p332) target = $region32
      $region31: #{decoder_forward.7} parent=11 // pred_region
        _
      $region32: #{decoder_forward.7} parent=11 // pred_fallthru
        _
      // Predicated region
      $region33: #{decoder_forward.7} parent=11 // pred_check
        %p335 = pneg %p235
      $region34: #{decoder_forward.7} parent=11 // pred_check_branch
        %337 = sbr.rel (%p335) target = $region36
      $region35: #{decoder_forward.7} parent=11 // pred_region
        _
      $region36: #{decoder_forward.7} parent=11 // pred_fallthru
        _
      // Predicated region
      $region37: #{decoder_forward.7} parent=11 // pred_check
        %p338 = pneg %p256
      $region38: #{decoder_forward.7} parent=11 // pred_check_branch
        %340 = sbr.rel (%p338) target = $region40
      $region39: #{decoder_forward.7} parent=11 // pred_region
        _
      $region40: #{decoder_forward.7} parent=11 // pred_fallthru
        _
      // Predicated region
      $region41: #{decoder_forward.7} parent=11 // pred_check
        %p341 = pneg %p277
      $region42: #{decoder_forward.7} parent=11 // pred_check_branch
        %343 = sbr.rel (%p341) target = $region44
      $region43: #{decoder_forward.7} parent=11 // pred_region
        _
      $region44: #{decoder_forward.7} parent=11 // pred_fallthru
        _
    $region12: #{decoder_forward.7} parent=5 // pred_fallthru
      _
    %p344 = scmp.lt.s32.totalorder %s17, 2
    // Predicated region
    $region45: #{decoder_forward.7} parent=5 // pred_check
      %p345 = pneg %p344
    $region46: #{decoder_forward.7} parent=5 // pred_check_branch
      %347 = sbr.rel (%p345) target = $region48
    $region47: #{decoder_forward.7} parent=5 // pred_region
      // Predicated region
      $region49: #{decoder_forward.7} parent=47 // pred_check
        %p348 = pneg %p51
      $region50: #{decoder_forward.7} parent=47 // pred_check_branch
        %350 = sbr.rel (%p348) target = $region52
      $region51: #{decoder_forward.7} parent=47 // pred_region
        %p351 = scmp.lt.s32.totalorder %s24, 1
        %s352 = scalar_select %p351, %s24, 1
        %p353 = scmp.lt.s32.totalorder %s25, 0
        %s354 = scalar_select %p353, %s25, 0
        %s355 = sadd.s32 %s354, %s352
        %s356 = smul.addr %s355, 8
        %s357 = scalar_lea.vmem %s0, %s356
      $region52: #{decoder_forward.7} parent=47 // pred_fallthru
        _
      // Predicated region
      $region53: #{decoder_forward.7} parent=47 // pred_check
        %p358 = pneg %p77
      $region54: #{decoder_forward.7} parent=47 // pred_check_branch
        %360 = sbr.rel (%p358) target = $region56
      $region55: #{decoder_forward.7} parent=47 // pred_region
        %p361 = scmp.lt.s32.totalorder %s24, 1
        %s362 = scalar_select %p361, %s24, 1
        %s363 = smul.addr %s362, 8
        %s364 = scalar_lea.vmem %s1, %s363
      $region56: #{decoder_forward.7} parent=47 // pred_fallthru
        _
      // Predicated region
      $region57: #{decoder_forward.7} parent=47 // pred_check
        %p365 = pneg %p103
      $region58: #{decoder_forward.7} parent=47 // pred_check_branch
        %367 = sbr.rel (%p365) target = $region60
      $region59: #{decoder_forward.7} parent=47 // pred_region
        %p368 = scmp.lt.s32.totalorder %s24, 1
        %s369 = scalar_select %p368, %s24, 1
        %s370 = scalar_lea.vmem %s2, %s369
      $region60: #{decoder_forward.7} parent=47 // pred_fallthru
        _
    $region48: #{decoder_forward.7} parent=5 // pred_fallthru
      _
    %p371 = scmp.le.s32.totalorder 1, %s17
    %p372 = scmp.lt.s32.totalorder %s17, 3
    %p373 = pnand %p371, %p372
    %p374 = pneg %p373
    // Predicated region
    $region61: #{decoder_forward.7} parent=5 // pred_check
      _
    $region62: #{decoder_forward.7} parent=5 // pred_check_branch
      %376 = sbr.rel (%p373) target = $region64
    $region63: #{decoder_forward.7} parent=5 // pred_region
      %s377 = ssub.s32 %s17, 1
      %p378 = scmp.lt.s32.totalorder %s26, 1
      %s379 = scalar_select %p378, %s26, 1
      %p380 = scmp.lt.s32.totalorder %s27, 0
      %s381 = scalar_select %p380, %s27, 0
      %s382 = sadd.s32 %s381, %s379
      %s383 = smul.addr %s382, 8
      %s384 = scalar_lea.vmem %s0, %s383
      %p385 = pneg %p57
      %p386 = pneg %p54
      %p387 = scmp.lt.s32.totalorder %s26, 1
      %s388 = scalar_select %p387, %s26, 1
      %s389 = smul.addr %s388, 8
      %s390 = scalar_lea.vmem %s1, %s389
      %p391 = pneg %p83
      %p392 = pneg %p80
      %p393 = scmp.lt.s32.totalorder %s26, 1
      %s394 = scalar_select %p393, %s26, 1
      %s395 = scalar_lea.vmem %s2, %s394
      %p396 = pneg %p109
      %p397 = pneg %p106
      %p398 = pneg %p130
      %p399 = pneg %p127
      %p400 = pneg %p151
      %p401 = pneg %p148
      %p402 = pneg %p172
      %p403 = pneg %p169
      %p404 = pneg %p193
      %p405 = pneg %p190
      %p406 = pneg %p214
      %p407 = pneg %p211
      %p408 = pneg %p235
      %p409 = pneg %p232
      %p410 = pneg %p256
      %p411 = pneg %p253
      %p412 = pneg %p277
      %p413 = pneg %p274
      %p414 = pneg %p305
      %p415 = pneg %p302
      %p416 = scmp.lt.s32.totalorder %s26, 1
      %s417 = scalar_select %p416, %s26, 1
      %p418 = scmp.lt.s32.totalorder %s27, 0
      %s419 = scalar_select %p418, %s27, 0
      %s420 = sadd.s32 %s419, %s417
      %s421 = smul.addr %s420, 8
      %s422 = scalar_lea.vmem %s11, %s421
      %p423 = scmp.lt.s32.totalorder %s26, 1
      %s424 = scalar_select %p423, %s26, 1
      %p425 = scmp.lt.s32.totalorder %s27, 0
      %s426 = scalar_select %p425, %s27, 0
      %s427 = sadd.s32 %s426, %s424
      %s428 = smul.addr %s427, 8
      %s429 = scalar_lea.vmem %s0, %s428
      %p430 = scmp.lt.s32.totalorder %s26, 1
      %s431 = scalar_select %p430, %s26, 1
      %s432 = smul.addr %s431, 8
      %s433 = scalar_lea.vmem %s1, %s432
      %p434 = scmp.lt.s32.totalorder %s26, 1
      %s435 = scalar_select %p434, %s26, 1
      %s436 = scalar_lea.vmem %s2, %s435
      %p437 = scmp.lt.s32.totalorder %s26, 1
      %s438 = scalar_select %p437, %s26, 1
      %p439 = scmp.lt.s32.totalorder %s27, 0
      %s440 = scalar_select %p439, %s27, 0
      %s441 = sadd.s32 %s440, %s438
      %s442 = smul.addr %s441, 8
      %s443 = scalar_lea.vmem %s11, %s442
      %v445 = vld [vmem:[%s429] sm:$0xff]
      %v446 = vld [vmem:[%s433] sm:$0xff]
      %v447 = vld [vmem:[%s436] sm:$0x1]
      %s448 = smul.u32 %s27, 8
      %v449 = vlaneseq
      %v450 = vshrl.u32 %v449, 7
      %v451 = vstv %s448
      %v452 = vadd.s32 %v450, %v451
      %v453 = vlaneseq
      %v454 = vand.u32 %v453, 127
      %vm455 = vcmp.ge.s32.totalorder %v452, %v454
      %v456 = vsel %vm455, 0.0, -1e+09
      %v458 = vperm.slane %v447, 0
      %v460 = vadd.f32 %v458, %v456
      %v461 = vpack.c.bf16 %v445, %v445
      %v462 = vld [vmem:[%s3] sm:$0xf]
      %v463 = vld [vmem:[%s3 + $0x4] sm:$0xf]
      %v464 = vld [vmem:[%s3 + $0x8] sm:$0xf]
      %v465 = vld [vmem:[%s3 + $0xc] sm:$0xf]
      %v466 = vld [vmem:[%s4] sm:$0x1]
      %v468 = vperm.slane %v466, 0
      %v474 = vunpack.c.l.b16 %v462
      %v475 = vunpack.c.l.b16 %v463
      %v476 = vunpack.c.l.b16 %v464
      %v477 = vunpack.c.l.b16 %v465
      %v478 = vpack.c.b16 %v475, %v474
      %v479 = vpack.c.b16 %v477, %v476
      %vm482 = vcmask 261120
      %v484 = vsel %vm482, %v461, 0
      %486 = vmatpush.bf16.msra.mxu0 0
      %487 = vmatpush.bf16.msra.mxu0 0
      %488 = vmatpush.bf16.msra.mxu0 0
      %489 = vmatpush.bf16.msra.mxu0 0
      %490 = vmatpush.bf16.msra.mxu0 0
      %491 = vmatpush.bf16.msra.mxu0 0
      %492 = vmatpush.bf16.msra.mxu0 %v479
      %493 = vmatpush.bf16.msra.mxu0 %v478
      %494 = vmatmul.bf16.gmra.mxu0 %v484
      %v495 = vpop.f32.mrf.mxu0
      %v496 = vadd.f32 %v468, %v495
      %v497 = vpop.f32.mrf.mxu0
      %498 = vdwg.mxu0
      %v499 = vpack.c.bf16 %v446, %v446
      %v500 = vld [vmem:[%s5] sm:$0xf]
      %v501 = vld [vmem:[%s5 + $0x4] sm:$0xf]
      %v502 = vld [vmem:[%s5 + $0x8] sm:$0xf]
      %v503 = vld [vmem:[%s5 + $0xc] sm:$0xf]
      %v504 = vld [vmem:[%s6] sm:$0x1]
      %v506 = vperm.slane %v504, 0
      %v512 = vunpack.c.l.b16 %v500
      %v513 = vunpack.c.l.b16 %v501
      %v514 = vunpack.c.l.b16 %v502
      %v515 = vunpack.c.l.b16 %v503
      %v516 = vpack.c.b16 %v513, %v512
      %v517 = vpack.c.b16 %v515, %v514
      %v521 = vsel %vm482, %v499, 0
      %523 = vmatpush.bf16.msra.mxu0 0
      %524 = vmatpush.bf16.msra.mxu0 0
      %525 = vmatpush.bf16.msra.mxu0 0
      %526 = vmatpush.bf16.msra.mxu0 0
      %527 = vmatpush.bf16.msra.mxu0 0
      %528 = vmatpush.bf16.msra.mxu0 0
      %529 = vmatpush.bf16.msra.mxu0 %v517
      %530 = vmatpush.bf16.msra.mxu0 %v516
      %531 = vmatmul.bf16.gmra.mxu0 %v521
      %v532 = vpop.f32.mrf.mxu0
      %v533 = vadd.f32 %v506, %v532
      %v534 = vpop.f32.mrf.mxu0
      %535 = vdwg.mxu0
      %v536 = vpack.c.bf16 %v496, %v496
      %v537 = vpack.c.bf16 %v533, %v533
      %vm538 = vcmask 64512
      %v540 = vsel %vm538, %v536, 0
      %v543 = vsel %vm538, %v537, 0
      %545 = vmatpush.bf16.xpose.msra.mxu0 0
      %546 = vmatpush.bf16.xpose.msra.mxu0 0
      %547 = vmatpush.bf16.xpose.msra.mxu0 0
      %548 = vmatpush.bf16.xpose.msra.mxu0 0
      %549 = vmatpush.bf16.xpose.msra.mxu0 0
      %550 = vmatpush.bf16.xpose.msra.mxu0 0
      %551 = vmatpush.bf16.xpose.msra.mxu0 0
      %552 = vmatpush.bf16.xpose.msra.mxu0 %v543
      %553 = vmatmul.bf16.gmra.mxu0 %v540
      %v554 = vpop.f32.mrf.mxu0
      %v555 = vadd.f32 0.0, %v554
      %v556 = vpop.f32.mrf.mxu0
      %557 = vdwg.mxu0
      %v558 = vmul.f32 %v555, 0.35355338
      %v559 = vadd.f32 %v558, %v460
      %v560 = vsel %vm538, %v559, -inf
      %561 = vmax.xlane.f32.xlu0 %v560
      %v562 = vpop.xlane.xlu0 %561
      %v563 = vsub.f32 %v559, %v562
      %v564 = vmul.f32 %v563, 1.442695
      %v565 = vpow.pop %v564
      %v566 = vsel %vm538, %v565, 0.0
      %567 = vadd.xlane.f32.xlu0 %v566
      %v568 = vpop.xlane.xlu0 %567
      %v569 = vrcp.pop %v568
      %v570 = vmul.f32 %v568, %v569
      %v571 = vsub.f32 1.0, %v570
      %v572 = vmul.f32 %v569, %v571
      %v573 = vadd.f32 %v569, %v572
      %vm574 = vweird.f32 %v568
      %vm575 = vweird.f32 %v569
      %vm576 = vmor %vm574, %vm575
      %v577 = vsel %vm576, %v569, %v573
      %v578 = vand.u32 2147483647, %v568
      %vm579 = vcmp.eq.f32.partialorder %v578, 8.507059e+37
      %v580 = vand.u32 %v568, 2147483648
      %v581 = vor.u32 1.1754944e-38, %v580
      %v582 = vsel %vm579, %v581, %v577
      %v583 = vmul.f32 %v565, %v582
      %v584 = vpack.c.bf16 %v583, %v583
      %586 = vrot.lane.b32.xlu0 %v537, 96
      %v587 = vpop.permute.xlu0 %586
      %v589 = vsel %vm538, %v584, 0
      %vm591 = vcmask 1043456
      %v593 = vsel %vm591, %v587, 0
      %595 = vmatpush.bf16.msra.mxu0 0
      %596 = vmatpush.bf16.msra.mxu0 0
      %597 = vmatpush.bf16.msra.mxu0 0
      %598 = vmatpush.bf16.msra.mxu0 0
      %599 = vmatpush.bf16.msra.mxu0 0
      %600 = vmatpush.bf16.msra.mxu0 0
      %601 = vmatpush.bf16.msra.mxu0 0
      %602 = vmatpush.bf16.msra.mxu0 %v593
      %603 = vmatmul.bf16.gmra.mxu0 %v589
      %v604 = vpop.f32.mrf.mxu0
      %v605 = vadd.f32 0.0, %v604
      %v606 = vpop.f32.mrf.mxu0
      %607 = vdwg.mxu0
      %608 = vst.msk [vmem:[#allocation2] sm:$0xff] %vm538, %v605
      %610 = vrot.lane.b32.xlu0 %v536, 120
      %v611 = vpop.permute.xlu0 %610
      %612 = vrot.lane.b32.xlu0 %v537, 120
      %v613 = vpop.permute.xlu0 %612
      %v615 = vsel %vm538, %v611, 0
      %v618 = vsel %vm538, %v613, 0
      %620 = vmatpush.bf16.xpose.msra.mxu0 0
      %621 = vmatpush.bf16.xpose.msra.mxu0 0
      %622 = vmatpush.bf16.xpose.msra.mxu0 0
      %623 = vmatpush.bf16.xpose.msra.mxu0 0
      %624 = vmatpush.bf16.xpose.msra.mxu0 0
      %625 = vmatpush.bf16.xpose.msra.mxu0 0
      %626 = vmatpush.bf16.xpose.msra.mxu0 0
      %627 = vmatpush.bf16.xpose.msra.mxu0 %v618
      %628 = vmatmul.bf16.gmra.mxu0 %v615
      %v629 = vpop.f32.mrf.mxu0
      %v630 = vadd.f32 0.0, %v629
      %v631 = vpop.f32.mrf.mxu0
      %632 = vdwg.mxu0
      %v633 = vmul.f32 %v630, 0.35355338
      %v634 = vadd.f32 %v633, %v460
      %v635 = vsel %vm538, %v634, -inf
      %636 = vmax.xlane.f32.xlu0 %v635
      %v637 = vpop.xlane.xlu0 %636
      %v638 = vsub.f32 %v634, %v637
      %v639 = vmul.f32 %v638, 1.442695
      %v640 = vpow.pop %v639
      %v641 = vsel %vm538, %v640, 0.0
      %642 = vadd.xlane.f32.xlu0 %v641
      %v643 = vpop.xlane.xlu0 %642
      %v644 = vrcp.pop %v643
      %v645 = vmul.f32 %v643, %v644
      %v646 = vsub.f32 1.0, %v645
      %v647 = vmul.f32 %v644, %v646
      %v648 = vadd.f32 %v644, %v647
      %vm649 = vweird.f32 %v643
      %vm650 = vweird.f32 %v644
      %vm651 = vmor %vm649, %vm650
      %v652 = vsel %vm651, %v644, %v648
      %v653 = vand.u32 2147483647, %v643
      %vm654 = vcmp.eq.f32.partialorder %v653, 8.507059e+37
      %v655 = vand.u32 %v643, 2147483648
      %v656 = vor.u32 1.1754944e-38, %v655
      %v657 = vsel %vm654, %v656, %v652
      %v658 = vmul.f32 %v640, %v657
      %v659 = vpack.c.bf16 %v658, %v658
      %660 = vrot.lane.b32.xlu0 %v537, 88
      %v661 = vpop.permute.xlu0 %660
      %v663 = vsel %vm538, %v659, 0
      %v666 = vsel %vm591, %v661, 0
      %668 = vmatpush.bf16.msra.mxu0 0
      %669 = vmatpush.bf16.msra.mxu0 0
      %670 = vmatpush.bf16.msra.mxu0 0
      %671 = vmatpush.bf16.msra.mxu0 0
      %672 = vmatpush.bf16.msra.mxu0 0
      %673 = vmatpush.bf16.msra.mxu0 0
      %674 = vmatpush.bf16.msra.mxu0 0
      %675 = vmatpush.bf16.msra.mxu0 %v666
      %676 = vmatmul.bf16.gmra.mxu0 %v663
      %v677 = vpop.f32.mrf.mxu0
      %v678 = vadd.f32 0.0, %v677
      %v679 = vpop.f32.mrf.mxu0
      %680 = vdwg.mxu0
      %682 = vrot.lane.b32.xlu0 %v678, 8
      %v683 = vpop.permute.xlu0 %682
      %vm685 = vcmask 130112
      %686 = vst.msk [vmem:[#allocation2] sm:$0xff] %vm685, %v683
      %687 = vrot.lane.b32.xlu0 %v536, 112
      %v688 = vpop.permute.xlu0 %687
      %689 = vrot.lane.b32.xlu0 %v537, 112
      %v690 = vpop.permute.xlu0 %689
      %v692 = vsel %vm538, %v688, 0
      %v695 = vsel %vm538, %v690, 0
      %697 = vmatpush.bf16.xpose.msra.mxu0 0
      %698 = vmatpush.bf16.xpose.msra.mxu0 0
      %699 = vmatpush.bf16.xpose.msra.mxu0 0
      %700 = vmatpush.bf16.xpose.msra.mxu0 0
      %701 = vmatpush.bf16.xpose.msra.mxu0 0
      %702 = vmatpush.bf16.xpose.msra.mxu0 0
      %703 = vmatpush.bf16.xpose.msra.mxu0 0
      %704 = vmatpush.bf16.xpose.msra.mxu0 %v695
      %705 = vmatmul.bf16.gmra.mxu0 %v692
      %v706 = vpop.f32.mrf.mxu0
      %v707 = vadd.f32 0.0, %v706
      %v708 = vpop.f32.mrf.mxu0
      %709 = vdwg.mxu0
      %v710 = vmul.f32 %v707, 0.35355338
      %v711 = vadd.f32 %v710, %v460
      %v712 = vsel %vm538, %v711, -inf
      %713 = vmax.xlane.f32.xlu0 %v712
      %v714 = vpop.xlane.xlu0 %713
      %v715 = vsub.f32 %v711, %v714
      %v716 = vmul.f32 %v715, 1.442695
      %v717 = vpow.pop %v716
      %v718 = vsel %vm538, %v717, 0.0
      %719 = vadd.xlane.f32.xlu0 %v718
      %v720 = vpop.xlane.xlu0 %719
      %v721 = vrcp.pop %v720
      %v722 = vmul.f32 %v720, %v721
      %v723 = vsub.f32 1.0, %v722
      %v724 = vmul.f32 %v721, %v723
      %v725 = vadd.f32 %v721, %v724
      %vm726 = vweird.f32 %v720
      %vm727 = vweird.f32 %v721
      %vm728 = vmor %vm726, %vm727
      %v729 = vsel %vm728, %v721, %v725
      %v730 = vand.u32 2147483647, %v720
      %vm731 = vcmp.eq.f32.partialorder %v730, 8.507059e+37
      %v732 = vand.u32 %v720, 2147483648
      %v733 = vor.u32 1.1754944e-38, %v732
      %v734 = vsel %vm731, %v733, %v729
      %v735 = vmul.f32 %v717, %v734
      %v736 = vpack.c.bf16 %v735, %v735
      %737 = vrot.lane.b32.xlu0 %v537, 80
      %v738 = vpop.permute.xlu0 %737
      %v740 = vsel %vm538, %v736, 0
      %v743 = vsel %vm591, %v738, 0
      %745 = vmatpush.bf16.msra.mxu0 0
      %746 = vmatpush.bf16.msra.mxu0 0
      %747 = vmatpush.bf16.msra.mxu0 0
      %748 = vmatpush.bf16.msra.mxu0 0
      %749 = vmatpush.bf16.msra.mxu0 0
      %750 = vmatpush.bf16.msra.mxu0 0
      %751 = vmatpush.bf16.msra.mxu0 0
      %752 = vmatpush.bf16.msra.mxu0 %v743
      %753 = vmatmul.bf16.gmra.mxu0 %v740
      %v754 = vpop.f32.mrf.mxu0
      %v755 = vadd.f32 0.0, %v754
      %v756 = vpop.f32.mrf.mxu0
      %757 = vdwg.mxu0
      %759 = vrot.lane.b32.xlu0 %v755, 16
      %v760 = vpop.permute.xlu0 %759
      %vm762 = vcmask 195712
      %763 = vst.msk [vmem:[#allocation2] sm:$0xff] %vm762, %v760
      %764 = vrot.lane.b32.xlu0 %v536, 104
      %v765 = vpop.permute.xlu0 %764
      %766 = vrot.lane.b32.xlu0 %v537, 104
      %v767 = vpop.permute.xlu0 %766
      %v769 = vsel %vm538, %v765, 0
      %v772 = vsel %vm538, %v767, 0
      %774 = vmatpush.bf16.xpose.msra.mxu0 0
      %775 = vmatpush.bf16.xpose.msra.mxu0 0
      %776 = vmatpush.bf16.xpose.msra.mxu0 0
      %777 = vmatpush.bf16.xpose.msra.mxu0 0
      %778 = vmatpush.bf16.xpose.msra.mxu0 0
      %779 = vmatpush.bf16.xpose.msra.mxu0 0
      %780 = vmatpush.bf16.xpose.msra.mxu0 0
      %781 = vmatpush.bf16.xpose.msra.mxu0 %v772
      %782 = vmatmul.bf16.gmra.mxu0 %v769
      %v783 = vpop.f32.mrf.mxu0
      %v784 = vadd.f32 0.0, %v783
      %v785 = vpop.f32.mrf.mxu0
      %786 = vdwg.mxu0
      %v787 = vmul.f32 %v784, 0.35355338
      %v788 = vadd.f32 %v787, %v460
      %v789 = vsel %vm538, %v788, -inf
      %790 = vmax.xlane.f32.xlu0 %v789
      %v791 = vpop.xlane.xlu0 %790
      %v792 = vsub.f32 %v788, %v791
      %v793 = vmul.f32 %v792, 1.442695
      %v794 = vpow.pop %v793
      %v795 = vsel %vm538, %v794, 0.0
      %796 = vadd.xlane.f32.xlu0 %v795
      %v797 = vpop.xlane.xlu0 %796
      %v798 = vrcp.pop %v797
      %v799 = vmul.f32 %v797, %v798
      %v800 = vsub.f32 1.0, %v799
      %v801 = vmul.f32 %v798, %v800
      %v802 = vadd.f32 %v798, %v801
      %vm803 = vweird.f32 %v797
      %vm804 = vweird.f32 %v798
      %vm805 = vmor %vm803, %vm804
      %v806 = vsel %vm805, %v798, %v802
      %v807 = vand.u32 2147483647, %v797
      %vm808 = vcmp.eq.f32.partialorder %v807, 8.507059e+37
      %v809 = vand.u32 %v797, 2147483648
      %v810 = vor.u32 1.1754944e-38, %v809
      %v811 = vsel %vm808, %v810, %v806
      %v812 = vmul.f32 %v794, %v811
      %v813 = vpack.c.bf16 %v812, %v812
      %814 = vrot.lane.b32.xlu0 %v537, 72
      %v815 = vpop.permute.xlu0 %814
      %v817 = vsel %vm538, %v813, 0
      %v820 = vsel %vm591, %v815, 0
      %822 = vmatpush.bf16.msra.mxu0 0
      %823 = vmatpush.bf16.msra.mxu0 0
      %824 = vmatpush.bf16.msra.mxu0 0
      %825 = vmatpush.bf16.msra.mxu0 0
      %826 = vmatpush.bf16.msra.mxu0 0
      %827 = vmatpush.bf16.msra.mxu0 0
      %828 = vmatpush.bf16.msra.mxu0 0
      %829 = vmatpush.bf16.msra.mxu0 %v820
      %830 = vmatmul.bf16.gmra.mxu0 %v817
      %v831 = vpop.f32.mrf.mxu0
      %v832 = vadd.f32 0.0, %v831
      %v833 = vpop.f32.mrf.mxu0
      %834 = vdwg.mxu0
      %836 = vrot.lane.b32.xlu0 %v832, 24
      %v837 = vpop.permute.xlu0 %836
      %vm839 = vcmask 261312
      %840 = vst.msk [vmem:[#allocation2] sm:$0xff] %vm839, %v837
      %v841 = vld [vmem:[#allocation2] sm:$0xff]
      %v842 = vpack.c.bf16 %v841, %v841
      %v843 = vld [vmem:[%s7] sm:$0xf]
      %v844 = vld [vmem:[%s7 + $0x4] sm:$0xf]
      %v845 = vld [vmem:[%s7 + $0x8] sm:$0xf]
      %v846 = vld [vmem:[%s7 + $0xc] sm:$0xf]
      %v847 = vld [vmem:[%s8] sm:$0x1]
      %v849 = vperm.slane %v847, 0
      %v855 = vunpack.c.l.b16 %v843
      %v856 = vunpack.c.l.b16 %v844
      %v857 = vunpack.c.l.b16 %v845
      %v858 = vunpack.c.l.b16 %v846
      %v859 = vpack.c.b16 %v856, %v855
      %v860 = vpack.c.b16 %v858, %v857
      %v864 = vsel %vm482, %v842, 0
      %866 = vmatpush.bf16.msra.mxu0 0
      %867 = vmatpush.bf16.msra.mxu0 0
      %868 = vmatpush.bf16.msra.mxu0 0
      %869 = vmatpush.bf16.msra.mxu0 0
      %870 = vmatpush.bf16.msra.mxu0 0
      %871 = vmatpush.bf16.msra.mxu0 0
      %872 = vmatpush.bf16.msra.mxu0 %v860
      %873 = vmatpush.bf16.msra.mxu0 %v859
      %874 = vmatmul.bf16.gmra.mxu0 %v864
      %v875 = vpop.f32.mrf.mxu0
      %v876 = vadd.f32 %v849, %v875
      %v877 = vpop.f32.mrf.mxu0
      %878 = vdwg.mxu0
      %v879 = vadd.f32 %v445, %v876
      %v880 = vsel %vm482, %v879, 0.0
      %881 = vadd.xlane.f32.xlu0 %v880
      %v882 = vpop.xlane.xlu0 %881
      %v883 = vrcp.pop 32.0
      %v884 = vmul.f32 32.0, %v883
      %v885 = vsub.f32 1.0, %v884
      %v886 = vmul.f32 %v883, %v885
      %v887 = vadd.f32 %v883, %v886
      %vm888 = vweird.f32 %v883
      %v889 = vsel %vm888, %v883, %v887
      %v890 = vmul.f32 %v882, %v889
      %v891 = vsub.f32 %v879, %v890
      %v892 = vmul.f32 %v891, %v891
      %v893 = vsel %vm482, %v892, 0.0
      %894 = vadd.xlane.f32.xlu0 %v893
      %v895 = vpop.xlane.xlu0 %894
      %v896 = vmul.f32 %v895, %v889
      %v897 = vadd.f32 %v896, 1e-05
      %v898 = vrsqrt.pop %v897
      %v899 = vmul.f32 %v898, %v897
      %v900 = vmul.f32 %v899, %v898
      %v901 = vmul.f32 0.5, %v900
      %v902 = vsub.f32 1.5, %v901
      %v903 = vmul.f32 %v898, %v902
      %vm904 = vweird.f32 %v897
      %vm905 = vweird.f32 %v898
      %vm906 = vmor %vm904, %vm905
      %v907 = vsel %vm906, %v898, %v903
      %v908 = vmul.f32 %v891, %v907
      %v909 = vld [vmem:[%s9] sm:$0x1]
      %v911 = vperm.slane %v909, 0
      %v913 = vmul.f32 %v908, %v911
      %v914 = vld [vmem:[%s10] sm:$0x1]
      %v916 = vperm.slane %v914, 0
      %v918 = vadd.f32 %v913, %v916
      %919 = vst.msk [vmem:[%s443] sm:$0xff] %vm482, %v918
      %p920 = scmp.lt.s32.totalorder %s26, 1
      %s921 = scalar_select %p920, %s26, 1
      %p922 = scmp.lt.s32.totalorder %s27, 0
      %s923 = scalar_select %p922, %s27, 0
      %s924 = sadd.s32 %s923, %s921
      %s925 = smul.addr %s924, 8
      %s926 = scalar_lea.vmem %s11, %s925
      // Predicated region
      $region65: #{decoder_forward.7} parent=63 // pred_check
        %p927 = pneg %p302
      $region66: #{decoder_forward.7} parent=63 // pred_check_branch
        %929 = sbr.rel (%p927) target = $region68
      $region67: #{decoder_forward.7} parent=63 // pred_region
        _
      $region68: #{decoder_forward.7} parent=63 // pred_fallthru
        _
    $region64: #{decoder_forward.7} parent=5 // pred_fallthru
      _
    %p930 = scmp.le.s32.totalorder 2, %s17
    // Predicated region
    $region69: #{decoder_forward.7} parent=5 // pred_check
      %p931 = pneg %p930
    $region70: #{decoder_forward.7} parent=5 // pred_check_branch
      %933 = sbr.rel (%p931) target = $region72
    $region71: #{decoder_forward.7} parent=5 // pred_region
      %s934 = ssub.s32 %s17, 2
      // Predicated region
      $region73: #{decoder_forward.7} parent=71 // pred_check
        %p935 = pneg %p308
      $region74: #{decoder_forward.7} parent=71 // pred_check_branch
        %937 = sbr.rel (%p935) target = $region76
      $region75: #{decoder_forward.7} parent=71 // pred_region
        %p938 = scmp.lt.s32.totalorder %s28, 1
        %s939 = scalar_select %p938, %s28, 1
        %p940 = scmp.lt.s32.totalorder %s29, 0
        %s941 = scalar_select %p940, %s29, 0
        %s942 = sadd.s32 %s941, %s939
        %s943 = smul.addr %s942, 8
        %s944 = scalar_lea.vmem %s11, %s943
      $region76: #{decoder_forward.7} parent=71 // pred_fallthru
        _
    $region72: #{decoder_forward.7} parent=5 // pred_fallthru
      _
  $region6: #{decoder_forward.7} parent=0 // loop_footer
    %s21 = sadd.s32 1, %s17
  $region7: #{decoder_forward.7} parent=0 // loop_footer_branch
    %16 = sbr.rel target = $region3
  $region8: #{decoder_forward.7} parent=0 // loop_exit
    _

// kernel: decoder_forward.8
$region0: #{decoder_forward.8}
  #allocation0 [shape = 'u32[]', space=smem, size = 0x4, offset = 0x4, fixed_abs, tag = 'smem constant byte address 0x4 - core index']
  #allocation1 [shape = 'u32[72,128]{1,0:T(1,128)}', space=vmem, size = 0x9000, scoped, tag = 'internal scratch']
  #allocation2 [shape = 'f32[8,32]{1,0:T(8,128)}', space=vmem, size = 0x1000, scoped, tag = 'scratch operand']
  %s0 = inlined_call_operand.vmem [shape: f32[2,8,32], index: 0, kind: input, shape index: {}]
  %s1 = inlined_call_operand.vmem [shape: f32[2,8,32], index: 1, kind: input, shape index: {}]
  %s2 = inlined_call_operand.vmem [shape: f32[2,1,8], index: 2, kind: input, shape index: {}]
  %s3 = inlined_call_operand.vmem [shape: bf16[32,32], index: 3, kind: input, shape index: {}]
  %s4 = inlined_call_operand.vmem [shape: f32[1,32], index: 4, kind: input, shape index: {}]
  %s5 = inlined_call_operand.vmem [shape: bf16[32,64], index: 5, kind: input, shape index: {}]
  %s6 = inlined_call_operand.vmem [shape: f32[1,64], index: 6, kind: input, shape index: {}]
  %s7 = inlined_call_operand.vmem [shape: bf16[32,32], index: 7, kind: input, shape index: {}]
  %s8 = inlined_call_operand.vmem [shape: f32[1,32], index: 8, kind: input, shape index: {}]
  %s9 = inlined_call_operand.vmem [shape: f32[1,32], index: 9, kind: input, shape index: {}]
  %s10 = inlined_call_operand.vmem [shape: f32[1,32], index: 10, kind: input, shape index: {}]
  %s11 = inlined_call_operand.vmem [shape: f32[2,8,32], index: 11, kind: output, shape index: {}]
  %s12 = sld [smem:[#allocation0]]
  $region77: #{decoder_forward.8} parent=0
    _
  %s14 = ssub.s32 1, %s12
  %s15 = scalar_select 0, %s14, %s12
  loop: start=0, step=1, limit=4
  $region2: #{decoder_forward.8} parent=0 // loop_pre_header
    _
  $region3: #{decoder_forward.8} parent=0 // loop_header
    %s17 = sphi 0, %s21
    %p18 = scmp.ge.s32.totalorder %s17, 4
    %s24 = sphi 0, %s36
    %s25 = sphi 0, %s32
    %s26 = sphi 0, %s24
    %s27 = sphi 0, %s25
    %s28 = sphi 0, %s26
    %s29 = sphi 0, %s27
    %s41 = sphi 0, %s43
    %s44 = sphi 0, %s41
    %s45 = sphi 0, %s44
    %s61 = sphi 0, %s45
    %s67 = sphi 0, %s69
    %s70 = sphi 0, %s67
    %s71 = sphi 0, %s70
    %s87 = sphi 0, %s71
    %s93 = sphi 0, %s95
    %s96 = sphi 0, %s93
    %s97 = sphi 0, %s96
    %s113 = sphi 0, %s97
    %s117 = sphi 0, %s117
    %s119 = sphi 0, %s117
    %s120 = sphi 0, %s119
    %s134 = sphi 0, %s120
    %s138 = sphi 0, %s138
    %s140 = sphi 0, %s138
    %s141 = sphi 0, %s140
    %s155 = sphi 0, %s141
    %s159 = sphi 0, %s159
    %s161 = sphi 0, %s159
    %s162 = sphi 0, %s161
    %s176 = sphi 0, %s162
    %s180 = sphi 0, %s180
    %s182 = sphi 0, %s180
    %s183 = sphi 0, %s182
    %s197 = sphi 0, %s183
    %s201 = sphi 0, %s201
    %s203 = sphi 0, %s201
    %s204 = sphi 0, %s203
    %s218 = sphi 0, %s204
    %s222 = sphi 0, %s222
    %s224 = sphi 0, %s222
    %s225 = sphi 0, %s224
    %s239 = sphi 0, %s225
    %s243 = sphi 0, %s243
    %s245 = sphi 0, %s243
    %s246 = sphi 0, %s245
    %s260 = sphi 0, %s246
    %s264 = sphi 0, %s264
    %s266 = sphi 0, %s264
    %s267 = sphi 0, %s266
    %s281 = sphi 0, %s267
    %s289 = sphi 0, %s291
    %s292 = sphi 0, %s289
    %s293 = sphi 0, %s292
    %s309 = sphi 0, %s293
  $region4: #{decoder_forward.8} parent=0 // loop_header_branch
    %20 = sbr.rel (%p18) target = $region8
  $region5: #{decoder_forward.8} parent=0 // loop_body
    %s22 = ssub.s32 %s17, 1
    %s23 = ssub.s32 %s17, 2
    %s30 = sadd.s32 1, %s25
    %p31 = scmp.ge.s32.totalorder %s30, 1
    %s32 = scalar_select %p31, 0, %s30
    %s33 = sadd.s32 1, %s24
    %s34 = scalar_select %p31, %s33, %s24
    %p35 = scmp.ge.s32.totalorder %s34, 2
    %s36 = scalar_select %p35, 0, %s34
    %s37 = ssub.s32 %s24, %s36
    %s38 = ssub.s32 %s25, %s32
    %s39 = sor.u32 %s37, %s38
    %p40 = scmp.eq.s32.totalorder %s39, 0
    %s42 = sadd.s32 %s41, 1
    %s43 = scalar_select %p40, %s41, %s42
    %p46 = pneg %p40
    %p47 = scmp.eq.s32.totalorder %s17, 1
    %p48 = por %p46, %p47
    %p49 = scmp.ne.s32.totalorder %s41, %s44
    %p50 = scmp.eq.s32.totalorder %s17, 0
    %p51 = por %p49, %p50
    %p52 = scmp.ne.s32.totalorder %s41, %s44
    %p53 = scmp.eq.s32.totalorder %s22, 1
    %p54 = por %p52, %p53
    %p55 = scmp.ne.s32.totalorder %s44, %s45
    %p56 = scmp.eq.s32.totalorder %s22, 0
    %p57 = por %p55, %p56
    %p58 = scmp.ne.s32.totalorder %s44, %s45
    %p59 = scmp.eq.s32.totalorder %s23, 1
    %p60 = por %p58, %p59
    %p62 = scmp.ne.s32.totalorder %s45, %s61
    %p63 = scmp.eq.s32.totalorder %s23, 0
    %p64 = por %p62, %p63
    %s65 = ssub.s32 %s24, %s36
    %p66 = scmp.eq.s32.totalorder %s65, 0
    %s68 = sadd.s32 %s67, 1
    %s69 = scalar_select %p66, %s67, %s68
    %p72 = pneg %p66
    %p73 = scmp.eq.s32.totalorder %s17, 1
    %p74 = por %p72, %p73
    %p75 = scmp.ne.s32.totalorder %s67, %s70
    %p76 = scmp.eq.s32.totalorder %s17, 0
    %p77 = por %p75, %p76
    %p78 = scmp.ne.s32.totalorder %s67, %s70
    %p79 = scmp.eq.s32.totalorder %s22, 1
    %p80 = por %p78, %p79
    %p81 = scmp.ne.s32.totalorder %s70, %s71
    %p82 = scmp.eq.s32.totalorder %s22, 0
    %p83 = por %p81, %p82
    %p84 = scmp.ne.s32.totalorder %s70, %s71
    %p85 = scmp.eq.s32.totalorder %s23, 1
    %p86 = por %p84, %p85
    %p88 = scmp.ne.s32.totalorder %s71, %s87
    %p89 = scmp.eq.s32.totalorder %s23, 0
    %p90 = por %p88, %p89
    %s91 = ssub.s32 %s24, %s36
    %p92 = scmp.eq.s32.totalorder %s91, 0
    %s94 = sadd.s32 %s93, 1
    %s95 = scalar_select %p92, %s93, %s94
    %p98 = pneg %p92
    %p99 = scmp.eq.s32.totalorder %s17, 1
    %p100 = por %p98, %p99
    %p101 = scmp.ne.s32.totalorder %s93, %s96
    %p102 = scmp.eq.s32.totalorder %s17, 0
    %p103 = por %p101, %p102
    %p104 = scmp.ne.s32.totalorder %s93, %s96
    %p105 = scmp.eq.s32.totalorder %s22, 1
    %p106 = por %p104, %p105
    %p107 = scmp.ne.s32.totalorder %s96, %s97
    %p108 = scmp.eq.s32.totalorder %s22, 0
    %p109 = por %p107, %p108
    %p110 = scmp.ne.s32.totalorder %s96, %s97
    %p111 = scmp.eq.s32.totalorder %s23, 1
    %p112 = por %p110, %p111
    %p114 = scmp.ne.s32.totalorder %s97, %s113
    %p115 = scmp.eq.s32.totalorder %s23, 0
    %p116 = por %p114, %p115
    %s118 = sadd.s32 %s117, 1
    %p121 = scmp.eq.s32.totalorder %s17, 1
    %p122 = scmp.ne.s32.totalorder %s117, %s119
    %p123 = scmp.eq.s32.totalorder %s17, 0
    %p124 = por %p122, %p123
    %p125 = scmp.ne.s32.totalorder %s117, %s119
    %p126 = scmp.eq.s32.totalorder %s22, 1
    %p127 = por %p125, %p126
    %p128 = scmp.ne.s32.totalorder %s119, %s120
    %p129 = scmp.eq.s32.totalorder %s22, 0
    %p130 = por %p128, %p129
    %p131 = scmp.ne.s32.totalorder %s119, %s120
    %p132 = scmp.eq.s32.totalorder %s23, 1
    %p133 = por %p131, %p132
    %p135 = scmp.ne.s32.totalorder %s120, %s134
    %p136 = scmp.eq.s32.totalorder %s23, 0
    %p137 = por %p135, %p136
    %s139 = sadd.s32 %s138, 1
    %p142 = scmp.eq.s32.totalorder %s17, 1
    %p143 = scmp.ne.s32.totalorder %s138, %s140
    %p144 = scmp.eq.s32.totalorder %s17, 0
    %p145 = por %p143, %p144
    %p146 = scmp.ne.s32.totalorder %s138, %s140
    %p147 = scmp.eq.s32.totalorder %s22, 1
    %p148 = por %p146, %p147
    %p149 = scmp.ne.s32.totalorder %s140, %s141
    %p150 = scmp.eq.s32.totalorder %s22, 0
    %p151 = por %p149, %p150
    %p152 = scmp.ne.s32.totalorder %s140, %s141
    %p153 = scmp.eq.s32.totalorder %s23, 1
    %p154 = por %p152, %p153
    %p156 = scmp.ne.s32.totalorder %s141, %s155
    %p157 = scmp.eq.s32.totalorder %s23, 0
    %p158 = por %p156, %p157
    %s160 = sadd.s32 %s159, 1
    %p163 = scmp.eq.s32.totalorder %s17, 1
    %p164 = scmp.ne.s32.totalorder %s159, %s161
    %p165 = scmp.eq.s32.totalorder %s17, 0
    %p166 = por %p164, %p165
    %p167 = scmp.ne.s32.totalorder %s159, %s161
    %p168 = scmp.eq.s32.totalorder %s22, 1
    %p169 = por %p167, %p168
    %p170 = scmp.ne.s32.totalorder %s161, %s162
    %p171 = scmp.eq.s32.totalorder %s22, 0
    %p172 = por %p170, %p171
    %p173 = scmp.ne.s32.totalorder %s161, %s162
    %p174 = scmp.eq.s32.totalorder %s23, 1
    %p175 = por %p173, %p174
    %p177 = scmp.ne.s32.totalorder %s162, %s176
    %p178 = scmp.eq.s32.totalorder %s23, 0
    %p179 = por %p177, %p178
    %s181 = sadd.s32 %s180, 1
    %p184 = scmp.eq.s32.totalorder %s17, 1
    %p185 = scmp.ne.s32.totalorder %s180, %s182
    %p186 = scmp.eq.s32.totalorder %s17, 0
    %p187 = por %p185, %p186
    %p188 = scmp.ne.s32.totalorder %s180, %s182
    %p189 = scmp.eq.s32.totalorder %s22, 1
    %p190 = por %p188, %p189
    %p191 = scmp.ne.s32.totalorder %s182, %s183
    %p192 = scmp.eq.s32.totalorder %s22, 0
    %p193 = por %p191, %p192
    %p194 = scmp.ne.s32.totalorder %s182, %s183
    %p195 = scmp.eq.s32.totalorder %s23, 1
    %p196 = por %p194, %p195
    %p198 = scmp.ne.s32.totalorder %s183, %s197
    %p199 = scmp.eq.s32.totalorder %s23, 0
    %p200 = por %p198, %p199
    %s202 = sadd.s32 %s201, 1
    %p205 = scmp.eq.s32.totalorder %s17, 1
    %p206 = scmp.ne.s32.totalorder %s201, %s203
    %p207 = scmp.eq.s32.totalorder %s17, 0
    %p208 = por %p206, %p207
    %p209 = scmp.ne.s32.totalorder %s201, %s203
    %p210 = scmp.eq.s32.totalorder %s22, 1
    %p211 = por %p209, %p210
    %p212 = scmp.ne.s32.totalorder %s203, %s204
    %p213 = scmp.eq.s32.totalorder %s22, 0
    %p214 = por %p212, %p213
    %p215 = scmp.ne.s32.totalorder %s203, %s204
    %p216 = scmp.eq.s32.totalorder %s23, 1
    %p217 = por %p215, %p216
    %p219 = scmp.ne.s32.totalorder %s204, %s218
    %p220 = scmp.eq.s32.totalorder %s23, 0
    %p221 = por %p219, %p220
    %s223 = sadd.s32 %s222, 1
    %p226 = scmp.eq.s32.totalorder %s17, 1
    %p227 = scmp.ne.s32.totalorder %s222, %s224
    %p228 = scmp.eq.s32.totalorder %s17, 0
    %p229 = por %p227, %p228
    %p230 = scmp.ne.s32.totalorder %s222, %s224
    %p231 = scmp.eq.s32.totalorder %s22, 1
    %p232 = por %p230, %p231
    %p233 = scmp.ne.s32.totalorder %s224, %s225
    %p234 = scmp.eq.s32.totalorder %s22, 0
    %p235 = por %p233, %p234
    %p236 = scmp.ne.s32.totalorder %s224, %s225
    %p237 = scmp.eq.s32.totalorder %s23, 1
    %p238 = por %p236, %p237
    %p240 = scmp.ne.s32.totalorder %s225, %s239
    %p241 = scmp.eq.s32.totalorder %s23, 0
    %p242 = por %p240, %p241
    %s244 = sadd.s32 %s243, 1
    %p247 = scmp.eq.s32.totalorder %s17, 1
    %p248 = scmp.ne.s32.totalorder %s243, %s245
    %p249 = scmp.eq.s32.totalorder %s17, 0
    %p250 = por %p248, %p249
    %p251 = scmp.ne.s32.totalorder %s243, %s245
    %p252 = scmp.eq.s32.totalorder %s22, 1
    %p253 = por %p251, %p252
    %p254 = scmp.ne.s32.totalorder %s245, %s246
    %p255 = scmp.eq.s32.totalorder %s22, 0
    %p256 = por %p254, %p255
    %p257 = scmp.ne.s32.totalorder %s245, %s246
    %p258 = scmp.eq.s32.totalorder %s23, 1
    %p259 = por %p257, %p258
    %p261 = scmp.ne.s32.totalorder %s246, %s260
    %p262 = scmp.eq.s32.totalorder %s23, 0
    %p263 = por %p261, %p262
    %s265 = sadd.s32 %s264, 1
    %p268 = scmp.eq.s32.totalorder %s17, 1
    %p269 = scmp.ne.s32.totalorder %s264, %s266
    %p270 = scmp.eq.s32.totalorder %s17, 0
    %p271 = por %p269, %p270
    %p272 = scmp.ne.s32.totalorder %s264, %s266
    %p273 = scmp.eq.s32.totalorder %s22, 1
    %p274 = por %p272, %p273
    %p275 = scmp.ne.s32.totalorder %s266, %s267
    %p276 = scmp.eq.s32.totalorder %s22, 0
    %p277 = por %p275, %p276
    %p278 = scmp.ne.s32.totalorder %s266, %s267
    %p279 = scmp.eq.s32.totalorder %s23, 1
    %p280 = por %p278, %p279
    %p282 = scmp.ne.s32.totalorder %s267, %s281
    %p283 = scmp.eq.s32.totalorder %s23, 0
    %p284 = por %p282, %p283
    %s285 = ssub.s32 %s24, %s36
    %s286 = ssub.s32 %s25, %s32
    %s287 = sor.u32 %s285, %s286
    %p288 = scmp.eq.s32.totalorder %s287, 0
    %s290 = sadd.s32 %s289, 1
    %s291 = scalar_select %p288, %s289, %s290
    %p294 = pneg %p288
    %p295 = scmp.eq.s32.totalorder %s17, 1
    %p296 = por %p294, %p295
    %p297 = scmp.ne.s32.totalorder %s289, %s292
    %p298 = scmp.eq.s32.totalorder %s17, 0
    %p299 = por %p297, %p298
    %p300 = scmp.ne.s32.totalorder %s289, %s292
    %p301 = scmp.eq.s32.totalorder %s22, 1
    %p302 = por %p300, %p301
    %p303 = scmp.ne.s32.totalorder %s292, %s293
    %p304 = scmp.eq.s32.totalorder %s22, 0
    %p305 = por %p303, %p304
    %p306 = scmp.ne.s32.totalorder %s292, %s293
    %p307 = scmp.eq.s32.totalorder %s23, 1
    %p308 = por %p306, %p307
    %p310 = scmp.ne.s32.totalorder %s293, %s309
    %p311 = scmp.eq.s32.totalorder %s23, 0
    %p312 = por %p310, %p311
    %p313 = scmp.le.s32.totalorder 1, %s17
    %p314 = scmp.lt.s32.totalorder %s17, 3
    %p315 = pnand %p313, %p314
    %p316 = pneg %p315
    // Predicated region
    $region9: #{decoder_forward.8} parent=5 // pred_check
      _
    $region10: #{decoder_forward.8} parent=5 // pred_check_branch
      %318 = sbr.rel (%p315) target = $region12
    $region11: #{decoder_forward.8} parent=5 // pred_region
      %s319 = ssub.s32 %s17, 1
      // Predicated region
      $region13: #{decoder_forward.8} parent=11 // pred_check
        %p320 = pneg %p130
      $region14: #{decoder_forward.8} parent=11 // pred_check_branch
        %322 = sbr.rel (%p320) target = $region16
      $region15: #{decoder_forward.8} parent=11 // pred_region
        _
      $region16: #{decoder_forward.8} parent=11 // pred_fallthru
        _
      // Predicated region
      $region17: #{decoder_forward.8} parent=11 // pred_check
        %p323 = pneg %p151
      $region18: #{decoder_forward.8} parent=11 // pred_check_branch
        %325 = sbr.rel (%p323) target = $region20
      $region19: #{decoder_forward.8} parent=11 // pred_region
        _
      $region20: #{decoder_forward.8} parent=11 // pred_fallthru
        _
      // Predicated region
      $region21: #{decoder_forward.8} parent=11 // pred_check
        %p326 = pneg %p172
      $region22: #{decoder_forward.8} parent=11 // pred_check_branch
        %328 = sbr.rel (%p326) target = $region24
      $region23: #{decoder_forward.8} parent=11 // pred_region
        _
      $region24: #{decoder_forward.8} parent=11 // pred_fallthru
        _
      // Predicated region
      $region25: #{decoder_forward.8} parent=11 // pred_check
        %p329 = pneg %p193
      $region26: #{decoder_forward.8} parent=11 // pred_check_branch
        %331 = sbr.rel (%p329) target = $region28
      $region27: #{decoder_forward.8} parent=11 // pred_region
        _
      $region28: #{decoder_forward.8} parent=11 // pred_fallthru
        _
      // Predicated region
      $region29: #{decoder_forward.8} parent=11 // pred_check
        %p332 = pneg %p214
      $region30: #{decoder_forward.8} parent=11 // pred_check_branch
        %334 = sbr.rel (%p332) target = $region32
      $region31: #{decoder_forward.8} parent=11 // pred_region
        _
      $region32: #{decoder_forward.8} parent=11 // pred_fallthru
        _
      // Predicated region
      $region33: #{decoder_forward.8} parent=11 // pred_check
        %p335 = pneg %p235
      $region34: #{decoder_forward.8} parent=11 // pred_check_branch
        %337 = sbr.rel (%p335) target = $region36
      $region35: #{decoder_forward.8} parent=11 // pred_region
        _
      $region36: #{decoder_forward.8} parent=11 // pred_fallthru
        _
      // Predicated region
      $region37: #{decoder_forward.8} parent=11 // pred_check
        %p338 = pneg %p256
      $region38: #{decoder_forward.8} parent=11 // pred_check_branch
        %340 = sbr.rel (%p338) target = $region40
      $region39: #{decoder_forward.8} parent=11 // pred_region
        _
      $region40: #{decoder_forward.8} parent=11 // pred_fallthru
        _
      // Predicated region
      $region41: #{decoder_forward.8} parent=11 // pred_check
        %p341 = pneg %p277
      $region42: #{decoder_forward.8} parent=11 // pred_check_branch
        %343 = sbr.rel (%p341) target = $region44
      $region43: #{decoder_forward.8} parent=11 // pred_region
        _
      $region44: #{decoder_forward.8} parent=11 // pred_fallthru
        _
    $region12: #{decoder_forward.8} parent=5 // pred_fallthru
      _
    %p344 = scmp.lt.s32.totalorder %s17, 2
    // Predicated region
    $region45: #{decoder_forward.8} parent=5 // pred_check
      %p345 = pneg %p344
    $region46: #{decoder_forward.8} parent=5 // pred_check_branch
      %347 = sbr.rel (%p345) target = $region48
    $region47: #{decoder_forward.8} parent=5 // pred_region
      // Predicated region
      $region49: #{decoder_forward.8} parent=47 // pred_check
        %p348 = pneg %p51
      $region50: #{decoder_forward.8} parent=47 // pred_check_branch
        %350 = sbr.rel (%p348) target = $region52
      $region51: #{decoder_forward.8} parent=47 // pred_region
        %p351 = scmp.lt.s32.totalorder %s24, 1
        %s352 = scalar_select %p351, %s24, 1
        %p353 = scmp.lt.s32.totalorder %s25, 0
        %s354 = scalar_select %p353, %s25, 0
        %s355 = sadd.s32 %s354, %s352
        %s356 = smul.addr %s355, 8
        %s357 = scalar_lea.vmem %s0, %s356
      $region52: #{decoder_forward.8} parent=47 // pred_fallthru
        _
      // Predicated region
      $region53: #{decoder_forward.8} parent=47 // pred_check
        %p358 = pneg %p77
      $region54: #{decoder_forward.8} parent=47 // pred_check_branch
        %360 = sbr.rel (%p358) target = $region56
      $region55: #{decoder_forward.8} parent=47 // pred_region
        %p361 = scmp.lt.s32.totalorder %s24, 1
        %s362 = scalar_select %p361, %s24, 1
        %s363 = smul.addr %s362, 8
        %s364 = scalar_lea.vmem %s1, %s363
      $region56: #{decoder_forward.8} parent=47 // pred_fallthru
        _
      // Predicated region
      $region57: #{decoder_forward.8} parent=47 // pred_check
        %p365 = pneg %p103
      $region58: #{decoder_forward.8} parent=47 // pred_check_branch
        %367 = sbr.rel (%p365) target = $region60
      $region59: #{decoder_forward.8} parent=47 // pred_region
        %p368 = scmp.lt.s32.totalorder %s24, 1
        %s369 = scalar_select %p368, %s24, 1
        %s370 = scalar_lea.vmem %s2, %s369
      $region60: #{decoder_forward.8} parent=47 // pred_fallthru
        _
    $region48: #{decoder_forward.8} parent=5 // pred_fallthru
      _
    %p371 = scmp.le.s32.totalorder 1, %s17
    %p372 = scmp.lt.s32.totalorder %s17, 3
    %p373 = pnand %p371, %p372
    %p374 = pneg %p373
    // Predicated region
    $region61: #{decoder_forward.8} parent=5 // pred_check
      _
    $region62: #{decoder_forward.8} parent=5 // pred_check_branch
      %376 = sbr.rel (%p373) target = $region64
    $region63: #{decoder_forward.8} parent=5 // pred_region
      %s377 = ssub.s32 %s17, 1
      %p378 = scmp.lt.s32.totalorder %s26, 1
      %s379 = scalar_select %p378, %s26, 1
      %p380 = scmp.lt.s32.totalorder %s27, 0
      %s381 = scalar_select %p380, %s27, 0
      %s382 = sadd.s32 %s381, %s379
      %s383 = smul.addr %s382, 8
      %s384 = scalar_lea.vmem %s0, %s383
      %p385 = pneg %p57
      %p386 = pneg %p54
      %p387 = scmp.lt.s32.totalorder %s26, 1
      %s388 = scalar_select %p387, %s26, 1
      %s389 = smul.addr %s388, 8
      %s390 = scalar_lea.vmem %s1, %s389
      %p391 = pneg %p83
      %p392 = pneg %p80
      %p393 = scmp.lt.s32.totalorder %s26, 1
      %s394 = scalar_select %p393, %s26, 1
      %s395 = scalar_lea.vmem %s2, %s394
      %p396 = pneg %p109
      %p397 = pneg %p106
      %p398 = pneg %p130
      %p399 = pneg %p127
      %p400 = pneg %p151
      %p401 = pneg %p148
      %p402 = pneg %p172
      %p403 = pneg %p169
      %p404 = pneg %p193
      %p405 = pneg %p190
      %p406 = pneg %p214
      %p407 = pneg %p211
      %p408 = pneg %p235
      %p409 = pneg %p232
      %p410 = pneg %p256
      %p411 = pneg %p253
      %p412 = pneg %p277
      %p413 = pneg %p274
      %p414 = pneg %p305
      %p415 = pneg %p302
      %p416 = scmp.lt.s32.totalorder %s26, 1
      %s417 = scalar_select %p416, %s26, 1
      %p418 = scmp.lt.s32.totalorder %s27, 0
      %s419 = scalar_select %p418, %s27, 0
      %s420 = sadd.s32 %s419, %s417
      %s421 = smul.addr %s420, 8
      %s422 = scalar_lea.vmem %s11, %s421
      %p423 = scmp.lt.s32.totalorder %s26, 1
      %s424 = scalar_select %p423, %s26, 1
      %p425 = scmp.lt.s32.totalorder %s27, 0
      %s426 = scalar_select %p425, %s27, 0
      %s427 = sadd.s32 %s426, %s424
      %s428 = smul.addr %s427, 8
      %s429 = scalar_lea.vmem %s0, %s428
      %p430 = scmp.lt.s32.totalorder %s26, 1
      %s431 = scalar_select %p430, %s26, 1
      %s432 = smul.addr %s431, 8
      %s433 = scalar_lea.vmem %s1, %s432
      %p434 = scmp.lt.s32.totalorder %s26, 1
      %s435 = scalar_select %p434, %s26, 1
      %s436 = scalar_lea.vmem %s2, %s435
      %p437 = scmp.lt.s32.totalorder %s26, 1
      %s438 = scalar_select %p437, %s26, 1
      %p439 = scmp.lt.s32.totalorder %s27, 0
      %s440 = scalar_select %p439, %s27, 0
      %s441 = sadd.s32 %s440, %s438
      %s442 = smul.addr %s441, 8
      %s443 = scalar_lea.vmem %s11, %s442
      %v445 = vld [vmem:[%s429] sm:$0xff]
      %v446 = vld [vmem:[%s433] sm:$0xff]
      %v447 = vld [vmem:[%s436] sm:$0x1]
      %v448 = vpack.c.bf16 %v445, %v445
      %v449 = vld [vmem:[%s3] sm:$0xf]
      %v450 = vld [vmem:[%s3 + $0x4] sm:$0xf]
      %v451 = vld [vmem:[%s3 + $0x8] sm:$0xf]
      %v452 = vld [vmem:[%s3 + $0xc] sm:$0xf]
      %v453 = vld [vmem:[%s4] sm:$0x1]
      %v455 = vperm.slane %v453, 0
      %v461 = vunpack.c.l.b16 %v449
      %v462 = vunpack.c.l.b16 %v450
      %v463 = vunpack.c.l.b16 %v451
      %v464 = vunpack.c.l.b16 %v452
      %v465 = vpack.c.b16 %v462, %v461
      %v466 = vpack.c.b16 %v464, %v463
      %vm469 = vcmask 261120
      %v471 = vsel %vm469, %v448, 0
      %473 = vmatpush.bf16.msra.mxu0 0
      %474 = vmatpush.bf16.msra.mxu0 0
      %475 = vmatpush.bf16.msra.mxu0 0
      %476 = vmatpush.bf16.msra.mxu0 0
      %477 = vmatpush.bf16.msra.mxu0 0
      %478 = vmatpush.bf16.msra.mxu0 0
      %479 = vmatpush.bf16.msra.mxu0 %v466
      %480 = vmatpush.bf16.msra.mxu0 %v465
      %481 = vmatmul.bf16.gmra.mxu0 %v471
      %v482 = vpop.f32.mrf.mxu0
      %v483 = vadd.f32 %v455, %v482
      %v484 = vpop.f32.mrf.mxu0
      %485 = vdwg.mxu0
      %v486 = vpack.c.bf16 %v446, %v446
      %v487 = vld [vmem:[%s5] sm:$0xf]
      %v488 = vld [vmem:[%s5 + $0x4] sm:$0xf]
      %v489 = vld [vmem:[%s5 + $0x8] sm:$0xf]
      %v490 = vld [vmem:[%s5 + $0xc] sm:$0xf]
      %v491 = vld [vmem:[%s6] sm:$0x1]
      %v493 = vperm.slane %v491, 0
      %v499 = vunpack.c.l.b16 %v487
      %v500 = vunpack.c.l.b16 %v488
      %v501 = vunpack.c.l.b16 %v489
      %v502 = vunpack.c.l.b16 %v490
      %v503 = vpack.c.b16 %v500, %v499
      %v504 = vpack.c.b16 %v502, %v501
      %v508 = vsel %vm469, %v486, 0
      %510 = vmatpush.bf16.msra.mxu0 0
      %511 = vmatpush.bf16.msra.mxu0 0
      %512 = vmatpush.bf16.msra.mxu0 0
      %513 = vmatpush.bf16.msra.mxu0 0
      %514 = vmatpush.bf16.msra.mxu0 0
      %515 = vmatpush.bf16.msra.mxu0 0
      %516 = vmatpush.bf16.msra.mxu0 %v504
      %517 = vmatpush.bf16.msra.mxu0 %v503
      %518 = vmatmul.bf16.gmra.mxu0 %v508
      %v519 = vpop.f32.mrf.mxu0
      %v520 = vadd.f32 %v493, %v519
      %v521 = vpop.f32.mrf.mxu0
      %522 = vdwg.mxu0
      %v523 = vpack.c.bf16 %v483, %v483
      %v524 = vpack.c.bf16 %v520, %v520
      %vm525 = vcmask 64512
      %v527 = vsel %vm525, %v523, 0
      %v530 = vsel %vm525, %v524, 0
      %532 = vmatpush.bf16.xpose.msra.mxu0 0
      %533 = vmatpush.bf16.xpose.msra.mxu0 0
      %534 = vmatpush.bf16.xpose.msra.mxu0 0
      %535 = vmatpush.bf16.xpose.msra.mxu0 0
      %536 = vmatpush.bf16.xpose.msra.mxu0 0
      %537 = vmatpush.bf16.xpose.msra.mxu0 0
      %538 = vmatpush.bf16.xpose.msra.mxu0 0
      %539 = vmatpush.bf16.xpose.msra.mxu0 %v530
      %540 = vmatmul.bf16.gmra.mxu0 %v527
      %v541 = vpop.f32.mrf.mxu0
      %v542 = vadd.f32 0.0, %v541
      %v543 = vpop.f32.mrf.mxu0
      %544 = vdwg.mxu0
      %v545 = vmul.f32 %v542, 0.35355338
      %v547 = vperm.slane %v447, 0
      %v549 = vadd.f32 %v545, %v547
      %v550 = vsel %vm525, %v549, -inf
      %551 = vmax.xlane.f32.xlu0 %v550
      %v552 = vpop.xlane.xlu0 %551
      %v553 = vsub.f32 %v549, %v552
      %v554 = vmul.f32 %v553, 1.442695
      %v555 = vpow.pop %v554
      %v556 = vsel %vm525, %v555, 0.0
      %557 = vadd.xlane.f32.xlu0 %v556
      %v558 = vpop.xlane.xlu0 %557
      %v559 = vrcp.pop %v558
      %v560 = vmul.f32 %v558, %v559
      %v561 = vsub.f32 1.0, %v560
      %v562 = vmul.f32 %v559, %v561
      %v563 = vadd.f32 %v559, %v562
      %vm564 = vweird.f32 %v558
      %vm565 = vweird.f32 %v559
      %vm566 = vmor %vm564, %vm565
      %v567 = vsel %vm566, %v559, %v563
      %v568 = vand.u32 2147483647, %v558
      %vm569 = vcmp.eq.f32.partialorder %v568, 8.507059e+37
      %v570 = vand.u32 %v558, 2147483648
      %v571 = vor.u32 1.1754944e-38, %v570
      %v572 = vsel %vm569, %v571, %v567
      %v573 = vmul.f32 %v555, %v572
      %v574 = vpack.c.bf16 %v573, %v573
      %576 = vrot.lane.b32.xlu0 %v524, 96
      %v577 = vpop.permute.xlu0 %576
      %v579 = vsel %vm525, %v574, 0
      %vm581 = vcmask 1043456
      %v583 = vsel %vm581, %v577, 0
      %585 = vmatpush.bf16.msra.mxu0 0
      %586 = vmatpush.bf16.msra.mxu0 0
      %587 = vmatpush.bf16.msra.mxu0 0
      %588 = vmatpush.bf16.msra.mxu0 0
      %589 = vmatpush.bf16.msra.mxu0 0
      %590 = vmatpush.bf16.msra.mxu0 0
      %591 = vmatpush.bf16.msra.mxu0 0
      %592 = vmatpush.bf16.msra.mxu0 %v583
      %593 = vmatmul.bf16.gmra.mxu0 %v579
      %v594 = vpop.f32.mrf.mxu0
      %v595 = vadd.f32 0.0, %v594
      %v596 = vpop.f32.mrf.mxu0
      %597 = vdwg.mxu0
      %598 = vst.msk [vmem:[#allocation2] sm:$0xff] %vm525, %v595
      %600 = vrot.lane.b32.xlu0 %v523, 120
      %v601 = vpop.permute.xlu0 %600
      %602 = vrot.lane.b32.xlu0 %v524, 120
      %v603 = vpop.permute.xlu0 %602
      %v605 = vsel %vm525, %v601, 0
      %v608 = vsel %vm525, %v603, 0
      %610 = vmatpush.bf16.xpose.msra.mxu0 0
      %611 = vmatpush.bf16.xpose.msra.mxu0 0
      %612 = vmatpush.bf16.xpose.msra.mxu0 0
      %613 = vmatpush.bf16.xpose.msra.mxu0 0
      %614 = vmatpush.bf16.xpose.msra.mxu0 0
      %615 = vmatpush.bf16.xpose.msra.mxu0 0
      %616 = vmatpush.bf16.xpose.msra.mxu0 0
      %617 = vmatpush.bf16.xpose.msra.mxu0 %v608
      %618 = vmatmul.bf16.gmra.mxu0 %v605
      %v619 = vpop.f32.mrf.mxu0
      %v620 = vadd.f32 0.0, %v619
      %v621 = vpop.f32.mrf.mxu0
      %622 = vdwg.mxu0
      %v623 = vmul.f32 %v620, 0.35355338
      %v624 = vadd.f32 %v623, %v547
      %v625 = vsel %vm525, %v624, -inf
      %626 = vmax.xlane.f32.xlu0 %v625
      %v627 = vpop.xlane.xlu0 %626
      %v628 = vsub.f32 %v624, %v627
      %v629 = vmul.f32 %v628, 1.442695
      %v630 = vpow.pop %v629
      %v631 = vsel %vm525, %v630, 0.0
      %632 = vadd.xlane.f32.xlu0 %v631
      %v633 = vpop.xlane.xlu0 %632
      %v634 = vrcp.pop %v633
      %v635 = vmul.f32 %v633, %v634
      %v636 = vsub.f32 1.0, %v635
      %v637 = vmul.f32 %v634, %v636
      %v638 = vadd.f32 %v634, %v637
      %vm639 = vweird.f32 %v633
      %vm640 = vweird.f32 %v634
      %vm641 = vmor %vm639, %vm640
      %v642 = vsel %vm641, %v634, %v638
      %v643 = vand.u32 2147483647, %v633
      %vm644 = vcmp.eq.f32.partialorder %v643, 8.507059e+37
      %v645 = vand.u32 %v633, 2147483648
      %v646 = vor.u32 1.1754944e-38, %v645
      %v647 = vsel %vm644, %v646, %v642
      %v648 = vmul.f32 %v630, %v647
      %v649 = vpack.c.bf16 %v648, %v648
      %650 = vrot.lane.b32.xlu0 %v524, 88
      %v651 = vpop.permute.xlu0 %650
      %v653 = vsel %vm525, %v649, 0
      %v656 = vsel %vm581, %v651, 0
      %658 = vmatpush.bf16.msra.mxu0 0
      %659 = vmatpush.bf16.msra.mxu0 0
      %660 = vmatpush.bf16.msra.mxu0 0
      %661 = vmatpush.bf16.msra.mxu0 0
      %662 = vmatpush.bf16.msra.mxu0 0
      %663 = vmatpush.bf16.msra.mxu0 0
      %664 = vmatpush.bf16.msra.mxu0 0
      %665 = vmatpush.bf16.msra.mxu0 %v656
      %666 = vmatmul.bf16.gmra.mxu0 %v653
      %v667 = vpop.f32.mrf.mxu0
      %v668 = vadd.f32 0.0, %v667
      %v669 = vpop.f32.mrf.mxu0
      %670 = vdwg.mxu0
      %672 = vrot.lane.b32.xlu0 %v668, 8
      %v673 = vpop.permute.xlu0 %672
      %vm675 = vcmask 130112
      %676 = vst.msk [vmem:[#allocation2] sm:$0xff] %vm675, %v673
      %677 = vrot.lane.b32.xlu0 %v523, 112
      %v678 = vpop.permute.xlu0 %677
      %679 = vrot.lane.b32.xlu0 %v524, 112
      %v680 = vpop.permute.xlu0 %679
      %v682 = vsel %vm525, %v678, 0
      %v685 = vsel %vm525, %v680, 0
      %687 = vmatpush.bf16.xpose.msra.mxu0 0
      %688 = vmatpush.bf16.xpose.msra.mxu0 0
      %689 = vmatpush.bf16.xpose.msra.mxu0 0
      %690 = vmatpush.bf16.xpose.msra.mxu0 0
      %691 = vmatpush.bf16.xpose.msra.mxu0 0
      %692 = vmatpush.bf16.xpose.msra.mxu0 0
      %693 = vmatpush.bf16.xpose.msra.mxu0 0
      %694 = vmatpush.bf16.xpose.msra.mxu0 %v685
      %695 = vmatmul.bf16.gmra.mxu0 %v682
      %v696 = vpop.f32.mrf.mxu0
      %v697 = vadd.f32 0.0, %v696
      %v698 = vpop.f32.mrf.mxu0
      %699 = vdwg.mxu0
      %v700 = vmul.f32 %v697, 0.35355338
      %v701 = vadd.f32 %v700, %v547
      %v702 = vsel %vm525, %v701, -inf
      %703 = vmax.xlane.f32.xlu0 %v702
      %v704 = vpop.xlane.xlu0 %703
      %v705 = vsub.f32 %v701, %v704
      %v706 = vmul.f32 %v705, 1.442695
      %v707 = vpow.pop %v706
      %v708 = vsel %vm525, %v707, 0.0
      %709 = vadd.xlane.f32.xlu0 %v708
      %v710 = vpop.xlane.xlu0 %709
      %v711 = vrcp.pop %v710
      %v712 = vmul.f32 %v710, %v711
      %v713 = vsub.f32 1.0, %v712
      %v714 = vmul.f32 %v711, %v713
      %v715 = vadd.f32 %v711, %v714
      %vm716 = vweird.f32 %v710
      %vm717 = vweird.f32 %v711
      %vm718 = vmor %vm716, %vm717
      %v719 = vsel %vm718, %v711, %v715
      %v720 = vand.u32 2147483647, %v710
      %vm721 = vcmp.eq.f32.partialorder %v720, 8.507059e+37
      %v722 = vand.u32 %v710, 2147483648
      %v723 = vor.u32 1.1754944e-38, %v722
      %v724 = vsel %vm721, %v723, %v719
      %v725 = vmul.f32 %v707, %v724
      %v726 = vpack.c.bf16 %v725, %v725
      %727 = vrot.lane.b32.xlu0 %v524, 80
      %v728 = vpop.permute.xlu0 %727
      %v730 = vsel %vm525, %v726, 0
      %v733 = vsel %vm581, %v728, 0
      %735 = vmatpush.bf16.msra.mxu0 0
      %736 = vmatpush.bf16.msra.mxu0 0
      %737 = vmatpush.bf16.msra.mxu0 0
      %738 = vmatpush.bf16.msra.mxu0 0
      %739 = vmatpush.bf16.msra.mxu0 0
      %740 = vmatpush.bf16.msra.mxu0 0
      %741 = vmatpush.bf16.msra.mxu0 0
      %742 = vmatpush.bf16.msra.mxu0 %v733
      %743 = vmatmul.bf16.gmra.mxu0 %v730
      %v744 = vpop.f32.mrf.mxu0
      %v745 = vadd.f32 0.0, %v744
      %v746 = vpop.f32.mrf.mxu0
      %747 = vdwg.mxu0
      %749 = vrot.lane.b32.xlu0 %v745, 16
      %v750 = vpop.permute.xlu0 %749
      %vm752 = vcmask 195712
      %753 = vst.msk [vmem:[#allocation2] sm:$0xff] %vm752, %v750
      %754 = vrot.lane.b32.xlu0 %v523, 104
      %v755 = vpop.permute.xlu0 %754
      %756 = vrot.lane.b32.xlu0 %v524, 104
      %v757 = vpop.permute.xlu0 %756
      %v759 = vsel %vm525, %v755, 0
      %v762 = vsel %vm525, %v757, 0
      %764 = vmatpush.bf16.xpose.msra.mxu0 0
      %765 = vmatpush.bf16.xpose.msra.mxu0 0
      %766 = vmatpush.bf16.xpose.msra.mxu0 0
      %767 = vmatpush.bf16.xpose.msra.mxu0 0
      %768 = vmatpush.bf16.xpose.msra.mxu0 0
      %769 = vmatpush.bf16.xpose.msra.mxu0 0
      %770 = vmatpush.bf16.xpose.msra.mxu0 0
      %771 = vmatpush.bf16.xpose.msra.mxu0 %v762
      %772 = vmatmul.bf16.gmra.mxu0 %v759
      %v773 = vpop.f32.mrf.mxu0
      %v774 = vadd.f32 0.0, %v773
      %v775 = vpop.f32.mrf.mxu0
      %776 = vdwg.mxu0
      %v777 = vmul.f32 %v774, 0.35355338
      %v778 = vadd.f32 %v777, %v547
      %v779 = vsel %vm525, %v778, -inf
      %780 = vmax.xlane.f32.xlu0 %v779
      %v781 = vpop.xlane.xlu0 %780
      %v782 = vsub.f32 %v778, %v781
      %v783 = vmul.f32 %v782, 1.442695
      %v784 = vpow.pop %v783
      %v785 = vsel %vm525, %v784, 0.0
      %786 = vadd.xlane.f32.xlu0 %v785
      %v787 = vpop.xlane.xlu0 %786
      %v788 = vrcp.pop %v787
      %v789 = vmul.f32 %v787, %v788
      %v790 = vsub.f32 1.0, %v789
      %v791 = vmul.f32 %v788, %v790
      %v792 = vadd.f32 %v788, %v791
      %vm793 = vweird.f32 %v787
      %vm794 = vweird.f32 %v788
      %vm795 = vmor %vm793, %vm794
      %v796 = vsel %vm795, %v788, %v792
      %v797 = vand.u32 2147483647, %v787
      %vm798 = vcmp.eq.f32.partialorder %v797, 8.507059e+37
      %v799 = vand.u32 %v787, 2147483648
      %v800 = vor.u32 1.1754944e-38, %v799
      %v801 = vsel %vm798, %v800, %v796
      %v802 = vmul.f32 %v784, %v801
      %v803 = vpack.c.bf16 %v802, %v802
      %804 = vrot.lane.b32.xlu0 %v524, 72
      %v805 = vpop.permute.xlu0 %804
      %v807 = vsel %vm525, %v803, 0
      %v810 = vsel %vm581, %v805, 0
      %812 = vmatpush.bf16.msra.mxu0 0
      %813 = vmatpush.bf16.msra.mxu0 0
      %814 = vmatpush.bf16.msra.mxu0 0
      %815 = vmatpush.bf16.msra.mxu0 0
      %816 = vmatpush.bf16.msra.mxu0 0
      %817 = vmatpush.bf16.msra.mxu0 0
      %818 = vmatpush.bf16.msra.mxu0 0
      %819 = vmatpush.bf16.msra.mxu0 %v810
      %820 = vmatmul.bf16.gmra.mxu0 %v807
      %v821 = vpop.f32.mrf.mxu0
      %v822 = vadd.f32 0.0, %v821
      %v823 = vpop.f32.mrf.mxu0
      %824 = vdwg.mxu0
      %826 = vrot.lane.b32.xlu0 %v822, 24
      %v827 = vpop.permute.xlu0 %826
      %vm829 = vcmask 261312
      %830 = vst.msk [vmem:[#allocation2] sm:$0xff] %vm829, %v827
      %v831 = vld [vmem:[#allocation2] sm:$0xff]
      %v832 = vpack.c.bf16 %v831, %v831
      %v833 = vld [vmem:[%s7] sm:$0xf]
      %v834 = vld [vmem:[%s7 + $0x4] sm:$0xf]
      %v835 = vld [vmem:[%s7 + $0x8] sm:$0xf]
      %v836 = vld [vmem:[%s7 + $0xc] sm:$0xf]
      %v837 = vld [vmem:[%s8] sm:$0x1]
      %v839 = vperm.slane %v837, 0
      %v845 = vunpack.c.l.b16 %v833
      %v846 = vunpack.c.l.b16 %v834
      %v847 = vunpack.c.l.b16 %v835
      %v848 = vunpack.c.l.b16 %v836
      %v849 = vpack.c.b16 %v846, %v845
      %v850 = vpack.c.b16 %v848, %v847
      %v854 = vsel %vm469, %v832, 0
      %856 = vmatpush.bf16.msra.mxu0 0
      %857 = vmatpush.bf16.msra.mxu0 0
      %858 = vmatpush.bf16.msra.mxu0 0
      %859 = vmatpush.bf16.msra.mxu0 0
      %860 = vmatpush.bf16.msra.mxu0 0
      %861 = vmatpush.bf16.msra.mxu0 0
      %862 = vmatpush.bf16.msra.mxu0 %v850
      %863 = vmatpush.bf16.msra.mxu0 %v849
      %864 = vmatmul.bf16.gmra.mxu0 %v854
      %v865 = vpop.f32.mrf.mxu0
      %v866 = vadd.f32 %v839, %v865
      %v867 = vpop.f32.mrf.mxu0
      %868 = vdwg.mxu0
      %v869 = vadd.f32 %v445, %v866
      %v870 = vsel %vm469, %v869, 0.0
      %871 = vadd.xlane.f32.xlu0 %v870
      %v872 = vpop.xlane.xlu0 %871
      %v873 = vrcp.pop 32.0
      %v874 = vmul.f32 32.0, %v873
      %v875 = vsub.f32 1.0, %v874
      %v876 = vmul.f32 %v873, %v875
      %v877 = vadd.f32 %v873, %v876
      %vm878 = vweird.f32 %v873
      %v879 = vsel %vm878, %v873, %v877
      %v880 = vmul.f32 %v872, %v879
      %v881 = vsub.f32 %v869, %v880
      %v882 = vmul.f32 %v881, %v881
      %v883 = vsel %vm469, %v882, 0.0
      %884 = vadd.xlane.f32.xlu0 %v883
      %v885 = vpop.xlane.xlu0 %884
      %v886 = vmul.f32 %v885, %v879
      %v887 = vadd.f32 %v886, 1e-05
      %v888 = vrsqrt.pop %v887
      %v889 = vmul.f32 %v888, %v887
      %v890 = vmul.f32 %v889, %v888
      %v891 = vmul.f32 0.5, %v890
      %v892 = vsub.f32 1.5, %v891
      %v893 = vmul.f32 %v888, %v892
      %vm894 = vweird.f32 %v887
      %vm895 = vweird.f32 %v888
      %vm896 = vmor %vm894, %vm895
      %v897 = vsel %vm896, %v888, %v893
      %v898 = vmul.f32 %v881, %v897
      %v899 = vld [vmem:[%s9] sm:$0x1]
      %v901 = vperm.slane %v899, 0
      %v903 = vmul.f32 %v898, %v901
      %v904 = vld [vmem:[%s10] sm:$0x1]
      %v906 = vperm.slane %v904, 0
      %v908 = vadd.f32 %v903, %v906
      %909 = vst.msk [vmem:[%s443] sm:$0xff] %vm469, %v908
      %p910 = scmp.lt.s32.totalorder %s26, 1
      %s911 = scalar_select %p910, %s26, 1
      %p912 = scmp.lt.s32.totalorder %s27, 0
      %s913 = scalar_select %p912, %s27, 0
      %s914 = sadd.s32 %s913, %s911
      %s915 = smul.addr %s914, 8
      %s916 = scalar_lea.vmem %s11, %s915
      // Predicated region
      $region65: #{decoder_forward.8} parent=63 // pred_check
        %p917 = pneg %p302
      $region66: #{decoder_forward.8} parent=63 // pred_check_branch
        %919 = sbr.rel (%p917) target = $region68
      $region67: #{decoder_forward.8} parent=63 // pred_region
        _
      $region68: #{decoder_forward.8} parent=63 // pred_fallthru
        _
    $region64: #{decoder_forward.8} parent=5 // pred_fallthru
      _
    %p920 = scmp.le.s32.totalorder 2, %s17
    // Predicated region
    $region69: #{decoder_forward.8} parent=5 // pred_check
      %p921 = pneg %p920
    $region70: #{decoder_forward.8} parent=5 // pred_check_branch
      %923 = sbr.rel (%p921) target = $region72
    $region71: #{decoder_forward.8} parent=5 // pred_region
      %s924 = ssub.s32 %s17, 2
      // Predicated region
      $region73: #{decoder_forward.8} parent=71 // pred_check
        %p925 = pneg %p308
      $region74: #{decoder_forward.8} parent=71 // pred_check_branch
        %927 = sbr.rel (%p925) target = $region76
      $region75: #{decoder_forward.8} parent=71 // pred_region
        %p928 = scmp.lt.s32.totalorder %s28, 1
        %s929 = scalar_select %p928, %s28, 1
        %p930 = scmp.lt.s32.totalorder %s29, 0
        %s931 = scalar_select %p930, %s29, 0
        %s932 = sadd.s32 %s931, %s929
        %s933 = smul.addr %s932, 8
        %s934 = scalar_lea.vmem %s11, %s933
      $region76: #{decoder_forward.8} parent=71 // pred_fallthru
        _
    $region72: #{decoder_forward.8} parent=5 // pred_fallthru
      _
  $region6: #{decoder_forward.8} parent=0 // loop_footer
    %s21 = sadd.s32 1, %s17
  $region7: #{decoder_forward.8} parent=0 // loop_footer_branch
    %16 = sbr.rel target = $region3
  $region8: #{decoder_forward.8} parent=0 // loop_exit
    _

// kernel: decoder_forward.11
$region0: #{decoder_forward.11}
  #allocation0 [shape = 'u32[]', space=smem, size = 0x4, offset = 0x4, fixed_abs, tag = 'smem constant byte address 0x4 - core index']
  #allocation1 [shape = 'u32[72,128]{1,0:T(1,128)}', space=vmem, size = 0x9000, scoped, tag = 'internal scratch']
  #allocation2 [shape = 'f32[8,32]{1,0:T(8,128)}', space=vmem, size = 0x1000, scoped, tag = 'scratch operand']
  %s0 = inlined_call_operand.vmem [shape: f32[2,8,32], index: 0, kind: input, shape index: {}]
  %s1 = inlined_call_operand.vmem [shape: f32[2,8,32], index: 1, kind: input, shape index: {}]
  %s2 = inlined_call_operand.vmem [shape: f32[2,1,8], index: 2, kind: input, shape index: {}]
  %s3 = inlined_call_operand.vmem [shape: bf16[32,32], index: 3, kind: input, shape index: {}]
  %s4 = inlined_call_operand.vmem [shape: f32[1,32], index: 4, kind: input, shape index: {}]
  %s5 = inlined_call_operand.vmem [shape: bf16[32,64], index: 5, kind: input, shape index: {}]
  %s6 = inlined_call_operand.vmem [shape: f32[1,64], index: 6, kind: input, shape index: {}]
  %s7 = inlined_call_operand.vmem [shape: bf16[32,32], index: 7, kind: input, shape index: {}]
  %s8 = inlined_call_operand.hbm [shape: f32[1,32], index: 8, kind: input, shape index: {}]
  %s9 = inlined_call_operand.hbm [shape: f32[1,32], index: 9, kind: input, shape index: {}]
  %s10 = inlined_call_operand.hbm [shape: f32[1,32], index: 10, kind: input, shape index: {}]
  %s11 = inlined_call_operand.vmem [shape: f32[2,8,32], index: 11, kind: output, shape index: {}]
  %s12 = sld [smem:[#allocation0]]
  $region89: #{decoder_forward.11} parent=0
    _
  %s14 = ssub.s32 1, %s12
  %s15 = scalar_select 0, %s14, %s12
  $region1: #{decoder_forward.11} parent=0
    #allocation3 [shape = 'u8[512]{0}', space=vmem, size = 0x400, scoped, tag = 'input window, operand 8, single buffered']
    #allocation4 [shape = 's32[2]{0}', space=sflag, size = 0x8, scoped, tag = 'scoped memory for decoder_forward.11']
    #allocation5 [shape = 'u8[512]{0}', space=vmem, size = 0x400, scoped, tag = 'input window, operand 9, single buffered']
    #allocation6 [shape = 's32[1]{0}', space=sflag, size = 0x4, scoped, tag = 'scoped memory for decoder_forward.11']
    #allocation7 [shape = 'u8[512]{0}', space=vmem, size = 0x400, scoped, tag = 'input window, operand 10, single buffered']
    %16 = vsyncpa [#allocation4], 0
    %17 = vsyncpa [#allocation6], 0
    loop: start=0, step=1, limit=4
    $region2: #{decoder_forward.11} parent=1 // loop_pre_header
      _
    $region3: #{decoder_forward.11} parent=1 // loop_header
      %s19 = sphi 0, %s23
      %p20 = scmp.ge.s32.totalorder %s19, 4
      %s26 = sphi 0, %s38
      %s27 = sphi 0, %s34
      %s28 = sphi 0, %s26
      %s29 = sphi 0, %s27
      %s30 = sphi 0, %s28
      %s31 = sphi 0, %s29
      %s43 = sphi 0, %s45
      %s46 = sphi 0, %s43
      %s47 = sphi 0, %s46
      %s63 = sphi 0, %s47
      %s69 = sphi 0, %s71
      %s72 = sphi 0, %s69
      %s73 = sphi 0, %s72
      %s89 = sphi 0, %s73
      %s95 = sphi 0, %s97
      %s98 = sphi 0, %s95
      %s99 = sphi 0, %s98
      %s115 = sphi 0, %s99
      %s119 = sphi 0, %s119
      %s121 = sphi 0, %s119
      %s122 = sphi 0, %s121
      %s136 = sphi 0, %s122
      %s140 = sphi 0, %s140
      %s142 = sphi 0, %s140
      %s143 = sphi 0, %s142
      %s157 = sphi 0, %s143
      %s161 = sphi 0, %s161
      %s163 = sphi 0, %s161
      %s164 = sphi 0, %s163
      %s178 = sphi 0, %s164
      %s182 = sphi 0, %s182
      %s184 = sphi 0, %s182
      %s185 = sphi 0, %s184
      %s199 = sphi 0, %s185
      %s203 = sphi 0, %s203
      %s205 = sphi 0, %s203
      %s206 = sphi 0, %s205
      %s220 = sphi 0, %s206
      %s224 = sphi 0, %s224
      %s226 = sphi 0, %s224
      %s227 = sphi 0, %s226
      %s241 = sphi 0, %s227
      %s245 = sphi 0, %s245
      %s247 = sphi 0, %s245
      %s248 = sphi 0, %s247
      %s262 = sphi 0, %s248
      %s266 = sphi 0, %s266
      %s268 = sphi 0, %s266
      %s269 = sphi 0, %s268
      %s283 = sphi 0, %s269
      %s291 = sphi 0, %s293
      %s294 = sphi 0, %s291
      %s295 = sphi 0, %s294
      %s311 = sphi 0, %s295
    $region4: #{decoder_forward.11} parent=1 // loop_header_branch
      %22 = sbr.rel (%p20) target = $region8
    $region5: #{decoder_forward.11} parent=1 // loop_body
      %s24 = ssub.s32 %s19, 1
      %s25 = ssub.s32 %s19, 2
      %s32 = sadd.s32 1, %s27
      %p33 = scmp.ge.s32.totalorder %s32, 1
      %s34 = scalar_select %p33, 0, %s32
      %s35 = sadd.s32 1, %s26
      %s36 = scalar_select %p33, %s35, %s26
      %p37 = scmp.ge.s32.totalorder %s36, 2
      %s38 = scalar_select %p37, 0, %s36
      %s39 = ssub.s32 %s26, %s38
      %s40 = ssub.s32 %s27, %s34
      %s41 = sor.u32 %s39, %s40
      %p42 = scmp.eq.s32.totalorder %s41, 0
      %s44 = sadd.s32 %s43, 1
      %s45 = scalar_select %p42, %s43, %s44
      %p48 = pneg %p42
      %p49 = scmp.eq.s32.totalorder %s19, 1
      %p50 = por %p48, %p49
      %p51 = scmp.ne.s32.totalorder %s43, %s46
      %p52 = scmp.eq.s32.totalorder %s19, 0
      %p53 = por %p51, %p52
      %p54 = scmp.ne.s32.totalorder %s43, %s46
      %p55 = scmp.eq.s32.totalorder %s24, 1
      %p56 = por %p54, %p55
      %p57 = scmp.ne.s32.totalorder %s46, %s47
      %p58 = scmp.eq.s32.totalorder %s24, 0
      %p59 = por %p57, %p58
      %p60 = scmp.ne.s32.totalorder %s46, %s47
      %p61 = scmp.eq.s32.totalorder %s25, 1
      %p62 = por %p60, %p61
      %p64 = scmp.ne.s32.totalorder %s47, %s63
      %p65 = scmp.eq.s32.totalorder %s25, 0
      %p66 = por %p64, %p65
      %s67 = ssub.s32 %s26, %s38
      %p68 = scmp.eq.s32.totalorder %s67, 0
      %s70 = sadd.s32 %s69, 1
      %s71 = scalar_select %p68, %s69, %s70
      %p74 = pneg %p68
      %p75 = scmp.eq.s32.totalorder %s19, 1
      %p76 = por %p74, %p75
      %p77 = scmp.ne.s32.totalorder %s69, %s72
      %p78 = scmp.eq.s32.totalorder %s19, 0
      %p79 = por %p77, %p78
      %p80 = scmp.ne.s32.totalorder %s69, %s72
      %p81 = scmp.eq.s32.totalorder %s24, 1
      %p82 = por %p80, %p81
      %p83 = scmp.ne.s32.totalorder %s72, %s73
      %p84 = scmp.eq.s32.totalorder %s24, 0
      %p85 = por %p83, %p84
      %p86 = scmp.ne.s32.totalorder %s72, %s73
      %p87 = scmp.eq.s32.totalorder %s25, 1
      %p88 = por %p86, %p87
      %p90 = scmp.ne.s32.totalorder %s73, %s89
      %p91 = scmp.eq.s32.totalorder %s25, 0
      %p92 = por %p90, %p91
      %s93 = ssub.s32 %s26, %s38
      %p94 = scmp.eq.s32.totalorder %s93, 0
      %s96 = sadd.s32 %s95, 1
      %s97 = scalar_select %p94, %s95, %s96
      %p100 = pneg %p94
      %p101 = scmp.eq.s32.totalorder %s19, 1
      %p102 = por %p100, %p101
      %p103 = scmp.ne.s32.totalorder %s95, %s98
      %p104 = scmp.eq.s32.totalorder %s19, 0
      %p105 = por %p103, %p104
      %p106 = scmp.ne.s32.totalorder %s95, %s98
      %p107 = scmp.eq.s32.totalorder %s24, 1
      %p108 = por %p106, %p107
      %p109 = scmp.ne.s32.totalorder %s98, %s99
      %p110 = scmp.eq.s32.totalorder %s24, 0
      %p111 = por %p109, %p110
      %p112 = scmp.ne.s32.totalorder %s98, %s99
      %p113 = scmp.eq.s32.totalorder %s25, 1
      %p114 = por %p112, %p113
      %p116 = scmp.ne.s32.totalorder %s99, %s115
      %p117 = scmp.eq.s32.totalorder %s25, 0
      %p118 = por %p116, %p117
      %s120 = sadd.s32 %s119, 1
      %p123 = scmp.eq.s32.totalorder %s19, 1
      %p124 = scmp.ne.s32.totalorder %s119, %s121
      %p125 = scmp.eq.s32.totalorder %s19, 0
      %p126 = por %p124, %p125
      %p127 = scmp.ne.s32.totalorder %s119, %s121
      %p128 = scmp.eq.s32.totalorder %s24, 1
      %p129 = por %p127, %p128
      %p130 = scmp.ne.s32.totalorder %s121, %s122
      %p131 = scmp.eq.s32.totalorder %s24, 0
      %p132 = por %p130, %p131
      %p133 = scmp.ne.s32.totalorder %s121, %s122
      %p134 = scmp.eq.s32.totalorder %s25, 1
      %p135 = por %p133, %p134
      %p137 = scmp.ne.s32.totalorder %s122, %s136
      %p138 = scmp.eq.s32.totalorder %s25, 0
      %p139 = por %p137, %p138
      %s141 = sadd.s32 %s140, 1
      %p144 = scmp.eq.s32.totalorder %s19, 1
      %p145 = scmp.ne.s32.totalorder %s140, %s142
      %p146 = scmp.eq.s32.totalorder %s19, 0
      %p147 = por %p145, %p146
      %p148 = scmp.ne.s32.totalorder %s140, %s142
      %p149 = scmp.eq.s32.totalorder %s24, 1
      %p150 = por %p148, %p149
      %p151 = scmp.ne.s32.totalorder %s142, %s143
      %p152 = scmp.eq.s32.totalorder %s24, 0
      %p153 = por %p151, %p152
      %p154 = scmp.ne.s32.totalorder %s142, %s143
      %p155 = scmp.eq.s32.totalorder %s25, 1
      %p156 = por %p154, %p155
      %p158 = scmp.ne.s32.totalorder %s143, %s157
      %p159 = scmp.eq.s32.totalorder %s25, 0
      %p160 = por %p158, %p159
      %s162 = sadd.s32 %s161, 1
      %p165 = scmp.eq.s32.totalorder %s19, 1
      %p166 = scmp.ne.s32.totalorder %s161, %s163
      %p167 = scmp.eq.s32.totalorder %s19, 0
      %p168 = por %p166, %p167
      %p169 = scmp.ne.s32.totalorder %s161, %s163
      %p170 = scmp.eq.s32.totalorder %s24, 1
      %p171 = por %p169, %p170
      %p172 = scmp.ne.s32.totalorder %s163, %s164
      %p173 = scmp.eq.s32.totalorder %s24, 0
      %p174 = por %p172, %p173
      %p175 = scmp.ne.s32.totalorder %s163, %s164
      %p176 = scmp.eq.s32.totalorder %s25, 1
      %p177 = por %p175, %p176
      %p179 = scmp.ne.s32.totalorder %s164, %s178
      %p180 = scmp.eq.s32.totalorder %s25, 0
      %p181 = por %p179, %p180
      %s183 = sadd.s32 %s182, 1
      %p186 = scmp.eq.s32.totalorder %s19, 1
      %p187 = scmp.ne.s32.totalorder %s182, %s184
      %p188 = scmp.eq.s32.totalorder %s19, 0
      %p189 = por %p187, %p188
      %p190 = scmp.ne.s32.totalorder %s182, %s184
      %p191 = scmp.eq.s32.totalorder %s24, 1
      %p192 = por %p190, %p191
      %p193 = scmp.ne.s32.totalorder %s184, %s185
      %p194 = scmp.eq.s32.totalorder %s24, 0
      %p195 = por %p193, %p194
      %p196 = scmp.ne.s32.totalorder %s184, %s185
      %p197 = scmp.eq.s32.totalorder %s25, 1
      %p198 = por %p196, %p197
      %p200 = scmp.ne.s32.totalorder %s185, %s199
      %p201 = scmp.eq.s32.totalorder %s25, 0
      %p202 = por %p200, %p201
      %s204 = sadd.s32 %s203, 1
      %p207 = scmp.eq.s32.totalorder %s19, 1
      %p208 = scmp.ne.s32.totalorder %s203, %s205
      %p209 = scmp.eq.s32.totalorder %s19, 0
      %p210 = por %p208, %p209
      %p211 = scmp.ne.s32.totalorder %s203, %s205
      %p212 = scmp.eq.s32.totalorder %s24, 1
      %p213 = por %p211, %p212
      %p214 = scmp.ne.s32.totalorder %s205, %s206
      %p215 = scmp.eq.s32.totalorder %s24, 0
      %p216 = por %p214, %p215
      %p217 = scmp.ne.s32.totalorder %s205, %s206
      %p218 = scmp.eq.s32.totalorder %s25, 1
      %p219 = por %p217, %p218
      %p221 = scmp.ne.s32.totalorder %s206, %s220
      %p222 = scmp.eq.s32.totalorder %s25, 0
      %p223 = por %p221, %p222
      %s225 = sadd.s32 %s224, 1
      %p228 = scmp.eq.s32.totalorder %s19, 1
      %p229 = scmp.ne.s32.totalorder %s224, %s226
      %p230 = scmp.eq.s32.totalorder %s19, 0
      %p231 = por %p229, %p230
      %p232 = scmp.ne.s32.totalorder %s224, %s226
      %p233 = scmp.eq.s32.totalorder %s24, 1
      %p234 = por %p232, %p233
      %p235 = scmp.ne.s32.totalorder %s226, %s227
      %p236 = scmp.eq.s32.totalorder %s24, 0
      %p237 = por %p235, %p236
      %p238 = scmp.ne.s32.totalorder %s226, %s227
      %p239 = scmp.eq.s32.totalorder %s25, 1
      %p240 = por %p238, %p239
      %p242 = scmp.ne.s32.totalorder %s227, %s241
      %p243 = scmp.eq.s32.totalorder %s25, 0
      %p244 = por %p242, %p243
      %s246 = sadd.s32 %s245, 1
      %p249 = scmp.eq.s32.totalorder %s19, 1
      %p250 = scmp.ne.s32.totalorder %s245, %s247
      %p251 = scmp.eq.s32.totalorder %s19, 0
      %p252 = por %p250, %p251
      %p253 = scmp.ne.s32.totalorder %s245, %s247
      %p254 = scmp.eq.s32.totalorder %s24, 1
      %p255 = por %p253, %p254
      %p256 = scmp.ne.s32.totalorder %s247, %s248
      %p257 = scmp.eq.s32.totalorder %s24, 0
      %p258 = por %p256, %p257
      %p259 = scmp.ne.s32.totalorder %s247, %s248
      %p260 = scmp.eq.s32.totalorder %s25, 1
      %p261 = por %p259, %p260
      %p263 = scmp.ne.s32.totalorder %s248, %s262
      %p264 = scmp.eq.s32.totalorder %s25, 0
      %p265 = por %p263, %p264
      %s267 = sadd.s32 %s266, 1
      %p270 = scmp.eq.s32.totalorder %s19, 1
      %p271 = scmp.ne.s32.totalorder %s266, %s268
      %p272 = scmp.eq.s32.totalorder %s19, 0
      %p273 = por %p271, %p272
      %p274 = scmp.ne.s32.totalorder %s266, %s268
      %p275 = scmp.eq.s32.totalorder %s24, 1
      %p276 = por %p274, %p275
      %p277 = scmp.ne.s32.totalorder %s268, %s269
      %p278 = scmp.eq.s32.totalorder %s24, 0
      %p279 = por %p277, %p278
      %p280 = scmp.ne.s32.totalorder %s268, %s269
      %p281 = scmp.eq.s32.totalorder %s25, 1
      %p282 = por %p280, %p281
      %p284 = scmp.ne.s32.totalorder %s269, %s283
      %p285 = scmp.eq.s32.totalorder %s25, 0
      %p286 = por %p284, %p285
      %s287 = ssub.s32 %s26, %s38
      %s288 = ssub.s32 %s27, %s34
      %s289 = sor.u32 %s287, %s288
      %p290 = scmp.eq.s32.totalorder %s289, 0
      %s292 = sadd.s32 %s291, 1
      %s293 = scalar_select %p290, %s291, %s292
      %p296 = pneg %p290
      %p297 = scmp.eq.s32.totalorder %s19, 1
      %p298 = por %p296, %p297
      %p299 = scmp.ne.s32.totalorder %s291, %s294
      %p300 = scmp.eq.s32.totalorder %s19, 0
      %p301 = por %p299, %p300
      %p302 = scmp.ne.s32.totalorder %s291, %s294
      %p303 = scmp.eq.s32.totalorder %s24, 1
      %p304 = por %p302, %p303
      %p305 = scmp.ne.s32.totalorder %s294, %s295
      %p306 = scmp.eq.s32.totalorder %s24, 0
      %p307 = por %p305, %p306
      %p308 = scmp.ne.s32.totalorder %s294, %s295
      %p309 = scmp.eq.s32.totalorder %s25, 1
      %p310 = por %p308, %p309
      %p312 = scmp.ne.s32.totalorder %s295, %s311
      %p313 = scmp.eq.s32.totalorder %s25, 0
      %p314 = por %p312, %p313
      %p315 = scmp.le.s32.totalorder 1, %s19
      %p316 = scmp.lt.s32.totalorder %s19, 3
      %p317 = pnand %p315, %p316
      %p318 = pneg %p317
      // Predicated region
      $region9: #{decoder_forward.11} parent=5 // pred_check
        _
      $region10: #{decoder_forward.11} parent=5 // pred_check_branch
        %320 = sbr.rel (%p317) target = $region12
      $region11: #{decoder_forward.11} parent=5 // pred_region
        %s321 = ssub.s32 %s19, 1
        // Predicated region
        $region13: #{decoder_forward.11} parent=11 // pred_check
          %p322 = pneg %p132
        $region14: #{decoder_forward.11} parent=11 // pred_check_branch
          %324 = sbr.rel (%p322) target = $region16
        $region15: #{decoder_forward.11} parent=11 // pred_region
          _
        $region16: #{decoder_forward.11} parent=11 // pred_fallthru
          _
        // Predicated region
        $region17: #{decoder_forward.11} parent=11 // pred_check
          %p325 = pneg %p153
        $region18: #{decoder_forward.11} parent=11 // pred_check_branch
          %327 = sbr.rel (%p325) target = $region20
        $region19: #{decoder_forward.11} parent=11 // pred_region
          _
        $region20: #{decoder_forward.11} parent=11 // pred_fallthru
          _
        // Predicated region
        $region21: #{decoder_forward.11} parent=11 // pred_check
          %p328 = pneg %p174
        $region22: #{decoder_forward.11} parent=11 // pred_check_branch
          %330 = sbr.rel (%p328) target = $region24
        $region23: #{decoder_forward.11} parent=11 // pred_region
          _
        $region24: #{decoder_forward.11} parent=11 // pred_fallthru
          _
        // Predicated region
        $region25: #{decoder_forward.11} parent=11 // pred_check
          %p331 = pneg %p195
        $region26: #{decoder_forward.11} parent=11 // pred_check_branch
          %333 = sbr.rel (%p331) target = $region28
        $region27: #{decoder_forward.11} parent=11 // pred_region
          _
        $region28: #{decoder_forward.11} parent=11 // pred_fallthru
          _
        // Predicated region
        $region29: #{decoder_forward.11} parent=11 // pred_check
          %p334 = pneg %p216
        $region30: #{decoder_forward.11} parent=11 // pred_check_branch
          %336 = sbr.rel (%p334) target = $region32
        $region31: #{decoder_forward.11} parent=11 // pred_region
          _
        $region32: #{decoder_forward.11} parent=11 // pred_fallthru
          _
        // Predicated region
        $region33: #{decoder_forward.11} parent=11 // pred_check
          %p337 = pneg %p237
        $region34: #{decoder_forward.11} parent=11 // pred_check_branch
          %339 = sbr.rel (%p337) target = $region36
        $region35: #{decoder_forward.11} parent=11 // pred_region
          %341 = vsyncadd [#allocation4], 0
          %s343 = sshll.u32 %s8, 4
          %s344 = int_to_ptr.hbm [resolvable:$true] %s343
          %s345 = sshll.u32 [#allocation3], 4
          %s346 = int_to_ptr.vmem [resolvable:$true] %s345
          %348 = dma.hbm_to_vmem [thread:$0]  %s344, 16, %s346, [#allocation4]
        $region36: #{decoder_forward.11} parent=11 // pred_fallthru
          _
        // Predicated region
        $region37: #{decoder_forward.11} parent=11 // pred_check
          %p349 = pneg %p258
        $region38: #{decoder_forward.11} parent=11 // pred_check_branch
          %351 = sbr.rel (%p349) target = $region40
        $region39: #{decoder_forward.11} parent=11 // pred_region
          %353 = vsyncadd [#allocation6], 0
          %s355 = sshll.u32 %s9, 4
          %s356 = int_to_ptr.hbm [resolvable:$true] %s355
          %s357 = sshll.u32 [#allocation5], 4
          %s358 = int_to_ptr.vmem [resolvable:$true] %s357
          %360 = dma.hbm_to_vmem [thread:$0]  %s356, 16, %s358, [#allocation6]
        $region40: #{decoder_forward.11} parent=11 // pred_fallthru
          _
        // Predicated region
        $region41: #{decoder_forward.11} parent=11 // pred_check
          %p361 = pneg %p279
        $region42: #{decoder_forward.11} parent=11 // pred_check_branch
          %363 = sbr.rel (%p361) target = $region44
        $region43: #{decoder_forward.11} parent=11 // pred_region
          %365 = vsyncadd [#allocation6], 0
          %s367 = sshll.u32 %s10, 4
          %s368 = int_to_ptr.hbm [resolvable:$true] %s367
          %s369 = sshll.u32 [#allocation7], 4
          %s370 = int_to_ptr.vmem [resolvable:$true] %s369
          %372 = dma.hbm_to_vmem [thread:$0]  %s368, 16, %s370, [#allocation6]
        $region44: #{decoder_forward.11} parent=11 // pred_fallthru
          _
      $region12: #{decoder_forward.11} parent=5 // pred_fallthru
        _
      %p373 = scmp.lt.s32.totalorder %s19, 2
      // Predicated region
      $region45: #{decoder_forward.11} parent=5 // pred_check
        %p374 = pneg %p373
      $region46: #{decoder_forward.11} parent=5 // pred_check_branch
        %376 = sbr.rel (%p374) target = $region48
      $region47: #{decoder_forward.11} parent=5 // pred_region
        // Predicated region
        $region49: #{decoder_forward.11} parent=47 // pred_check
          %p377 = pneg %p53
        $region50: #{decoder_forward.11} parent=47 // pred_check_branch
          %379 = sbr.rel (%p377) target = $region52
        $region51: #{decoder_forward.11} parent=47 // pred_region
          %p380 = scmp.lt.s32.totalorder %s26, 1
          %s381 = scalar_select %p380, %s26, 1
          %p382 = scmp.lt.s32.totalorder %s27, 0
          %s383 = scalar_select %p382, %s27, 0
          %s384 = sadd.s32 %s383, %s381
          %s385 = smul.addr %s384, 8
          %s386 = scalar_lea.vmem %s0, %s385
        $region52: #{decoder_forward.11} parent=47 // pred_fallthru
          _
        // Predicated region
        $region53: #{decoder_forward.11} parent=47 // pred_check
          %p387 = pneg %p79
        $region54: #{decoder_forward.11} parent=47 // pred_check_branch
          %389 = sbr.rel (%p387) target = $region56
        $region55: #{decoder_forward.11} parent=47 // pred_region
          %p390 = scmp.lt.s32.totalorder %s26, 1
          %s391 = scalar_select %p390, %s26, 1
          %s392 = smul.addr %s391, 8
          %s393 = scalar_lea.vmem %s1, %s392
        $region56: #{decoder_forward.11} parent=47 // pred_fallthru
          _
        // Predicated region
        $region57: #{decoder_forward.11} parent=47 // pred_check
          %p394 = pneg %p105
        $region58: #{decoder_forward.11} parent=47 // pred_check_branch
          %396 = sbr.rel (%p394) target = $region60
        $region59: #{decoder_forward.11} parent=47 // pred_region
          %p397 = scmp.lt.s32.totalorder %s26, 1
          %s398 = scalar_select %p397, %s26, 1
          %s399 = scalar_lea.vmem %s2, %s398
        $region60: #{decoder_forward.11} parent=47 // pred_fallthru
          _
      $region48: #{decoder_forward.11} parent=5 // pred_fallthru
        _
      %p400 = scmp.le.s32.totalorder 1, %s19
      %p401 = scmp.lt.s32.totalorder %s19, 3
      %p402 = pnand %p400, %p401
      %p403 = pneg %p402
      // Predicated region
      $region61: #{decoder_forward.11} parent=5 // pred_check
        _
      $region62: #{decoder_forward.11} parent=5 // pred_check_branch
        %405 = sbr.rel (%p402) target = $region64
      $region63: #{decoder_forward.11} parent=5 // pred_region
        %s406 = ssub.s32 %s19, 1
        // Predicated region
        $region65: #{decoder_forward.11} parent=63 // pred_check
          %p407 = pneg %p237
        $region66: #{decoder_forward.11} parent=63 // pred_check_branch
          %409 = sbr.rel (%p407) target = $region68
        $region67: #{decoder_forward.11} parent=63 // pred_region
          %411 = dma.done [#allocation4], 16
        $region68: #{decoder_forward.11} parent=63 // pred_fallthru
          _
        // Predicated region
        $region69: #{decoder_forward.11} parent=63 // pred_check
          %p412 = pneg %p258
        $region70: #{decoder_forward.11} parent=63 // pred_check_branch
          %414 = sbr.rel (%p412) target = $region72
        $region71: #{decoder_forward.11} parent=63 // pred_region
          %416 = dma.done [#allocation6], 16
        $region72: #{decoder_forward.11} parent=63 // pred_fallthru
          _
        // Predicated region
        $region73: #{decoder_forward.11} parent=63 // pred_check
          %p417 = pneg %p279
        $region74: #{decoder_forward.11} parent=63 // pred_check_branch
          %419 = sbr.rel (%p417) target = $region76
        $region75: #{decoder_forward.11} parent=63 // pred_region
          %421 = dma.done [#allocation6], 16
        $region76: #{decoder_forward.11} parent=63 // pred_fallthru
          _
        %p422 = scmp.lt.s32.totalorder %s28, 1
        %s423 = scalar_select %p422, %s28, 1
        %p424 = scmp.lt.s32.totalorder %s29, 0
        %s425 = scalar_select %p424, %s29, 0
        %s426 = sadd.s32 %s425, %s423
        %s427 = smul.addr %s426, 8
        %s428 = scalar_lea.vmem %s0, %s427
        %p429 = pneg %p59
        %p430 = pneg %p56
        %p431 = scmp.lt.s32.totalorder %s28, 1
        %s432 = scalar_select %p431, %s28, 1
        %s433 = smul.addr %s432, 8
        %s434 = scalar_lea.vmem %s1, %s433
        %p435 = pneg %p85
        %p436 = pneg %p82
        %p437 = scmp.lt.s32.totalorder %s28, 1
        %s438 = scalar_select %p437, %s28, 1
        %s439 = scalar_lea.vmem %s2, %s438
        %p440 = pneg %p111
        %p441 = pneg %p108
        %p442 = pneg %p132
        %p443 = pneg %p129
        %p444 = pneg %p153
        %p445 = pneg %p150
        %p446 = pneg %p174
        %p447 = pneg %p171
        %p448 = pneg %p195
        %p449 = pneg %p192
        %p450 = pneg %p216
        %p451 = pneg %p213
        %p452 = pneg %p237
        %p453 = pneg %p234
        %p454 = pneg %p258
        %p455 = pneg %p255
        %p456 = pneg %p279
        %p457 = pneg %p276
        %p458 = pneg %p307
        %p459 = pneg %p304
        %p460 = scmp.lt.s32.totalorder %s28, 1
        %s461 = scalar_select %p460, %s28, 1
        %p462 = scmp.lt.s32.totalorder %s29, 0
        %s463 = scalar_select %p462, %s29, 0
        %s464 = sadd.s32 %s463, %s461
        %s465 = smul.addr %s464, 8
        %s466 = scalar_lea.vmem %s11, %s465
        %p467 = scmp.lt.s32.totalorder %s28, 1
        %s468 = scalar_select %p467, %s28, 1
        %p469 = scmp.lt.s32.totalorder %s29, 0
        %s470 = scalar_select %p469, %s29, 0
        %s471 = sadd.s32 %s470, %s468
        %s472 = smul.addr %s471, 8
        %s473 = scalar_lea.vmem %s0, %s472
        %p474 = scmp.lt.s32.totalorder %s28, 1
        %s475 = scalar_select %p474, %s28, 1
        %s476 = smul.addr %s475, 8
        %s477 = scalar_lea.vmem %s1, %s476
        %p478 = scmp.lt.s32.totalorder %s28, 1
        %s479 = scalar_select %p478, %s28, 1
        %s480 = scalar_lea.vmem %s2, %s479
        %p481 = scmp.lt.s32.totalorder %s28, 1
        %s482 = scalar_select %p481, %s28, 1
        %p483 = scmp.lt.s32.totalorder %s29, 0
        %s484 = scalar_select %p483, %s29, 0
        %s485 = sadd.s32 %s484, %s482
        %s486 = smul.addr %s485, 8
        %s487 = scalar_lea.vmem %s11, %s486
        %v489 = vld [vmem:[%s473] sm:$0xff]
        %v490 = vld [vmem:[%s477] sm:$0xff]
        %v491 = vld [vmem:[%s480] sm:$0x1]
        %v492 = vpack.c.bf16 %v489, %v489
        %v493 = vld [vmem:[%s3] sm:$0xf]
        %v494 = vld [vmem:[%s3 + $0x4] sm:$0xf]
        %v495 = vld [vmem:[%s3 + $0x8] sm:$0xf]
        %v496 = vld [vmem:[%s3 + $0xc] sm:$0xf]
        %v497 = vld [vmem:[%s4] sm:$0x1]
        %v499 = vperm.slane %v497, 0
        %v505 = vunpack.c.l.b16 %v493
        %v506 = vunpack.c.l.b16 %v494
        %v507 = vunpack.c.l.b16 %v495
        %v508 = vunpack.c.l.b16 %v496
        %v509 = vpack.c.b16 %v506, %v505
        %v510 = vpack.c.b16 %v508, %v507
        %vm513 = vcmask 261120
        %v515 = vsel %vm513, %v492, 0
        %517 = vmatpush.bf16.msra.mxu0 0
        %518 = vmatpush.bf16.msra.mxu0 0
        %519 = vmatpush.bf16.msra.mxu0 0
        %520 = vmatpush.bf16.msra.mxu0 0
        %521 = vmatpush.bf16.msra.mxu0 0
        %522 = vmatpush.bf16.msra.mxu0 0
        %523 = vmatpush.bf16.msra.mxu0 %v510
        %524 = vmatpush.bf16.msra.mxu0 %v509
        %525 = vmatmul.bf16.gmra.mxu0 %v515
        %v526 = vpop.f32.mrf.mxu0
        %v527 = vadd.f32 %v499, %v526
        %v528 = vpop.f32.mrf.mxu0
        %529 = vdwg.mxu0
        %v530 = vpack.c.bf16 %v490, %v490
        %v531 = vld [vmem:[%s5] sm:$0xf]
        %v532 = vld [vmem:[%s5 + $0x4] sm:$0xf]
        %v533 = vld [vmem:[%s5 + $0x8] sm:$0xf]
        %v534 = vld [vmem:[%s5 + $0xc] sm:$0xf]
        %v535 = vld [vmem:[%s6] sm:$0x1]
        %v537 = vperm.slane %v535, 0
        %v543 = vunpack.c.l.b16 %v531
        %v544 = vunpack.c.l.b16 %v532
        %v545 = vunpack.c.l.b16 %v533
        %v546 = vunpack.c.l.b16 %v534
        %v547 = vpack.c.b16 %v544, %v543
        %v548 = vpack.c.b16 %v546, %v545
        %v552 = vsel %vm513, %v530, 0
        %554 = vmatpush.bf16.msra.mxu0 0
        %555 = vmatpush.bf16.msra.mxu0 0
        %556 = vmatpush.bf16.msra.mxu0 0
        %557 = vmatpush.bf16.msra.mxu0 0
        %558 = vmatpush.bf16.msra.mxu0 0
        %559 = vmatpush.bf16.msra.mxu0 0
        %560 = vmatpush.bf16.msra.mxu0 %v548
        %561 = vmatpush.bf16.msra.mxu0 %v547
        %562 = vmatmul.bf16.gmra.mxu0 %v552
        %v563 = vpop.f32.mrf.mxu0
        %v564 = vadd.f32 %v537, %v563
        %v565 = vpop.f32.mrf.mxu0
        %566 = vdwg.mxu0
        %v567 = vpack.c.bf16 %v527, %v527
        %v568 = vpack.c.bf16 %v564, %v564
        %vm569 = vcmask 64512
        %v571 = vsel %vm569, %v567, 0
        %v574 = vsel %vm569, %v568, 0
        %576 = vmatpush.bf16.xpose.msra.mxu0 0
        %577 = vmatpush.bf16.xpose.msra.mxu0 0
        %578 = vmatpush.bf16.xpose.msra.mxu0 0
        %579 = vmatpush.bf16.xpose.msra.mxu0 0
        %580 = vmatpush.bf16.xpose.msra.mxu0 0
        %581 = vmatpush.bf16.xpose.msra.mxu0 0
        %582 = vmatpush.bf16.xpose.msra.mxu0 0
        %583 = vmatpush.bf16.xpose.msra.mxu0 %v574
        %584 = vmatmul.bf16.gmra.mxu0 %v571
        %v585 = vpop.f32.mrf.mxu0
        %v586 = vadd.f32 0.0, %v585
        %v587 = vpop.f32.mrf.mxu0
        %588 = vdwg.mxu0
        %v589 = vmul.f32 %v586, 0.35355338
        %v591 = vperm.slane %v491, 0
        %v593 = vadd.f32 %v589, %v591
        %v594 = vsel %vm569, %v593, -inf
        %595 = vmax.xlane.f32.xlu0 %v594
        %v596 = vpop.xlane.xlu0 %595
        %v597 = vsub.f32 %v593, %v596
        %v598 = vmul.f32 %v597, 1.442695
        %v599 = vpow.pop %v598
        %v600 = vsel %vm569, %v599, 0.0
        %601 = vadd.xlane.f32.xlu0 %v600
        %v602 = vpop.xlane.xlu0 %601
        %v603 = vrcp.pop %v602
        %v604 = vmul.f32 %v602, %v603
        %v605 = vsub.f32 1.0, %v604
        %v606 = vmul.f32 %v603, %v605
        %v607 = vadd.f32 %v603, %v606
        %vm608 = vweird.f32 %v602
        %vm609 = vweird.f32 %v603
        %vm610 = vmor %vm608, %vm609
        %v611 = vsel %vm610, %v603, %v607
        %v612 = vand.u32 2147483647, %v602
        %vm613 = vcmp.eq.f32.partialorder %v612, 8.507059e+37
        %v614 = vand.u32 %v602, 2147483648
        %v615 = vor.u32 1.1754944e-38, %v614
        %v616 = vsel %vm613, %v615, %v611
        %v617 = vmul.f32 %v599, %v616
        %v618 = vpack.c.bf16 %v617, %v617
        %620 = vrot.lane.b32.xlu0 %v568, 96
        %v621 = vpop.permute.xlu0 %620
        %v623 = vsel %vm569, %v618, 0
        %vm625 = vcmask 1043456
        %v627 = vsel %vm625, %v621, 0
        %629 = vmatpush.bf16.msra.mxu0 0
        %630 = vmatpush.bf16.msra.mxu0 0
        %631 = vmatpush.bf16.msra.mxu0 0
        %632 = vmatpush.bf16.msra.mxu0 0
        %633 = vmatpush.bf16.msra.mxu0 0
        %634 = vmatpush.bf16.msra.mxu0 0
        %635 = vmatpush.bf16.msra.mxu0 0
        %636 = vmatpush.bf16.msra.mxu0 %v627
        %637 = vmatmul.bf16.gmra.mxu0 %v623
        %v638 = vpop.f32.mrf.mxu0
        %v639 = vadd.f32 0.0, %v638
        %v640 = vpop.f32.mrf.mxu0
        %641 = vdwg.mxu0
        %642 = vst.msk [vmem:[#allocation2] sm:$0xff] %vm569, %v639
        %644 = vrot.lane.b32.xlu0 %v567, 120
        %v645 = vpop.permute.xlu0 %644
        %646 = vrot.lane.b32.xlu0 %v568, 120
        %v647 = vpop.permute.xlu0 %646
        %v649 = vsel %vm569, %v645, 0
        %v652 = vsel %vm569, %v647, 0
        %654 = vmatpush.bf16.xpose.msra.mxu0 0
        %655 = vmatpush.bf16.xpose.msra.mxu0 0
        %656 = vmatpush.bf16.xpose.msra.mxu0 0
        %657 = vmatpush.bf16.xpose.msra.mxu0 0
        %658 = vmatpush.bf16.xpose.msra.mxu0 0
        %659 = vmatpush.bf16.xpose.msra.mxu0 0
        %660 = vmatpush.bf16.xpose.msra.mxu0 0
        %661 = vmatpush.bf16.xpose.msra.mxu0 %v652
        %662 = vmatmul.bf16.gmra.mxu0 %v649
        %v663 = vpop.f32.mrf.mxu0
        %v664 = vadd.f32 0.0, %v663
        %v665 = vpop.f32.mrf.mxu0
        %666 = vdwg.mxu0
        %v667 = vmul.f32 %v664, 0.35355338
        %v668 = vadd.f32 %v667, %v591
        %v669 = vsel %vm569, %v668, -inf
        %670 = vmax.xlane.f32.xlu0 %v669
        %v671 = vpop.xlane.xlu0 %670
        %v672 = vsub.f32 %v668, %v671
        %v673 = vmul.f32 %v672, 1.442695
        %v674 = vpow.pop %v673
        %v675 = vsel %vm569, %v674, 0.0
        %676 = vadd.xlane.f32.xlu0 %v675
        %v677 = vpop.xlane.xlu0 %676
        %v678 = vrcp.pop %v677
        %v679 = vmul.f32 %v677, %v678
        %v680 = vsub.f32 1.0, %v679
        %v681 = vmul.f32 %v678, %v680
        %v682 = vadd.f32 %v678, %v681
        %vm683 = vweird.f32 %v677
        %vm684 = vweird.f32 %v678
        %vm685 = vmor %vm683, %vm684
        %v686 = vsel %vm685, %v678, %v682
        %v687 = vand.u32 2147483647, %v677
        %vm688 = vcmp.eq.f32.partialorder %v687, 8.507059e+37
        %v689 = vand.u32 %v677, 2147483648
        %v690 = vor.u32 1.1754944e-38, %v689
        %v691 = vsel %vm688, %v690, %v686
        %v692 = vmul.f32 %v674, %v691
        %v693 = vpack.c.bf16 %v692, %v692
        %694 = vrot.lane.b32.xlu0 %v568, 88
        %v695 = vpop.permute.xlu0 %694
        %v697 = vsel %vm569, %v693, 0
        %v700 = vsel %vm625, %v695, 0
        %702 = vmatpush.bf16.msra.mxu0 0
        %703 = vmatpush.bf16.msra.mxu0 0
        %704 = vmatpush.bf16.msra.mxu0 0
        %705 = vmatpush.bf16.msra.mxu0 0
        %706 = vmatpush.bf16.msra.mxu0 0
        %707 = vmatpush.bf16.msra.mxu0 0
        %708 = vmatpush.bf16.msra.mxu0 0
        %709 = vmatpush.bf16.msra.mxu0 %v700
        %710 = vmatmul.bf16.gmra.mxu0 %v697
        %v711 = vpop.f32.mrf.mxu0
        %v712 = vadd.f32 0.0, %v711
        %v713 = vpop.f32.mrf.mxu0
        %714 = vdwg.mxu0
        %716 = vrot.lane.b32.xlu0 %v712, 8
        %v717 = vpop.permute.xlu0 %716
        %vm719 = vcmask 130112
        %720 = vst.msk [vmem:[#allocation2] sm:$0xff] %vm719, %v717
        %721 = vrot.lane.b32.xlu0 %v567, 112
        %v722 = vpop.permute.xlu0 %721
        %723 = vrot.lane.b32.xlu0 %v568, 112
        %v724 = vpop.permute.xlu0 %723
        %v726 = vsel %vm569, %v722, 0
        %v729 = vsel %vm569, %v724, 0
        %731 = vmatpush.bf16.xpose.msra.mxu0 0
        %732 = vmatpush.bf16.xpose.msra.mxu0 0
        %733 = vmatpush.bf16.xpose.msra.mxu0 0
        %734 = vmatpush.bf16.xpose.msra.mxu0 0
        %735 = vmatpush.bf16.xpose.msra.mxu0 0
        %736 = vmatpush.bf16.xpose.msra.mxu0 0
        %737 = vmatpush.bf16.xpose.msra.mxu0 0
        %738 = vmatpush.bf16.xpose.msra.mxu0 %v729
        %739 = vmatmul.bf16.gmra.mxu0 %v726
        %v740 = vpop.f32.mrf.mxu0
        %v741 = vadd.f32 0.0, %v740
        %v742 = vpop.f32.mrf.mxu0
        %743 = vdwg.mxu0
        %v744 = vmul.f32 %v741, 0.35355338
        %v745 = vadd.f32 %v744, %v591
        %v746 = vsel %vm569, %v745, -inf
        %747 = vmax.xlane.f32.xlu0 %v746
        %v748 = vpop.xlane.xlu0 %747
        %v749 = vsub.f32 %v745, %v748
        %v750 = vmul.f32 %v749, 1.442695
        %v751 = vpow.pop %v750
        %v752 = vsel %vm569, %v751, 0.0
        %753 = vadd.xlane.f32.xlu0 %v752
        %v754 = vpop.xlane.xlu0 %753
        %v755 = vrcp.pop %v754
        %v756 = vmul.f32 %v754, %v755
        %v757 = vsub.f32 1.0, %v756
        %v758 = vmul.f32 %v755, %v757
        %v759 = vadd.f32 %v755, %v758
        %vm760 = vweird.f32 %v754
        %vm761 = vweird.f32 %v755
        %vm762 = vmor %vm760, %vm761
        %v763 = vsel %vm762, %v755, %v759
        %v764 = vand.u32 2147483647, %v754
        %vm765 = vcmp.eq.f32.partialorder %v764, 8.507059e+37
        %v766 = vand.u32 %v754, 2147483648
        %v767 = vor.u32 1.1754944e-38, %v766
        %v768 = vsel %vm765, %v767, %v763
        %v769 = vmul.f32 %v751, %v768
        %v770 = vpack.c.bf16 %v769, %v769
        %771 = vrot.lane.b32.xlu0 %v568, 80
        %v772 = vpop.permute.xlu0 %771
        %v774 = vsel %vm569, %v770, 0
        %v777 = vsel %vm625, %v772, 0
        %779 = vmatpush.bf16.msra.mxu0 0
        %780 = vmatpush.bf16.msra.mxu0 0
        %781 = vmatpush.bf16.msra.mxu0 0
        %782 = vmatpush.bf16.msra.mxu0 0
        %783 = vmatpush.bf16.msra.mxu0 0
        %784 = vmatpush.bf16.msra.mxu0 0
        %785 = vmatpush.bf16.msra.mxu0 0
        %786 = vmatpush.bf16.msra.mxu0 %v777
        %787 = vmatmul.bf16.gmra.mxu0 %v774
        %v788 = vpop.f32.mrf.mxu0
        %v789 = vadd.f32 0.0, %v788
        %v790 = vpop.f32.mrf.mxu0
        %791 = vdwg.mxu0
        %793 = vrot.lane.b32.xlu0 %v789, 16
        %v794 = vpop.permute.xlu0 %793
        %vm796 = vcmask 195712
        %797 = vst.msk [vmem:[#allocation2] sm:$0xff] %vm796, %v794
        %798 = vrot.lane.b32.xlu0 %v567, 104
        %v799 = vpop.permute.xlu0 %798
        %800 = vrot.lane.b32.xlu0 %v568, 104
        %v801 = vpop.permute.xlu0 %800
        %v803 = vsel %vm569, %v799, 0
        %v806 = vsel %vm569, %v801, 0
        %808 = vmatpush.bf16.xpose.msra.mxu0 0
        %809 = vmatpush.bf16.xpose.msra.mxu0 0
        %810 = vmatpush.bf16.xpose.msra.mxu0 0
        %811 = vmatpush.bf16.xpose.msra.mxu0 0
        %812 = vmatpush.bf16.xpose.msra.mxu0 0
        %813 = vmatpush.bf16.xpose.msra.mxu0 0
        %814 = vmatpush.bf16.xpose.msra.mxu0 0
        %815 = vmatpush.bf16.xpose.msra.mxu0 %v806
        %816 = vmatmul.bf16.gmra.mxu0 %v803
        %v817 = vpop.f32.mrf.mxu0
        %v818 = vadd.f32 0.0, %v817
        %v819 = vpop.f32.mrf.mxu0
        %820 = vdwg.mxu0
        %v821 = vmul.f32 %v818, 0.35355338
        %v822 = vadd.f32 %v821, %v591
        %v823 = vsel %vm569, %v822, -inf
        %824 = vmax.xlane.f32.xlu0 %v823
        %v825 = vpop.xlane.xlu0 %824
        %v826 = vsub.f32 %v822, %v825
        %v827 = vmul.f32 %v826, 1.442695
        %v828 = vpow.pop %v827
        %v829 = vsel %vm569, %v828, 0.0
        %830 = vadd.xlane.f32.xlu0 %v829
        %v831 = vpop.xlane.xlu0 %830
        %v832 = vrcp.pop %v831
        %v833 = vmul.f32 %v831, %v832
        %v834 = vsub.f32 1.0, %v833
        %v835 = vmul.f32 %v832, %v834
        %v836 = vadd.f32 %v832, %v835
        %vm837 = vweird.f32 %v831
        %vm838 = vweird.f32 %v832
        %vm839 = vmor %vm837, %vm838
        %v840 = vsel %vm839, %v832, %v836
        %v841 = vand.u32 2147483647, %v831
        %vm842 = vcmp.eq.f32.partialorder %v841, 8.507059e+37
        %v843 = vand.u32 %v831, 2147483648
        %v844 = vor.u32 1.1754944e-38, %v843
        %v845 = vsel %vm842, %v844, %v840
        %v846 = vmul.f32 %v828, %v845
        %v847 = vpack.c.bf16 %v846, %v846
        %848 = vrot.lane.b32.xlu0 %v568, 72
        %v849 = vpop.permute.xlu0 %848
        %v851 = vsel %vm569, %v847, 0
        %v854 = vsel %vm625, %v849, 0
        %856 = vmatpush.bf16.msra.mxu0 0
        %857 = vmatpush.bf16.msra.mxu0 0
        %858 = vmatpush.bf16.msra.mxu0 0
        %859 = vmatpush.bf16.msra.mxu0 0
        %860 = vmatpush.bf16.msra.mxu0 0
        %861 = vmatpush.bf16.msra.mxu0 0
        %862 = vmatpush.bf16.msra.mxu0 0
        %863 = vmatpush.bf16.msra.mxu0 %v854
        %864 = vmatmul.bf16.gmra.mxu0 %v851
        %v865 = vpop.f32.mrf.mxu0
        %v866 = vadd.f32 0.0, %v865
        %v867 = vpop.f32.mrf.mxu0
        %868 = vdwg.mxu0
        %870 = vrot.lane.b32.xlu0 %v866, 24
        %v871 = vpop.permute.xlu0 %870
        %vm873 = vcmask 261312
        %874 = vst.msk [vmem:[#allocation2] sm:$0xff] %vm873, %v871
        %v875 = vld [vmem:[#allocation2] sm:$0xff]
        %v876 = vpack.c.bf16 %v875, %v875
        %v877 = vld [vmem:[%s7] sm:$0xf]
        %v878 = vld [vmem:[%s7 + $0x4] sm:$0xf]
        %v879 = vld [vmem:[%s7 + $0x8] sm:$0xf]
        %v880 = vld [vmem:[%s7 + $0xc] sm:$0xf]
        %v881 = vld [vmem:[#allocation3] sm:$0x1]
        %v883 = vperm.slane %v881, 0
        %v889 = vunpack.c.l.b16 %v877
        %v890 = vunpack.c.l.b16 %v878
        %v891 = vunpack.c.l.b16 %v879
        %v892 = vunpack.c.l.b16 %v880
        %v893 = vpack.c.b16 %v890, %v889
        %v894 = vpack.c.b16 %v892, %v891
        %v898 = vsel %vm513, %v876, 0
        %900 = vmatpush.bf16.msra.mxu0 0
        %901 = vmatpush.bf16.msra.mxu0 0
        %902 = vmatpush.bf16.msra.mxu0 0
        %903 = vmatpush.bf16.msra.mxu0 0
        %904 = vmatpush.bf16.msra.mxu0 0
        %905 = vmatpush.bf16.msra.mxu0 0
        %906 = vmatpush.bf16.msra.mxu0 %v894
        %907 = vmatpush.bf16.msra.mxu0 %v893
        %908 = vmatmul.bf16.gmra.mxu0 %v898
        %v909 = vpop.f32.mrf.mxu0
        %v910 = vadd.f32 %v883, %v909
        %v911 = vpop.f32.mrf.mxu0
        %912 = vdwg.mxu0
        %v913 = vadd.f32 %v489, %v910
        %v914 = vsel %vm513, %v913, 0.0
        %915 = vadd.xlane.f32.xlu0 %v914
        %v916 = vpop.xlane.xlu0 %915
        %v917 = vrcp.pop 32.0
        %v918 = vmul.f32 32.0, %v917
        %v919 = vsub.f32 1.0, %v918
        %v920 = vmul.f32 %v917, %v919
        %v921 = vadd.f32 %v917, %v920
        %vm922 = vweird.f32 %v917
        %v923 = vsel %vm922, %v917, %v921
        %v924 = vmul.f32 %v916, %v923
        %v925 = vsub.f32 %v913, %v924
        %v926 = vmul.f32 %v925, %v925
        %v927 = vsel %vm513, %v926, 0.0
        %928 = vadd.xlane.f32.xlu0 %v927
        %v929 = vpop.xlane.xlu0 %928
        %v930 = vmul.f32 %v929, %v923
        %v931 = vadd.f32 %v930, 1e-05
        %v932 = vrsqrt.pop %v931
        %v933 = vmul.f32 %v932, %v931
        %v934 = vmul.f32 %v933, %v932
        %v935 = vmul.f32 0.5, %v934
        %v936 = vsub.f32 1.5, %v935
        %v937 = vmul.f32 %v932, %v936
        %vm938 = vweird.f32 %v931
        %vm939 = vweird.f32 %v932
        %vm940 = vmor %vm938, %vm939
        %v941 = vsel %vm940, %v932, %v937
        %v942 = vmul.f32 %v925, %v941
        %v943 = vld [vmem:[#allocation5] sm:$0x1]
        %v945 = vperm.slane %v943, 0
        %v947 = vmul.f32 %v942, %v945
        %v948 = vld [vmem:[#allocation7] sm:$0x1]
        %v950 = vperm.slane %v948, 0
        %v952 = vadd.f32 %v947, %v950
        %953 = vst.msk [vmem:[%s487] sm:$0xff] %vm513, %v952
        %p954 = scmp.lt.s32.totalorder %s28, 1
        %s955 = scalar_select %p954, %s28, 1
        %p956 = scmp.lt.s32.totalorder %s29, 0
        %s957 = scalar_select %p956, %s29, 0
        %s958 = sadd.s32 %s957, %s955
        %s959 = smul.addr %s958, 8
        %s960 = scalar_lea.vmem %s11, %s959
        // Predicated region
        $region77: #{decoder_forward.11} parent=63 // pred_check
          %p961 = pneg %p304
        $region78: #{decoder_forward.11} parent=63 // pred_check_branch
          %963 = sbr.rel (%p961) target = $region80
        $region79: #{decoder_forward.11} parent=63 // pred_region
          _
        $region80: #{decoder_forward.11} parent=63 // pred_fallthru
          _
      $region64: #{decoder_forward.11} parent=5 // pred_fallthru
        _
      %p964 = scmp.le.s32.totalorder 2, %s19
      // Predicated region
      $region81: #{decoder_forward.11} parent=5 // pred_check
        %p965 = pneg %p964
      $region82: #{decoder_forward.11} parent=5 // pred_check_branch
        %967 = sbr.rel (%p965) target = $region84
      $region83: #{decoder_forward.11} parent=5 // pred_region
        %s968 = ssub.s32 %s19, 2
        // Predicated region
        $region85: #{decoder_forward.11} parent=83 // pred_check
          %p969 = pneg %p310
        $region86: #{decoder_forward.11} parent=83 // pred_check_branch
          %971 = sbr.rel (%p969) target = $region88
        $region87: #{decoder_forward.11} parent=83 // pred_region
          %p972 = scmp.lt.s32.totalorder %s30, 1
          %s973 = scalar_select %p972, %s30, 1
          %p974 = scmp.lt.s32.totalorder %s31, 0
          %s975 = scalar_select %p974, %s31, 0
          %s976 = sadd.s32 %s975, %s973
          %s977 = smul.addr %s976, 8
          %s978 = scalar_lea.vmem %s11, %s977
        $region88: #{decoder_forward.11} parent=83 // pred_fallthru
          _
      $region84: #{decoder_forward.11} parent=5 // pred_fallthru
        _
    $region6: #{decoder_forward.11} parent=1 // loop_footer
      %s23 = sadd.s32 1, %s19
    $region7: #{decoder_forward.11} parent=1 // loop_footer_branch
      %18 = sbr.rel target = $region3
    $region8: #{decoder_forward.11} parent=1 // loop_exit
      _
    %979 = vsyncpa [#allocation4], 1
    %s980 = scalar_lea.sflag [#allocation4], 1
    %981 = vsyncpa %s980, 1
    %982 = vsyncpa [#allocation6], 1

// kernel: decoder_forward.13
$region0: #{decoder_forward.13}
  #allocation0 [shape = 'u32[]', space=smem, size = 0x4, offset = 0x4, fixed_abs, tag = 'smem constant byte address 0x4 - core index']
  #allocation1 [shape = 'u32[72,128]{1,0:T(1,128)}', space=vmem, size = 0x9000, scoped, tag = 'internal scratch']
  #allocation2 [shape = 'f32[16,128]{1,0:T(8,128)}', space=vmem, size = 0x2000, scoped, tag = 'scratch operand']
  %s0 = inlined_call_operand.vmem [shape: f32[16,32], index: 0, kind: input, shape index: {}]
  %s1 = inlined_call_operand.vmem [shape: bf16[32,128], index: 1, kind: input, shape index: {}]
  %s2 = inlined_call_operand.vmem [shape: f32[1,128], index: 2, kind: input, shape index: {}]
  %s3 = inlined_call_operand.vmem [shape: f32[16,128], index: 3, kind: output, shape index: {}]
  %s4 = sld [smem:[#allocation0]]
  $region30: #{decoder_forward.13} parent=0
    _
  %s6 = ssub.s32 1, %s4
  %s7 = scalar_select 0, %s6, %s4
  // Predicated region
  $region2: #{decoder_forward.13} parent=0 // pred_check
    _
  $region3: #{decoder_forward.13} parent=0 // pred_check_branch
    %9 = sbr.rel (0) target = $region5
  $region4: #{decoder_forward.13} parent=0 // pred_region
    _
  $region5: #{decoder_forward.13} parent=0 // pred_fallthru
    _
  // Predicated region
  $region6: #{decoder_forward.13} parent=0 // pred_check
    _
  $region7: #{decoder_forward.13} parent=0 // pred_check_branch
    %11 = sbr.rel (0) target = $region9
  $region8: #{decoder_forward.13} parent=0 // pred_region
    _
  $region9: #{decoder_forward.13} parent=0 // pred_fallthru
    _
  // Predicated region
  $region10: #{decoder_forward.13} parent=0 // pred_check
    _
  $region11: #{decoder_forward.13} parent=0 // pred_check_branch
    %13 = sbr.rel (0) target = $region13
  $region12: #{decoder_forward.13} parent=0 // pred_region
    _
  $region13: #{decoder_forward.13} parent=0 // pred_fallthru
    _
  %p15 = scmp.eq.s32.totalorder 0, 0
  // Predicated region
  $region14: #{decoder_forward.13} parent=0 // pred_check
    %p16 = pneg %p15
  $region15: #{decoder_forward.13} parent=0 // pred_check_branch
    %18 = sbr.rel (%p16) target = $region17
  $region16: #{decoder_forward.13} parent=0 // pred_region
    %19 = vst [vmem:[#allocation2] sm:$0xff] 0.0
    %20 = vst [vmem:[#allocation2 + $0x8] sm:$0xff] 0.0
  $region17: #{decoder_forward.13} parent=0 // pred_fallthru
    _
  %v21 = vld [vmem:[#allocation2] sm:$0xff]
  %v22 = vld [vmem:[#allocation2 + $0x8] sm:$0xff]
  %v23 = vld [vmem:[%s0] sm:$0xff]
  %v24 = vld [vmem:[%s0 + $0x8] sm:$0xff]
  %v25 = vpack.c.bf16 %v24, %v23
  %v26 = vld [vmem:[%s1] sm:$0xf]
  %v27 = vld [vmem:[%s1 + $0x4] sm:$0xf]
  %v28 = vld [vmem:[%s1 + $0x8] sm:$0xf]
  %v29 = vld [vmem:[%s1 + $0xc] sm:$0xf]
  %v34 = vunpack.c.l.b16 %v26
  %v35 = vunpack.c.l.b16 %v27
  %v36 = vunpack.c.l.b16 %v28
  %v37 = vunpack.c.l.b16 %v29
  %v38 = vpack.c.b16 %v35, %v34
  %v39 = vpack.c.b16 %v37, %v36
  %vm42 = vcmask 261120
  %v44 = vsel %vm42, %v25, 0
  %46 = vmatpush.bf16.msra.mxu0 0
  %47 = vmatpush.bf16.msra.mxu0 0
  %48 = vmatpush.bf16.msra.mxu0 0
  %49 = vmatpush.bf16.msra.mxu0 0
  %50 = vmatpush.bf16.msra.mxu0 0
  %51 = vmatpush.bf16.msra.mxu0 0
  %52 = vmatpush.bf16.msra.mxu0 %v39
  %53 = vmatpush.bf16.msra.mxu0 %v38
  %54 = vmatmul.bf16.gmra.mxu0 %v44
  %v55 = vpop.f32.mrf.mxu0
  %v56 = vadd.f32 0.0, %v55
  %v57 = vpop.f32.mrf.mxu0
  %v58 = vadd.f32 0.0, %v57
  %59 = vdwg.mxu0
  %v60 = vadd.f32 %v21, %v56
  %v61 = vadd.f32 %v22, %v58
  %62 = vst [vmem:[#allocation2] sm:$0xff] %v60
  %63 = vst [vmem:[#allocation2 + $0x8] sm:$0xff] %v61
  // Predicated region
  $region18: #{decoder_forward.13} parent=0 // pred_check
    %p64 = pneg %p15
  $region19: #{decoder_forward.13} parent=0 // pred_check_branch
    %66 = sbr.rel (%p64) target = $region21
  $region20: #{decoder_forward.13} parent=0 // pred_region
    %v67 = vld [vmem:[#allocation2] sm:$0xff]
    %v68 = vld [vmem:[#allocation2 + $0x8] sm:$0xff]
    %v69 = vld [vmem:[%s2] sm:$0x1]
    %v71 = vperm.slane %v69, 0
    %v73 = vadd.f32 %v67, %v71
    %v74 = vadd.f32 %v68, %v71
    %75 = vst [vmem:[%s3] sm:$0xff] %v73
    %76 = vst [vmem:[%s3 + $0x8] sm:$0xff] %v74
  $region21: #{decoder_forward.13} parent=0 // pred_fallthru
    _
  // Predicated region
  $region22: #{decoder_forward.13} parent=0 // pred_check
    _
  $region23: #{decoder_forward.13} parent=0 // pred_check_branch
    %78 = sbr.rel (0) target = $region25
  $region24: #{decoder_forward.13} parent=0 // pred_region
    _
  $region25: #{decoder_forward.13} parent=0 // pred_fallthru
    _
  // Predicated region
  $region26: #{decoder_forward.13} parent=0 // pred_check
    _
  $region27: #{decoder_forward.13} parent=0 // pred_check_branch
    %80 = sbr.rel (0) target = $region29
  $region28: #{decoder_forward.13} parent=0 // pred_region
    _
  $region29: #{decoder_forward.13} parent=0 // pred_fallthru
    _

</llo_original>
